<compile_context>
chip_gen: v7x
topology: tpu7x:2x2x1
jax: 0.10.0
libtpu: 0.0.40
codegen_flags: <defaults>
</compile_context>

<pallas_src>
import jax
import jax.numpy as jnp
from jax.experimental import pallas as pl
from jax.experimental.pallas import tpu as pltpu


def fpn_block_kernel(x_ref, skip_ref, w_ref, b_ref, o_ref):
    # x_ref:    (1, THx, W, Cp)   un-upsampled x rows for this tile
    # skip_ref: (1, TH*W, 2*Cs)   paired skip pixels (w-pairs in lanes)
    # w_ref:    (Cs, Cp)          1x1 conv weight (input-major), matmul dtype
    # b_ref:    (1, Cp)           f32 bias
    # o_ref:    (1, TH*W, 2*Cp)   paired output pixels
    _, thx, w_dim, cp = x_ref.shape
    cs = w_ref.shape[0]
    mm_dt = w_ref.dtype

    # 1x1 conv: two matmuls sharing one resident [Cs, Cp] weight (one matmul
    # per pixel of the horizontal pair), f32 accumulation on the MXU.
    skip = skip_ref[0]                                              # (M, 2Cs)
    w = w_ref[...]
    conv_lo = jnp.dot(skip[:, :cs].astype(mm_dt), w,
                      preferred_element_type=jnp.float32)           # (M, Cp)
    conv_hi = jnp.dot(skip[:, cs:].astype(mm_dt), w,
                      preferred_element_type=jnp.float32)           # (M, Cp)
    bias = b_ref[...].astype(jnp.float32)                           # (1, Cp)
    conv = jnp.concatenate([conv_lo + bias, conv_hi + bias], axis=-1)  # (M, 2Cp)

    # Fused nearest-neighbour 2x upsample of x:
    #   W-duplication = lane concat; H-duplication = broadcast folded into the
    #   add over a size-2 axis of the conv tile (no materialized upsample slab).
    xb = x_ref[0].astype(jnp.float32)                                # (THx, W, Cp)
    x_pair = jnp.concatenate([xb, xb], axis=-1)                      # (THx, W, 2Cp)
    conv4 = conv.reshape(thx, 2, w_dim, 2 * cp)                      # free (W%8==0)
    out = x_pair[:, None, :, :] + conv4                              # H-dup broadcast
    o_ref[0] = out.reshape(2 * thx * w_dim, 2 * cp).astype(o_ref.dtype)


def _vmem_caps():
    """(tile_budget_bytes, vmem_limit_bytes) derived from this chip's VMEM.

    v5e/v6e: 128 MiB physical -> 64 MiB scoped limit, 32 MiB tile budget.
    v7x:      64 MiB physical -> 48 MiB scoped limit, 24 MiB tile budget.
    The 2x gap between budget and limit leaves room for in-kernel temporaries
    (f32 conv tile, bf16 casts) and Mosaic internal scratch.
    """
    phys = 64 * 1024 * 1024                     # conservative fallback (= v7x)
    try:
        phys = int(pltpu.get_tpu_info().vmem_capacity_bytes)
    except Exception:
        pass
    limit = min(phys * 3 // 4, 64 * 1024 * 1024)
    return limit // 2, limit


def _choose_row_tile(B, H2, W, Cs, Cp, itemsize, *,
                     target_rows=512, vmem_budget=24 * 1024 * 1024):
    """Largest even divisor TH of H2 such that TH*W ~ target_rows, the
    double-buffered working set fits vmem_budget, and the total grid keeps at
    least 2 steps (so v7x's two TensorCores both get work)."""
    th = 2
    for cand in range(2, H2 + 1, 2):
        if H2 % cand:
            continue
        if cand != 2 and B * (H2 // cand) < 2:
            break                       # larger tiles only shrink the grid more
        m = cand * W
        x_blk = (cand // 2) * W * Cp * itemsize
        skip_blk = m * 2 * Cs * itemsize
        out_blk = m * 2 * Cp * itemsize
        w_bytes = Cs * Cp * 2 + Cp * 4                 # single-buffered, bf16 W
        body_tmp = m * 2 * Cp * 4 + m * 2 * Cs * 2     # f32 conv + bf16 casts
        est = 2 * (x_blk + skip_blk + out_blk) + w_bytes + body_tmp
        if est > vmem_budget:
            break
        th = cand
        if m >= target_rows:
            break
    return th


def fpn_block_nhwc(x, skip, weight, bias, *, matmul_dtype=jnp.bfloat16):
    """Fused FPNBlock in NHWC.

    x:      [B, H, W, Cp]      (pyramid feature, to be 2x nearest-upsampled)
    skip:   [B, 2H, 2W, Cs]    (skip feature)
    weight: [Cs, Cp]           (1x1 conv weight, input-major)
    bias:   [Cp]
    returns [B, 2H, 2W, Cp]
    """
    B, H, W, Cp = x.shape
    Bs, H2, W2, Cs = skip.shape
    assert Bs == B and H2 == 2 * H and W2 == 2 * W
    assert W % 8 == 0, "fast path needs x width to be a multiple of 8"
    # TODO(synk): add a fallback tiling for W % 8 != 0 (e.g. 7x7 C5 maps).

    itemsize = jnp.dtype(x.dtype).itemsize
    budget, vmem_limit = _vmem_caps()
    th = _choose_row_tile(B, H2, W, Cs, Cp, itemsize, vmem_budget=budget)
    thx = th // 2

    # Free (contiguous) reshape: pair adjacent W pixels into the lane dim.
    skip_p = skip.reshape(B, H2 * W, 2 * Cs)

    # Plain [Cs, Cp] weight in the matmul dtype; f32 bias.
    w_mm = weight.astype(matmul_dtype)
    b_f32 = bias.astype(jnp.float32).reshape(1, Cp)

    def build(single_buffer_consts):
        if single_buffer_consts:
            w_spec = pl.BlockSpec((Cs, Cp), lambda b, oh: (0, 0),
                                  pipeline_mode=pl.Buffered(1))
            b_spec = pl.BlockSpec((1, Cp), lambda b, oh: (0, 0),
                                  pipeline_mode=pl.Buffered(1))
        else:
            w_spec = pl.BlockSpec((Cs, Cp), lambda b, oh: (0, 0))
            b_spec = pl.BlockSpec((1, Cp), lambda b, oh: (0, 0))
        return pl.pallas_call(
            fpn_block_kernel,
            out_shape=jax.ShapeDtypeStruct((B, H2 * W, 2 * Cp), x.dtype),
            grid_spec=pltpu.PrefetchScalarGridSpec(
                num_scalar_prefetch=0,
                grid=(B, H2 // th),
                in_specs=[
                    # x rows [oh*THx, (oh+1)*THx) -- un-upsampled in H and W.
                    pl.BlockSpec((1, thx, W, Cp), lambda b, oh: (b, oh, 0, 0)),
                    # paired skip rows [oh*TH*W, (oh+1)*TH*W).
                    pl.BlockSpec((1, th * W, 2 * Cs), lambda b, oh: (b, oh, 0)),
                    w_spec,
                    b_spec,
                ],
                out_specs=pl.BlockSpec((1, th * W, 2 * Cp),
                                       lambda b, oh: (b, oh, 0)),
            ),
            compiler_params=pltpu.CompilerParams(
                dimension_semantics=("parallel", "parallel"),
                vmem_limit_bytes=vmem_limit),
        )

    try:
        out_p = build(True)(x, skip_p, w_mm, b_f32)
    except Exception:
        # Fallback if single-buffered (pl.Buffered(1)) consts are rejected.
        out_p = build(False)(x, skip_p, w_mm, b_f32)

    return out_p.reshape(B, H2, W2, Cp)                             # free reshape


def fpn_block_nchw(x_nchw, skip_nchw, weight_oi, bias):
    """PyTorch-interface parity wrapper (NCHW).

    NOTE: production decoders should stay NHWC end-to-end; these transposes
    are interface glue and cost full-array HBM round trips.
    x_nchw:    [B, Cp, H, W]
    skip_nchw: [B, Cs, 2H, 2W]
    weight_oi: [Cp, Cs]   (PyTorch Conv2d weight [Cp, Cs, 1, 1] squeezed)
    bias:      [Cp]
    """
    x = jnp.transpose(x_nchw, (0, 2, 3, 1))
    skip = jnp.transpose(skip_nchw, (0, 2, 3, 1))
    w = jnp.transpose(weight_oi, (1, 0))
    out_nhwc = fpn_block_nhwc(x, skip, w, bias)
    return jnp.transpose(out_nhwc, (0, 3, 1, 2))


if __name__ == "__main__":
    key = jax.random.PRNGKey(0)
    k1, k2, k3, k4 = jax.random.split(key, 4)

    B, Cp, Cs = 2, 64, 32            # pyramid_channels=64, skip_channels=32
    H = W = 16                       # x spatial; skip spatial is 2H x 2W

    x = jax.random.normal(k1, (B, H, W, Cp), dtype=jnp.float32)           # NHWC
    skip = jax.random.normal(k2, (B, 2 * H, 2 * W, Cs), dtype=jnp.float32)

    # Synthetic Conv2d(Cs -> Cp, k=1) params in PyTorch layout [Cp, Cs].
    weight_oi = jax.random.normal(k3, (Cp, Cs), dtype=jnp.float32) * 0.1
    bias = jax.random.normal(k4, (Cp,), dtype=jnp.float32) * 0.1

    w_io = jnp.transpose(weight_oi, (1, 0))                               # [Cs, Cp]
    out = jax.block_until_ready(fpn_block_nhwc(x, skip, w_io, bias))
    assert out.shape == (B, 2 * H, 2 * W, Cp), out.shape

    # References (NHWC).
    x_up = jnp.repeat(jnp.repeat(x, 2, axis=1), 2, axis=2)                # nearest 2x
    # (a) mirrors the kernel's precision policy: bf16 matmul inputs, f32 acc.
    ref_mm = x_up + jnp.einsum(
        "bhwc,co->bhwo", skip.astype(jnp.bfloat16), w_io.astype(jnp.bfloat16),
        preferred_element_type=jnp.float32) + bias
    # (b) full-f32 reference (PyTorch semantics), loose tolerance for bf16 dot.
    ref_f32 = x_up + jnp.einsum("bhwc,co->bhwo", skip, w_io,
                                precision=jax.lax.Precision.HIGHEST) + bias

    assert jnp.allclose(out, ref_mm, atol=1e-3, rtol=1e-3), \
        "NHWC mismatch vs bf16-matmul reference"
    assert jnp.allclose(out, ref_f32, atol=3e-2, rtol=3e-2), \
        "NHWC mismatch vs f32 reference"

    # NCHW interface parity (matches the PyTorch module signature).
    out_nchw = jax.block_until_ready(
        fpn_block_nchw(jnp.transpose(x, (0, 3, 1, 2)),
                       jnp.transpose(skip, (0, 3, 1, 2)), weight_oi, bias))
    assert jnp.allclose(out_nchw, jnp.transpose(ref_mm, (0, 3, 1, 2)),
                        atol=1e-3, rtol=1e-3), "NCHW mismatch vs reference"

    print("KERNEL_OK")
</pallas_src>

<mosaic_0001>
module attributes {stable_mosaic.version = 11 : i64} {
  func.func @fpn_block_kernel(%arg0: i32, %arg1: i32, %arg2: memref<1x16x16x64xf32, #tpu.memory_space<vmem>>, %arg3: memref<1x512x64xf32, #tpu.memory_space<vmem>>, %arg4: memref<32x64xbf16, #tpu.memory_space<vmem>>, %arg5: memref<1x64xf32, #tpu.memory_space<vmem>>, %arg6: memref<1x512x128xf32, #tpu.memory_space<vmem>>) attributes {dimension_semantics = [#tpu.dimension_semantics<parallel>, #tpu.dimension_semantics<parallel>], iteration_bounds = array<i64: 2, 1>, scalar_prefetch = 0 : i64, scratch_operands = 0 : i64, tpu.core_type = #tpu.core_type<tc>, window_params = [{transform_indices = @transform_0, window_bounds = array<i64: 1, 16, 16, 64>}, {transform_indices = @transform_1, window_bounds = array<i64: 1, 512, 64>}, {pipeline_mode = #tpu.pipeline_mode<synchronous>, transform_indices = @transform_2, window_bounds = array<i64: 32, 64>}, {pipeline_mode = #tpu.pipeline_mode<synchronous>, transform_indices = @transform_3, window_bounds = array<i64: 1, 64>}, {transform_indices = @transform_4, window_bounds = array<i64: 1, 512, 128>}]} {
    %c0 = arith.constant 0 : index
    %c0_0 = arith.constant 0 : index
    %c0_1 = arith.constant 0 : index
    %0 = vector.load %arg3[%c0, %c0_0, %c0_1] : memref<1x512x64xf32, #tpu.memory_space<vmem>>, vector<1x512x64xf32>
    %1 = vector.shape_cast %0 : vector<1x512x64xf32> to vector<512x64xf32>
    %c0_2 = arith.constant 0 : index
    %c0_3 = arith.constant 0 : index
    %2 = vector.load %arg4[%c0_2, %c0_3] : memref<32x64xbf16, #tpu.memory_space<vmem>>, vector<32x64xbf16>
    %3 = vector.extract_strided_slice %1 {offsets = [0, 0], sizes = [512, 32], strides = [1, 1]} : vector<512x64xf32> to vector<512x32xf32>
    %4 = arith.truncf %3 : vector<512x32xf32> to vector<512x32xbf16>
    %cst = arith.constant dense<0.000000e+00> : vector<512x64xf32>
    %5 = tpu.matmul %4, %2, %cst {dimension_numbers = #tpu.dot_dimension_numbers<[1], [0], [0], [1], [0, 0, 1, 1], [], []>} : vector<512x32xbf16>, vector<32x64xbf16>, vector<512x64xf32> -> vector<512x64xf32>
    %6 = vector.extract_strided_slice %1 {offsets = [0, 32], sizes = [512, 32], strides = [1, 1]} : vector<512x64xf32> to vector<512x32xf32>
    %7 = arith.truncf %6 : vector<512x32xf32> to vector<512x32xbf16>
    %cst_4 = arith.constant dense<0.000000e+00> : vector<512x64xf32>
    %8 = tpu.matmul %7, %2, %cst_4 {dimension_numbers = #tpu.dot_dimension_numbers<[1], [0], [0], [1], [0, 0, 1, 1], [], []>} : vector<512x32xbf16>, vector<32x64xbf16>, vector<512x64xf32> -> vector<512x64xf32>
    %c0_5 = arith.constant 0 : index
    %c0_6 = arith.constant 0 : index
    %9 = vector.load %arg5[%c0_5, %c0_6] : memref<1x64xf32, #tpu.memory_space<vmem>>, vector<1x64xf32>
    %10 = vector.broadcast %9 : vector<1x64xf32> to vector<512x64xf32>
    %11 = arith.addf %5, %10 : vector<512x64xf32>
    %12 = vector.broadcast %9 : vector<1x64xf32> to vector<512x64xf32>
    %13 = arith.addf %8, %12 : vector<512x64xf32>
    %14 = tpu.concatenate %11, %13 in 1 : vector<512x64xf32>, vector<512x64xf32> -> vector<512x128xf32>
    %c0_7 = arith.constant 0 : index
    %c0_8 = arith.constant 0 : index
    %c0_9 = arith.constant 0 : index
    %c0_10 = arith.constant 0 : index
    %15 = vector.load %arg2[%c0_7, %c0_8, %c0_9, %c0_10] : memref<1x16x16x64xf32, #tpu.memory_space<vmem>>, vector<1x16x16x64xf32>
    %16 = vector.shape_cast %15 : vector<1x16x16x64xf32> to vector<16x16x64xf32>
    %17 = tpu.concatenate %16, %16 in 2 : vector<16x16x64xf32>, vector<16x16x64xf32> -> vector<16x16x128xf32>
    %18 = vector.shape_cast %14 : vector<512x128xf32> to vector<16x2x16x128xf32>
    %19 = vector.shape_cast %17 : vector<16x16x128xf32> to vector<16x1x16x128xf32>
    %20 = vector.broadcast %19 : vector<16x1x16x128xf32> to vector<16x2x16x128xf32>
    %21 = arith.addf %20, %18 : vector<16x2x16x128xf32>
    %22 = vector.shape_cast %21 : vector<16x2x16x128xf32> to vector<512x128xf32>
    %c0_11 = arith.constant 0 : index
    %c0_12 = arith.constant 0 : index
    %c0_13 = arith.constant 0 : index
    %23 = vector.load %arg6[%c0_11, %c0_12, %c0_13] : memref<1x512x128xf32, #tpu.memory_space<vmem>>, vector<1x512x128xf32>
    %24 = vector.shape_cast %23 : vector<1x512x128xf32> to vector<512x128xf32>
    %25 = vector.shape_cast %22 : vector<512x128xf32> to vector<1x512x128xf32>
    tpu.vector_store %arg6[%c0_11, %c0_12, %c0_13], %25 {strides = array<i32>} : memref<1x512x128xf32, #tpu.memory_space<vmem>>, vector<1x512x128xf32>,
    return
  }
  func.func @transform_0(%arg0: i32, %arg1: i32) -> (i32, i32, i32, i32) {
    %c0_i32 = arith.constant 0 : i32
    %c0_i32_0 = arith.constant 0 : i32
    %c0_i32_1 = arith.constant 0 : i32
    return %arg0, %arg1, %c0_i32, %c0_i32_0 : i32, i32, i32, i32
  }
  func.func @transform_1(%arg0: i32, %arg1: i32) -> (i32, i32, i32) {
    %c0_i32 = arith.constant 0 : i32
    %c0_i32_0 = arith.constant 0 : i32
    return %arg0, %arg1, %c0_i32 : i32, i32, i32
  }
  func.func @transform_2(%arg0: i32, %arg1: i32) -> (i32, i32) {
    %c0_i32 = arith.constant 0 : i32
    %c0_i32_0 = arith.constant 0 : i32
    %c0_i32_1 = arith.constant 0 : i32
    return %c0_i32, %c0_i32_0 : i32, i32
  }
  func.func @transform_3(%arg0: i32, %arg1: i32) -> (i32, i32) {
    %c0_i32 = arith.constant 0 : i32
    %c0_i32_0 = arith.constant 0 : i32
    %c0_i32_1 = arith.constant 0 : i32
    return %c0_i32, %c0_i32_0 : i32, i32
  }
  func.func @transform_4(%arg0: i32, %arg1: i32) -> (i32, i32, i32) {
    %c0_i32 = arith.constant 0 : i32
    %c0_i32_0 = arith.constant 0 : i32
    return %arg0, %arg1, %c0_i32 : i32, i32, i32
  }
}

module attributes {stable_mosaic.version = 11 : i64} {
  func.func @fpn_block_kernel(%arg0: i32, %arg1: i32, %arg2: memref<1x16x16x64xf32, #tpu.memory_space<vmem>>, %arg3: memref<1x512x64xf32, #tpu.memory_space<vmem>>, %arg4: memref<32x64xbf16, #tpu.memory_space<vmem>>, %arg5: memref<1x64xf32, #tpu.memory_space<vmem>>, %arg6: memref<1x512x128xf32, #tpu.memory_space<vmem>>) attributes {dimension_semantics = [#tpu.dimension_semantics<parallel>, #tpu.dimension_semantics<parallel>], iteration_bounds = array<i64: 2, 1>, scalar_prefetch = 0 : i64, scratch_operands = 0 : i64, tpu.core_type = #tpu.core_type<tc>, window_params = [{transform_indices = @transform_0, window_bounds = array<i64: 1, 16, 16, 64>}, {transform_indices = @transform_1, window_bounds = array<i64: 1, 512, 64>}, {pipeline_mode = #tpu.pipeline_mode<synchronous>, transform_indices = @transform_2, window_bounds = array<i64: 32, 64>}, {pipeline_mode = #tpu.pipeline_mode<synchronous>, transform_indices = @transform_3, window_bounds = array<i64: 1, 64>}, {transform_indices = @transform_4, window_bounds = array<i64: 1, 512, 128>}]} {
    %c0 = arith.constant 0 : index
    %c0_0 = arith.constant 0 : index
    %c0_1 = arith.constant 0 : index
    %0 = vector.load %arg3[%c0, %c0_0, %c0_1] : memref<1x512x64xf32, #tpu.memory_space<vmem>>, vector<1x512x64xf32>
    %1 = vector.shape_cast %0 : vector<1x512x64xf32> to vector<512x64xf32>
    %c0_2 = arith.constant 0 : index
    %c0_3 = arith.constant 0 : index
    %2 = vector.load %arg4[%c0_2, %c0_3] : memref<32x64xbf16, #tpu.memory_space<vmem>>, vector<32x64xbf16>
    %3 = vector.extract_strided_slice %1 {offsets = [0, 0], sizes = [512, 32], strides = [1, 1]} : vector<512x64xf32> to vector<512x32xf32>
    %4 = arith.truncf %3 : vector<512x32xf32> to vector<512x32xbf16>
    %cst = arith.constant dense<0.000000e+00> : vector<512x64xf32>
    %5 = tpu.matmul %4, %2, %cst {dimension_numbers = #tpu.dot_dimension_numbers<[1], [0], [0], [1], [0, 0, 1, 1], [], []>} : vector<512x32xbf16>, vector<32x64xbf16>, vector<512x64xf32> -> vector<512x64xf32>
    %6 = vector.extract_strided_slice %1 {offsets = [0, 32], sizes = [512, 32], strides = [1, 1]} : vector<512x64xf32> to vector<512x32xf32>
    %7 = arith.truncf %6 : vector<512x32xf32> to vector<512x32xbf16>
    %cst_4 = arith.constant dense<0.000000e+00> : vector<512x64xf32>
    %8 = tpu.matmul %7, %2, %cst_4 {dimension_numbers = #tpu.dot_dimension_numbers<[1], [0], [0], [1], [0, 0, 1, 1], [], []>} : vector<512x32xbf16>, vector<32x64xbf16>, vector<512x64xf32> -> vector<512x64xf32>
    %c0_5 = arith.constant 0 : index
    %c0_6 = arith.constant 0 : index
    %9 = vector.load %arg5[%c0_5, %c0_6] : memref<1x64xf32, #tpu.memory_space<vmem>>, vector<1x64xf32>
    %10 = vector.broadcast %9 : vector<1x64xf32> to vector<512x64xf32>
    %11 = arith.addf %5, %10 : vector<512x64xf32>
    %12 = vector.broadcast %9 : vector<1x64xf32> to vector<512x64xf32>
    %13 = arith.addf %8, %12 : vector<512x64xf32>
    %14 = tpu.concatenate %11, %13 in 1 : vector<512x64xf32>, vector<512x64xf32> -> vector<512x128xf32>
    %c0_7 = arith.constant 0 : index
    %c0_8 = arith.constant 0 : index
    %c0_9 = arith.constant 0 : index
    %c0_10 = arith.constant 0 : index
    %15 = vector.load %arg2[%c0_7, %c0_8, %c0_9, %c0_10] : memref<1x16x16x64xf32, #tpu.memory_space<vmem>>, vector<1x16x16x64xf32>
    %16 = vector.shape_cast %15 : vector<1x16x16x64xf32> to vector<16x16x64xf32>
    %17 = tpu.concatenate %16, %16 in 2 : vector<16x16x64xf32>, vector<16x16x64xf32> -> vector<16x16x128xf32>
    %18 = vector.shape_cast %14 : vector<512x128xf32> to vector<16x2x16x128xf32>
    %19 = vector.shape_cast %17 : vector<16x16x128xf32> to vector<16x1x16x128xf32>
    %20 = vector.broadcast %19 : vector<16x1x16x128xf32> to vector<16x2x16x128xf32>
    %21 = arith.addf %20, %18 : vector<16x2x16x128xf32>
    %22 = vector.shape_cast %21 : vector<16x2x16x128xf32> to vector<512x128xf32>
    %c0_11 = arith.constant 0 : index
    %c0_12 = arith.constant 0 : index
    %c0_13 = arith.constant 0 : index
    %23 = vector.load %arg6[%c0_11, %c0_12, %c0_13] : memref<1x512x128xf32, #tpu.memory_space<vmem>>, vector<1x512x128xf32>
    %24 = vector.shape_cast %23 : vector<1x512x128xf32> to vector<512x128xf32>
    %25 = vector.shape_cast %22 : vector<512x128xf32> to vector<1x512x128xf32>
    tpu.vector_store %arg6[%c0_11, %c0_12, %c0_13], %25 {strides = array<i32>} : memref<1x512x128xf32, #tpu.memory_space<vmem>>, vector<1x512x128xf32>,
    return
  }
  func.func @transform_0(%arg0: i32, %arg1: i32) -> (i32, i32, i32, i32) {
    %c0_i32 = arith.constant 0 : i32
    %c0_i32_0 = arith.constant 0 : i32
    %c0_i32_1 = arith.constant 0 : i32
    return %arg0, %arg1, %c0_i32, %c0_i32_0 : i32, i32, i32, i32
  }
  func.func @transform_1(%arg0: i32, %arg1: i32) -> (i32, i32, i32) {
    %c0_i32 = arith.constant 0 : i32
    %c0_i32_0 = arith.constant 0 : i32
    return %arg0, %arg1, %c0_i32 : i32, i32, i32
  }
  func.func @transform_2(%arg0: i32, %arg1: i32) -> (i32, i32) {
    %c0_i32 = arith.constant 0 : i32
    %c0_i32_0 = arith.constant 0 : i32
    %c0_i32_1 = arith.constant 0 : i32
    return %c0_i32, %c0_i32_0 : i32, i32
  }
  func.func @transform_3(%arg0: i32, %arg1: i32) -> (i32, i32) {
    %c0_i32 = arith.constant 0 : i32
    %c0_i32_0 = arith.constant 0 : i32
    %c0_i32_1 = arith.constant 0 : i32
    return %c0_i32, %c0_i32_0 : i32, i32
  }
  func.func @transform_4(%arg0: i32, %arg1: i32) -> (i32, i32, i32) {
    %c0_i32 = arith.constant 0 : i32
    %c0_i32_0 = arith.constant 0 : i32
    return %arg0, %arg1, %c0_i32 : i32, i32, i32
  }
}

</mosaic_0001>

<llo_original>
// kernel: tpu_custom_call.1
$region0: #{tpu_custom_call.1}
  #allocation0 [shape = 'u32[]', space=smem, size = 0x4, offset = 0x4, fixed_abs, tag = 'smem constant byte address 0x4 - core index']
  #allocation1 [shape = 'u32[144,128]{1,0:T(1,128)}', space=vmem, size = 0x12000, scoped, tag = 'internal scratch']
  %s0 = inlined_call_operand.vmem [shape: f32[2,16,16,64], index: 0, kind: input, shape index: {}]
  %s1 = inlined_call_operand.vmem [shape: f32[2,512,64], index: 1, kind: input, shape index: {}]
  %s2 = inlined_call_operand.vmem [shape: bf16[32,64], index: 2, kind: input, shape index: {}]
  %s3 = inlined_call_operand.vmem [shape: f32[1,64], index: 3, kind: input, shape index: {}]
  %s4 = inlined_call_operand.hbm [shape: f32[2,512,128], index: 4, kind: output, shape index: {}]
  %s5 = sld [smem:[#allocation0]]
  $region49: #{tpu_custom_call.1} parent=0
    _
  %s7 = ssub.s32 1, %s5
  %s8 = scalar_select 0, %s7, %s5
  $region1: #{tpu_custom_call.1} parent=0
    #allocation2 [shape = 'u8[524288]{0}', space=vmem, size = 0x80000, scoped, tag = 'output window, operand 0']
    #allocation3 [shape = 's32[2]{0}', space=sflag, size = 0x8, scoped, tag = 'scoped memory for tpu_custom_call.1']
    %9 = vsyncpa [#allocation3], 0
    %s10 = scalar_lea.sflag [#allocation3], 1
    %11 = vsyncpa %s10, 0
    loop: start=0, step=1, limit=4
    $region2: #{tpu_custom_call.1} parent=1 // loop_pre_header
      _
    $region3: #{tpu_custom_call.1} parent=1 // loop_header
      %s13 = sphi 0, %s17
      %p14 = scmp.ge.s32.totalorder %s13, 4
      %s20 = sphi 0, %s32
      %s21 = sphi 0, %s28
      %s22 = sphi 0, %s20
      %s23 = sphi 0, %s21
      %s24 = sphi 0, %s22
      %s25 = sphi 0, %s23
      %s37 = sphi 0, %s39
      %s40 = sphi 0, %s37
      %s41 = sphi 0, %s40
      %s57 = sphi 0, %s41
      %s65 = sphi 0, %s67
      %s68 = sphi 0, %s65
      %s69 = sphi 0, %s68
      %s85 = sphi 0, %s69
      %s89 = sphi 0, %s89
      %s91 = sphi 0, %s89
      %s92 = sphi 0, %s91
      %s106 = sphi 0, %s92
      %s110 = sphi 0, %s110
      %s112 = sphi 0, %s110
      %s113 = sphi 0, %s112
      %s127 = sphi 0, %s113
      %s135 = sphi 0, %s137
      %s138 = sphi 0, %s135
      %s139 = sphi 0, %s138
      %s155 = sphi 0, %s139
    $region4: #{tpu_custom_call.1} parent=1 // loop_header_branch
      %16 = sbr.rel (%p14) target = $region8
    $region5: #{tpu_custom_call.1} parent=1 // loop_body
      %s18 = ssub.s32 %s13, 1
      %s19 = ssub.s32 %s13, 2
      %s26 = sadd.s32 1, %s21
      %p27 = scmp.ge.s32.totalorder %s26, 1
      %s28 = scalar_select %p27, 0, %s26
      %s29 = sadd.s32 1, %s20
      %s30 = scalar_select %p27, %s29, %s20
      %p31 = scmp.ge.s32.totalorder %s30, 2
      %s32 = scalar_select %p31, 0, %s30
      %s33 = ssub.s32 %s20, %s32
      %s34 = ssub.s32 %s21, %s28
      %s35 = sor.u32 %s33, %s34
      %p36 = scmp.eq.s32.totalorder %s35, 0
      %s38 = sadd.s32 %s37, 1
      %s39 = scalar_select %p36, %s37, %s38
      %p42 = pneg %p36
      %p43 = scmp.eq.s32.totalorder %s13, 1
      %p44 = por %p42, %p43
      %p45 = scmp.ne.s32.totalorder %s37, %s40
      %p46 = scmp.eq.s32.totalorder %s13, 0
      %p47 = por %p45, %p46
      %p48 = scmp.ne.s32.totalorder %s37, %s40
      %p49 = scmp.eq.s32.totalorder %s18, 1
      %p50 = por %p48, %p49
      %p51 = scmp.ne.s32.totalorder %s40, %s41
      %p52 = scmp.eq.s32.totalorder %s18, 0
      %p53 = por %p51, %p52
      %p54 = scmp.ne.s32.totalorder %s40, %s41
      %p55 = scmp.eq.s32.totalorder %s19, 1
      %p56 = por %p54, %p55
      %p58 = scmp.ne.s32.totalorder %s41, %s57
      %p59 = scmp.eq.s32.totalorder %s19, 0
      %p60 = por %p58, %p59
      %s61 = ssub.s32 %s20, %s32
      %s62 = ssub.s32 %s21, %s28
      %s63 = sor.u32 %s61, %s62
      %p64 = scmp.eq.s32.totalorder %s63, 0
      %s66 = sadd.s32 %s65, 1
      %s67 = scalar_select %p64, %s65, %s66
      %p70 = pneg %p64
      %p71 = scmp.eq.s32.totalorder %s13, 1
      %p72 = por %p70, %p71
      %p73 = scmp.ne.s32.totalorder %s65, %s68
      %p74 = scmp.eq.s32.totalorder %s13, 0
      %p75 = por %p73, %p74
      %p76 = scmp.ne.s32.totalorder %s65, %s68
      %p77 = scmp.eq.s32.totalorder %s18, 1
      %p78 = por %p76, %p77
      %p79 = scmp.ne.s32.totalorder %s68, %s69
      %p80 = scmp.eq.s32.totalorder %s18, 0
      %p81 = por %p79, %p80
      %p82 = scmp.ne.s32.totalorder %s68, %s69
      %p83 = scmp.eq.s32.totalorder %s19, 1
      %p84 = por %p82, %p83
      %p86 = scmp.ne.s32.totalorder %s69, %s85
      %p87 = scmp.eq.s32.totalorder %s19, 0
      %p88 = por %p86, %p87
      %s90 = sadd.s32 %s89, 1
      %p93 = scmp.eq.s32.totalorder %s13, 1
      %p94 = scmp.ne.s32.totalorder %s89, %s91
      %p95 = scmp.eq.s32.totalorder %s13, 0
      %p96 = por %p94, %p95
      %p97 = scmp.ne.s32.totalorder %s89, %s91
      %p98 = scmp.eq.s32.totalorder %s18, 1
      %p99 = por %p97, %p98
      %p100 = scmp.ne.s32.totalorder %s91, %s92
      %p101 = scmp.eq.s32.totalorder %s18, 0
      %p102 = por %p100, %p101
      %p103 = scmp.ne.s32.totalorder %s91, %s92
      %p104 = scmp.eq.s32.totalorder %s19, 1
      %p105 = por %p103, %p104
      %p107 = scmp.ne.s32.totalorder %s92, %s106
      %p108 = scmp.eq.s32.totalorder %s19, 0
      %p109 = por %p107, %p108
      %s111 = sadd.s32 %s110, 1
      %p114 = scmp.eq.s32.totalorder %s13, 1
      %p115 = scmp.ne.s32.totalorder %s110, %s112
      %p116 = scmp.eq.s32.totalorder %s13, 0
      %p117 = por %p115, %p116
      %p118 = scmp.ne.s32.totalorder %s110, %s112
      %p119 = scmp.eq.s32.totalorder %s18, 1
      %p120 = por %p118, %p119
      %p121 = scmp.ne.s32.totalorder %s112, %s113
      %p122 = scmp.eq.s32.totalorder %s18, 0
      %p123 = por %p121, %p122
      %p124 = scmp.ne.s32.totalorder %s112, %s113
      %p125 = scmp.eq.s32.totalorder %s19, 1
      %p126 = por %p124, %p125
      %p128 = scmp.ne.s32.totalorder %s113, %s127
      %p129 = scmp.eq.s32.totalorder %s19, 0
      %p130 = por %p128, %p129
      %s131 = ssub.s32 %s20, %s32
      %s132 = ssub.s32 %s21, %s28
      %s133 = sor.u32 %s131, %s132
      %p134 = scmp.eq.s32.totalorder %s133, 0
      %s136 = sadd.s32 %s135, 1
      %s137 = scalar_select %p134, %s135, %s136
      %p140 = pneg %p134
      %p141 = scmp.eq.s32.totalorder %s13, 1
      %p142 = por %p140, %p141
      %p143 = scmp.ne.s32.totalorder %s135, %s138
      %p144 = scmp.eq.s32.totalorder %s13, 0
      %p145 = por %p143, %p144
      %p146 = scmp.ne.s32.totalorder %s135, %s138
      %p147 = scmp.eq.s32.totalorder %s18, 1
      %p148 = por %p146, %p147
      %p149 = scmp.ne.s32.totalorder %s138, %s139
      %p150 = scmp.eq.s32.totalorder %s18, 0
      %p151 = por %p149, %p150
      %p152 = scmp.ne.s32.totalorder %s138, %s139
      %p153 = scmp.eq.s32.totalorder %s19, 1
      %p154 = por %p152, %p153
      %p156 = scmp.ne.s32.totalorder %s139, %s155
      %p157 = scmp.eq.s32.totalorder %s19, 0
      %p158 = por %p156, %p157
      %p159 = scmp.le.s32.totalorder 1, %s13
      %p160 = scmp.lt.s32.totalorder %s13, 3
      %p161 = pnand %p159, %p160
      %p162 = pneg %p161
      // Predicated region
      $region9: #{tpu_custom_call.1} parent=5 // pred_check
        _
      $region10: #{tpu_custom_call.1} parent=5 // pred_check_branch
        %164 = sbr.rel (%p161) target = $region12
      $region11: #{tpu_custom_call.1} parent=5 // pred_region
        %s165 = ssub.s32 %s13, 1
        // Predicated region
        $region13: #{tpu_custom_call.1} parent=11 // pred_check
          %p166 = pneg %p102
        $region14: #{tpu_custom_call.1} parent=11 // pred_check_branch
          %168 = sbr.rel (%p166) target = $region16
        $region15: #{tpu_custom_call.1} parent=11 // pred_region
          _
        $region16: #{tpu_custom_call.1} parent=11 // pred_fallthru
          _
        // Predicated region
        $region17: #{tpu_custom_call.1} parent=11 // pred_check
          %p169 = pneg %p123
        $region18: #{tpu_custom_call.1} parent=11 // pred_check_branch
          %171 = sbr.rel (%p169) target = $region20
        $region19: #{tpu_custom_call.1} parent=11 // pred_region
          _
        $region20: #{tpu_custom_call.1} parent=11 // pred_fallthru
          _
      $region12: #{tpu_custom_call.1} parent=5 // pred_fallthru
        _
      %p172 = scmp.lt.s32.totalorder %s13, 2
      // Predicated region
      $region21: #{tpu_custom_call.1} parent=5 // pred_check
        %p173 = pneg %p172
      $region22: #{tpu_custom_call.1} parent=5 // pred_check_branch
        %175 = sbr.rel (%p173) target = $region24
      $region23: #{tpu_custom_call.1} parent=5 // pred_region
        // Predicated region
        $region25: #{tpu_custom_call.1} parent=23 // pred_check
          %p176 = pneg %p47
        $region26: #{tpu_custom_call.1} parent=23 // pred_check_branch
          %178 = sbr.rel (%p176) target = $region28
        $region27: #{tpu_custom_call.1} parent=23 // pred_region
          %s179 = smul.u32 16, %s21
          %p180 = scmp.lt.s32.totalorder %s20, 1
          %s181 = scalar_select %p180, %s20, 1
          %p182 = scmp.lt.s32.totalorder %s179, 15
          %s183 = scalar_select %p182, %s179, 15
          %s184 = smul.addr %s183, 2
          %s185 = smul.addr %s181, 32
          %s186 = sadd.s32 %s184, %s185
          %s187 = smul.addr %s186, 8
          %s188 = scalar_lea.vmem %s0, %s187
          %s189 = smul.u32 16, %s21
        $region28: #{tpu_custom_call.1} parent=23 // pred_fallthru
          _
        // Predicated region
        $region29: #{tpu_custom_call.1} parent=23 // pred_check
          %p190 = pneg %p75
        $region30: #{tpu_custom_call.1} parent=23 // pred_check_branch
          %192 = sbr.rel (%p190) target = $region32
        $region31: #{tpu_custom_call.1} parent=23 // pred_region
          %s193 = smul.u32 64, %s21
          %p194 = scmp.lt.s32.totalorder %s20, 1
          %s195 = scalar_select %p194, %s20, 1
          %p196 = scmp.lt.s32.totalorder %s193, 63
          %s197 = scalar_select %p196, %s193, 63
          %s198 = smul.addr %s195, 64
          %s199 = sadd.s32 %s197, %s198
          %s200 = smul.addr %s199, 8
          %s201 = scalar_lea.vmem %s1, %s200
          %s202 = smul.u32 64, %s21
        $region32: #{tpu_custom_call.1} parent=23 // pred_fallthru
          _
      $region24: #{tpu_custom_call.1} parent=5 // pred_fallthru
        _
      %p203 = scmp.le.s32.totalorder 1, %s13
      %p204 = scmp.lt.s32.totalorder %s13, 3
      %p205 = pnand %p203, %p204
      %p206 = pneg %p205
      // Predicated region
      $region33: #{tpu_custom_call.1} parent=5 // pred_check
        _
      $region34: #{tpu_custom_call.1} parent=5 // pred_check_branch
        %208 = sbr.rel (%p205) target = $region36
      $region35: #{tpu_custom_call.1} parent=5 // pred_region
        %s209 = ssub.s32 %s13, 1
        %s210 = smul.u32 16, %s23
        %p211 = scmp.lt.s32.totalorder %s22, 1
        %s212 = scalar_select %p211, %s22, 1
        %p213 = scmp.lt.s32.totalorder %s210, 15
        %s214 = scalar_select %p213, %s210, 15
        %s215 = smul.addr %s214, 2
        %s216 = smul.addr %s212, 32
        %s217 = sadd.s32 %s215, %s216
        %s218 = smul.addr %s217, 8
        %s219 = scalar_lea.vmem %s0, %s218
        %p220 = pneg %p53
        %p221 = pneg %p50
        %s222 = smul.u32 64, %s23
        %p223 = scmp.lt.s32.totalorder %s22, 1
        %s224 = scalar_select %p223, %s22, 1
        %p225 = scmp.lt.s32.totalorder %s222, 63
        %s226 = scalar_select %p225, %s222, 63
        %s227 = smul.addr %s224, 64
        %s228 = sadd.s32 %s226, %s227
        %s229 = smul.addr %s228, 8
        %s230 = scalar_lea.vmem %s1, %s229
        %p231 = pneg %p81
        %p232 = pneg %p78
        %p233 = pneg %p102
        %p234 = pneg %p99
        %p235 = pneg %p123
        %p236 = pneg %p120
        %p237 = pneg %p151
        %p238 = pneg %p148
        %s239 = sand.u32 %s138, 1
        %s240 = scalar_lea.sflag [#allocation3], %s239
        %s241 = sand.u32 %s138, 1
        %s242 = smul.addr %s241, 512
        %s243 = scalar_lea.vmem [#allocation2], %s242
        %s244 = smul.u32 16, %s23
        %p245 = scmp.lt.s32.totalorder %s22, 1
        %s246 = scalar_select %p245, %s22, 1
        %p247 = scmp.lt.s32.totalorder %s244, 15
        %s248 = scalar_select %p247, %s244, 15
        %s249 = smul.addr %s248, 2
        %s250 = smul.addr %s246, 32
        %s251 = sadd.s32 %s249, %s250
        %s252 = smul.addr %s251, 8
        %s253 = scalar_lea.vmem %s0, %s252
        %s254 = smul.u32 16, %s23
        %s255 = smul.u32 64, %s23
        %p256 = scmp.lt.s32.totalorder %s22, 1
        %s257 = scalar_select %p256, %s22, 1
        %p258 = scmp.lt.s32.totalorder %s255, 63
        %s259 = scalar_select %p258, %s255, 63
        %s260 = smul.addr %s257, 64
        %s261 = sadd.s32 %s259, %s260
        %s262 = smul.addr %s261, 8
        %s263 = scalar_lea.vmem %s1, %s262
        %s264 = smul.u32 64, %s23
        %s265 = smul.u32 64, %s23
        %v267 = vld [vmem:[%s263] sm:$0xff]
        %v268 = vld [vmem:[%s263 + $0x8] sm:$0xff]
        %v269 = vld [vmem:[%s263 + $0x10] sm:$0xff]
        %v270 = vld [vmem:[%s263 + $0x18] sm:$0xff]
        %v271 = vld [vmem:[%s263 + $0x20] sm:$0xff]
        %v272 = vld [vmem:[%s263 + $0x28] sm:$0xff]
        %v273 = vld [vmem:[%s263 + $0x30] sm:$0xff]
        %v274 = vld [vmem:[%s263 + $0x38] sm:$0xff]
        %v275 = vld [vmem:[%s263 + $0x40] sm:$0xff]
        %v276 = vld [vmem:[%s263 + $0x48] sm:$0xff]
        %v277 = vld [vmem:[%s263 + $0x50] sm:$0xff]
        %v278 = vld [vmem:[%s263 + $0x58] sm:$0xff]
        %v279 = vld [vmem:[%s263 + $0x60] sm:$0xff]
        %v280 = vld [vmem:[%s263 + $0x68] sm:$0xff]
        %v281 = vld [vmem:[%s263 + $0x70] sm:$0xff]
        %v282 = vld [vmem:[%s263 + $0x78] sm:$0xff]
        %v283 = vld [vmem:[%s263 + $0x80] sm:$0xff]
        %v284 = vld [vmem:[%s263 + $0x88] sm:$0xff]
        %v285 = vld [vmem:[%s263 + $0x90] sm:$0xff]
        %v286 = vld [vmem:[%s263 + $0x98] sm:$0xff]
        %v287 = vld [vmem:[%s263 + $0xa0] sm:$0xff]
        %v288 = vld [vmem:[%s263 + $0xa8] sm:$0xff]
        %v289 = vld [vmem:[%s263 + $0xb0] sm:$0xff]
        %v290 = vld [vmem:[%s263 + $0xb8] sm:$0xff]
        %v291 = vld [vmem:[%s263 + $0xc0] sm:$0xff]
        %v292 = vld [vmem:[%s263 + $0xc8] sm:$0xff]
        %v293 = vld [vmem:[%s263 + $0xd0] sm:$0xff]
        %v294 = vld [vmem:[%s263 + $0xd8] sm:$0xff]
        %v295 = vld [vmem:[%s263 + $0xe0] sm:$0xff]
        %v296 = vld [vmem:[%s263 + $0xe8] sm:$0xff]
        %v297 = vld [vmem:[%s263 + $0xf0] sm:$0xff]
        %v298 = vld [vmem:[%s263 + $0xf8] sm:$0xff]
        %v299 = vld [vmem:[%s263 + $0x100] sm:$0xff]
        %v300 = vld [vmem:[%s263 + $0x108] sm:$0xff]
        %v301 = vld [vmem:[%s263 + $0x110] sm:$0xff]
        %v302 = vld [vmem:[%s263 + $0x118] sm:$0xff]
        %v303 = vld [vmem:[%s263 + $0x120] sm:$0xff]
        %v304 = vld [vmem:[%s263 + $0x128] sm:$0xff]
        %v305 = vld [vmem:[%s263 + $0x130] sm:$0xff]
        %v306 = vld [vmem:[%s263 + $0x138] sm:$0xff]
        %v307 = vld [vmem:[%s263 + $0x140] sm:$0xff]
        %v308 = vld [vmem:[%s263 + $0x148] sm:$0xff]
        %v309 = vld [vmem:[%s263 + $0x150] sm:$0xff]
        %v310 = vld [vmem:[%s263 + $0x158] sm:$0xff]
        %v311 = vld [vmem:[%s263 + $0x160] sm:$0xff]
        %v312 = vld [vmem:[%s263 + $0x168] sm:$0xff]
        %v313 = vld [vmem:[%s263 + $0x170] sm:$0xff]
        %v314 = vld [vmem:[%s263 + $0x178] sm:$0xff]
        %v315 = vld [vmem:[%s263 + $0x180] sm:$0xff]
        %v316 = vld [vmem:[%s263 + $0x188] sm:$0xff]
        %v317 = vld [vmem:[%s263 + $0x190] sm:$0xff]
        %v318 = vld [vmem:[%s263 + $0x198] sm:$0xff]
        %v319 = vld [vmem:[%s263 + $0x1a0] sm:$0xff]
        %v320 = vld [vmem:[%s263 + $0x1a8] sm:$0xff]
        %v321 = vld [vmem:[%s263 + $0x1b0] sm:$0xff]
        %v322 = vld [vmem:[%s263 + $0x1b8] sm:$0xff]
        %v323 = vld [vmem:[%s263 + $0x1c0] sm:$0xff]
        %v324 = vld [vmem:[%s263 + $0x1c8] sm:$0xff]
        %v325 = vld [vmem:[%s263 + $0x1d0] sm:$0xff]
        %v326 = vld [vmem:[%s263 + $0x1d8] sm:$0xff]
        %v327 = vld [vmem:[%s263 + $0x1e0] sm:$0xff]
        %v328 = vld [vmem:[%s263 + $0x1e8] sm:$0xff]
        %v329 = vld [vmem:[%s263 + $0x1f0] sm:$0xff]
        %v330 = vld [vmem:[%s263 + $0x1f8] sm:$0xff]
        %v331 = vld [vmem:[%s2] sm:$0xf]
        %v332 = vld [vmem:[%s2 + $0x4] sm:$0xf]
        %v333 = vld [vmem:[%s2 + $0x8] sm:$0xf]
        %v334 = vld [vmem:[%s2 + $0xc] sm:$0xf]
        %v335 = vpack.c.bf16 %v268, %v267
        %v336 = vpack.c.bf16 %v270, %v269
        %v337 = vpack.c.bf16 %v272, %v271
        %v338 = vpack.c.bf16 %v274, %v273
        %v339 = vpack.c.bf16 %v276, %v275
        %v340 = vpack.c.bf16 %v278, %v277
        %v341 = vpack.c.bf16 %v280, %v279
        %v342 = vpack.c.bf16 %v282, %v281
        %v343 = vpack.c.bf16 %v284, %v283
        %v344 = vpack.c.bf16 %v286, %v285
        %v345 = vpack.c.bf16 %v288, %v287
        %v346 = vpack.c.bf16 %v290, %v289
        %v347 = vpack.c.bf16 %v292, %v291
        %v348 = vpack.c.bf16 %v294, %v293
        %v349 = vpack.c.bf16 %v296, %v295
        %v350 = vpack.c.bf16 %v298, %v297
        %v351 = vpack.c.bf16 %v300, %v299
        %v352 = vpack.c.bf16 %v302, %v301
        %v353 = vpack.c.bf16 %v304, %v303
        %v354 = vpack.c.bf16 %v306, %v305
        %v355 = vpack.c.bf16 %v308, %v307
        %v356 = vpack.c.bf16 %v310, %v309
        %v357 = vpack.c.bf16 %v312, %v311
        %v358 = vpack.c.bf16 %v314, %v313
        %v359 = vpack.c.bf16 %v316, %v315
        %v360 = vpack.c.bf16 %v318, %v317
        %v361 = vpack.c.bf16 %v320, %v319
        %v362 = vpack.c.bf16 %v322, %v321
        %v363 = vpack.c.bf16 %v324, %v323
        %v364 = vpack.c.bf16 %v326, %v325
        %v365 = vpack.c.bf16 %v328, %v327
        %v366 = vpack.c.bf16 %v330, %v329
        %v367 = vld [vmem:[%s3] sm:$0x1]
        %v369 = vlaneseq
        %v370 = vshrl.u32 %v369, 7
        %v371 = vsub.s32 0, %v370
        %v372 = vrot.slane %v367, %v371
        %v378 = vunpack.c.l.b16 %v331
        %v379 = vunpack.c.l.b16 %v332
        %v380 = vunpack.c.l.b16 %v333
        %v381 = vunpack.c.l.b16 %v334
        %v382 = vpack.c.b16 %v379, %v378
        %v383 = vpack.c.b16 %v381, %v380
        %vm386 = vcmask 261120
        %v388 = vsel %vm386, %v335, 0
        %v391 = vsel %vm386, %v336, 0
        %v394 = vsel %vm386, %v337, 0
        %v397 = vsel %vm386, %v338, 0
        %v400 = vsel %vm386, %v339, 0
        %v403 = vsel %vm386, %v340, 0
        %v406 = vsel %vm386, %v341, 0
        %v409 = vsel %vm386, %v342, 0
        %v412 = vsel %vm386, %v343, 0
        %v415 = vsel %vm386, %v344, 0
        %v418 = vsel %vm386, %v345, 0
        %v421 = vsel %vm386, %v346, 0
        %v424 = vsel %vm386, %v347, 0
        %v427 = vsel %vm386, %v348, 0
        %v430 = vsel %vm386, %v349, 0
        %v433 = vsel %vm386, %v350, 0
        %v436 = vsel %vm386, %v351, 0
        %v439 = vsel %vm386, %v352, 0
        %v442 = vsel %vm386, %v353, 0
        %v445 = vsel %vm386, %v354, 0
        %v448 = vsel %vm386, %v355, 0
        %v451 = vsel %vm386, %v356, 0
        %v454 = vsel %vm386, %v357, 0
        %v457 = vsel %vm386, %v358, 0
        %v460 = vsel %vm386, %v359, 0
        %v463 = vsel %vm386, %v360, 0
        %v466 = vsel %vm386, %v361, 0
        %v469 = vsel %vm386, %v362, 0
        %v472 = vsel %vm386, %v363, 0
        %v475 = vsel %vm386, %v364, 0
        %v478 = vsel %vm386, %v365, 0
        %v481 = vsel %vm386, %v366, 0
        %483 = vmatprep.subr.bf16.mxu0 0
        %484 = vmatpush1.bf16.msra.mxu0 %v382
        %485 = vmatprep.subr.bf16.mxu0 0
        %486 = vmatpush1.bf16.msra.mxu0 %v383
        %487 = vmatprep.subr.bf16.mxu0 0
        %488 = vmatpush1.bf16.msra.mxu0 0
        %489 = vmatprep.subr.bf16.mxu0 0
        %490 = vmatpush1.bf16.msra.mxu0 0
        %491 = vmatprep.subr.bf16.mxu0 0
        %492 = vmatpush1.bf16.msra.mxu0 0
        %493 = vmatprep.subr.bf16.mxu0 0
        %494 = vmatpush1.bf16.msra.mxu0 0
        %495 = vmatprep.subr.bf16.mxu0 0
        %496 = vmatpush1.bf16.msra.mxu0 0
        %497 = vmatprep.subr.bf16.mxu0 0
        %498 = vmatpush1.bf16.msra.mxu0 0
        %499 = vmatprep.subr.bf16.mxu0 0
        %500 = vmatpush1.bf16.msra.mxu0 0
        %501 = vmatprep.subr.bf16.mxu0 0
        %502 = vmatpush1.bf16.msra.mxu0 0
        %503 = vmatprep.subr.bf16.mxu0 0
        %504 = vmatpush1.bf16.msra.mxu0 0
        %505 = vmatprep.subr.bf16.mxu0 0
        %506 = vmatpush1.bf16.msra.mxu0 0
        %507 = vmatprep.subr.bf16.mxu0 0
        %508 = vmatpush1.bf16.msra.mxu0 0
        %509 = vmatprep.subr.bf16.mxu0 0
        %510 = vmatpush1.bf16.msra.mxu0 0
        %511 = vmatprep.subr.bf16.mxu0 0
        %512 = vmatpush1.bf16.msra.mxu0 0
        %513 = vmatprep.subr.bf16.mxu0 0
        %514 = vmatpush1.bf16.msra.mxu0 0
        %515 = vmatprep.mubr.bf16.mxu0 0
        %516 = vmatmul.mubr.bf16.gmra.mrb[0].mxu0 %v388
        %v517 = vpop.f32.mrb[0].mxu0
        %v518 = vadd.f32 %v372, %v517
        %v519 = vpop.f32.mrb[0].mxu0
        %v520 = vpop.f32.mrb[0].mxu0
        %v521 = vadd.f32 %v372, %v520
        %v522 = vpop.f32.mrb[0].mxu0
        %523 = vmatprep.mubr.bf16.mxu0 0
        %524 = vmatmul.mubr.bf16.gmra.mrb[0].mxu0 %v391
        %v525 = vpop.f32.mrb[0].mxu0
        %v526 = vadd.f32 %v372, %v525
        %v527 = vpop.f32.mrb[0].mxu0
        %v528 = vpop.f32.mrb[0].mxu0
        %v529 = vadd.f32 %v372, %v528
        %v530 = vpop.f32.mrb[0].mxu0
        %531 = vmatprep.mubr.bf16.mxu0 0
        %532 = vmatmul.mubr.bf16.gmra.mrb[0].mxu0 %v394
        %v533 = vpop.f32.mrb[0].mxu0
        %v534 = vadd.f32 %v372, %v533
        %v535 = vpop.f32.mrb[0].mxu0
        %v536 = vpop.f32.mrb[0].mxu0
        %v537 = vadd.f32 %v372, %v536
        %v538 = vpop.f32.mrb[0].mxu0
        %539 = vmatprep.mubr.bf16.mxu0 0
        %540 = vmatmul.mubr.bf16.gmra.mrb[0].mxu0 %v397
        %v541 = vpop.f32.mrb[0].mxu0
        %v542 = vadd.f32 %v372, %v541
        %v543 = vpop.f32.mrb[0].mxu0
        %v544 = vpop.f32.mrb[0].mxu0
        %v545 = vadd.f32 %v372, %v544
        %v546 = vpop.f32.mrb[0].mxu0
        %547 = vmatprep.mubr.bf16.mxu0 0
        %548 = vmatmul.mubr.bf16.gmra.mrb[0].mxu0 %v400
        %v549 = vpop.f32.mrb[0].mxu0
        %v550 = vadd.f32 %v372, %v549
        %v551 = vpop.f32.mrb[0].mxu0
        %v552 = vpop.f32.mrb[0].mxu0
        %v553 = vadd.f32 %v372, %v552
        %v554 = vpop.f32.mrb[0].mxu0
        %555 = vmatprep.mubr.bf16.mxu0 0
        %556 = vmatmul.mubr.bf16.gmra.mrb[0].mxu0 %v403
        %v557 = vpop.f32.mrb[0].mxu0
        %v558 = vadd.f32 %v372, %v557
        %v559 = vpop.f32.mrb[0].mxu0
        %v560 = vpop.f32.mrb[0].mxu0
        %v561 = vadd.f32 %v372, %v560
        %v562 = vpop.f32.mrb[0].mxu0
        %563 = vmatprep.mubr.bf16.mxu0 0
        %564 = vmatmul.mubr.bf16.gmra.mrb[0].mxu0 %v406
        %v565 = vpop.f32.mrb[0].mxu0
        %v566 = vadd.f32 %v372, %v565
        %v567 = vpop.f32.mrb[0].mxu0
        %v568 = vpop.f32.mrb[0].mxu0
        %v569 = vadd.f32 %v372, %v568
        %v570 = vpop.f32.mrb[0].mxu0
        %571 = vmatprep.mubr.bf16.mxu0 0
        %572 = vmatmul.mubr.bf16.gmra.mrb[0].mxu0 %v409
        %v573 = vpop.f32.mrb[0].mxu0
        %v574 = vadd.f32 %v372, %v573
        %v575 = vpop.f32.mrb[0].mxu0
        %v576 = vpop.f32.mrb[0].mxu0
        %v577 = vadd.f32 %v372, %v576
        %v578 = vpop.f32.mrb[0].mxu0
        %579 = vmatprep.mubr.bf16.mxu0 0
        %580 = vmatmul.mubr.bf16.gmra.mrb[0].mxu0 %v412
        %v581 = vpop.f32.mrb[0].mxu0
        %v582 = vadd.f32 %v372, %v581
        %v583 = vpop.f32.mrb[0].mxu0
        %v584 = vpop.f32.mrb[0].mxu0
        %v585 = vadd.f32 %v372, %v584
        %v586 = vpop.f32.mrb[0].mxu0
        %587 = vmatprep.mubr.bf16.mxu0 0
        %588 = vmatmul.mubr.bf16.gmra.mrb[0].mxu0 %v415
        %v589 = vpop.f32.mrb[0].mxu0
        %v590 = vadd.f32 %v372, %v589
        %v591 = vpop.f32.mrb[0].mxu0
        %v592 = vpop.f32.mrb[0].mxu0
        %v593 = vadd.f32 %v372, %v592
        %v594 = vpop.f32.mrb[0].mxu0
        %595 = vmatprep.mubr.bf16.mxu0 0
        %596 = vmatmul.mubr.bf16.gmra.mrb[0].mxu0 %v418
        %v597 = vpop.f32.mrb[0].mxu0
        %v598 = vadd.f32 %v372, %v597
        %v599 = vpop.f32.mrb[0].mxu0
        %v600 = vpop.f32.mrb[0].mxu0
        %v601 = vadd.f32 %v372, %v600
        %v602 = vpop.f32.mrb[0].mxu0
        %603 = vmatprep.mubr.bf16.mxu0 0
        %604 = vmatmul.mubr.bf16.gmra.mrb[0].mxu0 %v421
        %v605 = vpop.f32.mrb[0].mxu0
        %v606 = vadd.f32 %v372, %v605
        %v607 = vpop.f32.mrb[0].mxu0
        %v608 = vpop.f32.mrb[0].mxu0
        %v609 = vadd.f32 %v372, %v608
        %v610 = vpop.f32.mrb[0].mxu0
        %611 = vmatprep.mubr.bf16.mxu0 0
        %612 = vmatmul.mubr.bf16.gmra.mrb[0].mxu0 %v424
        %v613 = vpop.f32.mrb[0].mxu0
        %v614 = vadd.f32 %v372, %v613
        %v615 = vpop.f32.mrb[0].mxu0
        %v616 = vpop.f32.mrb[0].mxu0
        %v617 = vadd.f32 %v372, %v616
        %v618 = vpop.f32.mrb[0].mxu0
        %619 = vmatprep.mubr.bf16.mxu0 0
        %620 = vmatmul.mubr.bf16.gmra.mrb[0].mxu0 %v427
        %v621 = vpop.f32.mrb[0].mxu0
        %v622 = vadd.f32 %v372, %v621
        %v623 = vpop.f32.mrb[0].mxu0
        %v624 = vpop.f32.mrb[0].mxu0
        %v625 = vadd.f32 %v372, %v624
        %v626 = vpop.f32.mrb[0].mxu0
        %627 = vmatprep.mubr.bf16.mxu0 0
        %628 = vmatmul.mubr.bf16.gmra.mrb[0].mxu0 %v430
        %v629 = vpop.f32.mrb[0].mxu0
        %v630 = vadd.f32 %v372, %v629
        %v631 = vpop.f32.mrb[0].mxu0
        %v632 = vpop.f32.mrb[0].mxu0
        %v633 = vadd.f32 %v372, %v632
        %v634 = vpop.f32.mrb[0].mxu0
        %635 = vmatprep.mubr.bf16.mxu0 0
        %636 = vmatmul.mubr.bf16.gmra.mrb[0].mxu0 %v433
        %v637 = vpop.f32.mrb[0].mxu0
        %v638 = vadd.f32 %v372, %v637
        %v639 = vpop.f32.mrb[0].mxu0
        %v640 = vpop.f32.mrb[0].mxu0
        %v641 = vadd.f32 %v372, %v640
        %v642 = vpop.f32.mrb[0].mxu0
        %643 = vmatprep.mubr.bf16.mxu0 0
        %644 = vmatmul.mubr.bf16.gmra.mrb[0].mxu0 %v436
        %v645 = vpop.f32.mrb[0].mxu0
        %v646 = vadd.f32 %v372, %v645
        %v647 = vpop.f32.mrb[0].mxu0
        %v648 = vpop.f32.mrb[0].mxu0
        %v649 = vadd.f32 %v372, %v648
        %v650 = vpop.f32.mrb[0].mxu0
        %651 = vmatprep.mubr.bf16.mxu0 0
        %652 = vmatmul.mubr.bf16.gmra.mrb[0].mxu0 %v439
        %v653 = vpop.f32.mrb[0].mxu0
        %v654 = vadd.f32 %v372, %v653
        %v655 = vpop.f32.mrb[0].mxu0
        %v656 = vpop.f32.mrb[0].mxu0
        %v657 = vadd.f32 %v372, %v656
        %v658 = vpop.f32.mrb[0].mxu0
        %659 = vmatprep.mubr.bf16.mxu0 0
        %660 = vmatmul.mubr.bf16.gmra.mrb[0].mxu0 %v442
        %v661 = vpop.f32.mrb[0].mxu0
        %v662 = vadd.f32 %v372, %v661
        %v663 = vpop.f32.mrb[0].mxu0
        %v664 = vpop.f32.mrb[0].mxu0
        %v665 = vadd.f32 %v372, %v664
        %v666 = vpop.f32.mrb[0].mxu0
        %667 = vmatprep.mubr.bf16.mxu0 0
        %668 = vmatmul.mubr.bf16.gmra.mrb[0].mxu0 %v445
        %v669 = vpop.f32.mrb[0].mxu0
        %v670 = vadd.f32 %v372, %v669
        %v671 = vpop.f32.mrb[0].mxu0
        %v672 = vpop.f32.mrb[0].mxu0
        %v673 = vadd.f32 %v372, %v672
        %v674 = vpop.f32.mrb[0].mxu0
        %675 = vmatprep.mubr.bf16.mxu0 0
        %676 = vmatmul.mubr.bf16.gmra.mrb[0].mxu0 %v448
        %v677 = vpop.f32.mrb[0].mxu0
        %v678 = vadd.f32 %v372, %v677
        %v679 = vpop.f32.mrb[0].mxu0
        %v680 = vpop.f32.mrb[0].mxu0
        %v681 = vadd.f32 %v372, %v680
        %v682 = vpop.f32.mrb[0].mxu0
        %683 = vmatprep.mubr.bf16.mxu0 0
        %684 = vmatmul.mubr.bf16.gmra.mrb[0].mxu0 %v451
        %v685 = vpop.f32.mrb[0].mxu0
        %v686 = vadd.f32 %v372, %v685
        %v687 = vpop.f32.mrb[0].mxu0
        %v688 = vpop.f32.mrb[0].mxu0
        %v689 = vadd.f32 %v372, %v688
        %v690 = vpop.f32.mrb[0].mxu0
        %691 = vmatprep.mubr.bf16.mxu0 0
        %692 = vmatmul.mubr.bf16.gmra.mrb[0].mxu0 %v454
        %v693 = vpop.f32.mrb[0].mxu0
        %v694 = vadd.f32 %v372, %v693
        %v695 = vpop.f32.mrb[0].mxu0
        %v696 = vpop.f32.mrb[0].mxu0
        %v697 = vadd.f32 %v372, %v696
        %v698 = vpop.f32.mrb[0].mxu0
        %699 = vmatprep.mubr.bf16.mxu0 0
        %700 = vmatmul.mubr.bf16.gmra.mrb[0].mxu0 %v457
        %v701 = vpop.f32.mrb[0].mxu0
        %v702 = vadd.f32 %v372, %v701
        %v703 = vpop.f32.mrb[0].mxu0
        %v704 = vpop.f32.mrb[0].mxu0
        %v705 = vadd.f32 %v372, %v704
        %v706 = vpop.f32.mrb[0].mxu0
        %707 = vmatprep.mubr.bf16.mxu0 0
        %708 = vmatmul.mubr.bf16.gmra.mrb[0].mxu0 %v460
        %v709 = vpop.f32.mrb[0].mxu0
        %v710 = vadd.f32 %v372, %v709
        %v711 = vpop.f32.mrb[0].mxu0
        %v712 = vpop.f32.mrb[0].mxu0
        %v713 = vadd.f32 %v372, %v712
        %v714 = vpop.f32.mrb[0].mxu0
        %715 = vmatprep.mubr.bf16.mxu0 0
        %716 = vmatmul.mubr.bf16.gmra.mrb[0].mxu0 %v463
        %v717 = vpop.f32.mrb[0].mxu0
        %v718 = vadd.f32 %v372, %v717
        %v719 = vpop.f32.mrb[0].mxu0
        %v720 = vpop.f32.mrb[0].mxu0
        %v721 = vadd.f32 %v372, %v720
        %v722 = vpop.f32.mrb[0].mxu0
        %723 = vmatprep.mubr.bf16.mxu0 0
        %724 = vmatmul.mubr.bf16.gmra.mrb[0].mxu0 %v466
        %v725 = vpop.f32.mrb[0].mxu0
        %v726 = vadd.f32 %v372, %v725
        %v727 = vpop.f32.mrb[0].mxu0
        %v728 = vpop.f32.mrb[0].mxu0
        %v729 = vadd.f32 %v372, %v728
        %v730 = vpop.f32.mrb[0].mxu0
        %731 = vmatprep.mubr.bf16.mxu0 0
        %732 = vmatmul.mubr.bf16.gmra.mrb[0].mxu0 %v469
        %v733 = vpop.f32.mrb[0].mxu0
        %v734 = vadd.f32 %v372, %v733
        %v735 = vpop.f32.mrb[0].mxu0
        %v736 = vpop.f32.mrb[0].mxu0
        %v737 = vadd.f32 %v372, %v736
        %v738 = vpop.f32.mrb[0].mxu0
        %739 = vmatprep.mubr.bf16.mxu0 0
        %740 = vmatmul.mubr.bf16.gmra.mrb[0].mxu0 %v472
        %v741 = vpop.f32.mrb[0].mxu0
        %v742 = vadd.f32 %v372, %v741
        %v743 = vpop.f32.mrb[0].mxu0
        %v744 = vpop.f32.mrb[0].mxu0
        %v745 = vadd.f32 %v372, %v744
        %v746 = vpop.f32.mrb[0].mxu0
        %747 = vmatprep.mubr.bf16.mxu0 0
        %748 = vmatmul.mubr.bf16.gmra.mrb[0].mxu0 %v475
        %v749 = vpop.f32.mrb[0].mxu0
        %v750 = vadd.f32 %v372, %v749
        %v751 = vpop.f32.mrb[0].mxu0
        %v752 = vpop.f32.mrb[0].mxu0
        %v753 = vadd.f32 %v372, %v752
        %v754 = vpop.f32.mrb[0].mxu0
        %755 = vmatprep.mubr.bf16.mxu0 0
        %756 = vmatmul.mubr.bf16.gmra.mrb[0].mxu0 %v478
        %v757 = vpop.f32.mrb[0].mxu0
        %v758 = vadd.f32 %v372, %v757
        %v759 = vpop.f32.mrb[0].mxu0
        %v760 = vpop.f32.mrb[0].mxu0
        %v761 = vadd.f32 %v372, %v760
        %v762 = vpop.f32.mrb[0].mxu0
        %763 = vmatprep.mubr.bf16.mxu0 0
        %764 = vmatmul.mubr.bf16.gmra.mrb[0].mxu0 %v481
        %v765 = vpop.f32.mrb[0].mxu0
        %v766 = vadd.f32 %v372, %v765
        %v767 = vpop.f32.mrb[0].mxu0
        %v768 = vpop.f32.mrb[0].mxu0
        %v769 = vadd.f32 %v372, %v768
        %v770 = vpop.f32.mrb[0].mxu0
        %771 = vdwg.mxu0
        %804 = vrot.lane.b32.xlu0 %v335, 96
        %v805 = vpop.permute.xlu0 %804
        %806 = vrot.lane.b32.xlu0 %v336, 96
        %v807 = vpop.permute.xlu0 %806
        %808 = vrot.lane.b32.xlu0 %v337, 96
        %v809 = vpop.permute.xlu0 %808
        %810 = vrot.lane.b32.xlu0 %v338, 96
        %v811 = vpop.permute.xlu0 %810
        %812 = vrot.lane.b32.xlu0 %v339, 96
        %v813 = vpop.permute.xlu0 %812
        %814 = vrot.lane.b32.xlu0 %v340, 96
        %v815 = vpop.permute.xlu0 %814
        %816 = vrot.lane.b32.xlu0 %v341, 96
        %v817 = vpop.permute.xlu0 %816
        %818 = vrot.lane.b32.xlu0 %v342, 96
        %v819 = vpop.permute.xlu0 %818
        %820 = vrot.lane.b32.xlu0 %v343, 96
        %v821 = vpop.permute.xlu0 %820
        %822 = vrot.lane.b32.xlu0 %v344, 96
        %v823 = vpop.permute.xlu0 %822
        %824 = vrot.lane.b32.xlu0 %v345, 96
        %v825 = vpop.permute.xlu0 %824
        %826 = vrot.lane.b32.xlu0 %v346, 96
        %v827 = vpop.permute.xlu0 %826
        %828 = vrot.lane.b32.xlu0 %v347, 96
        %v829 = vpop.permute.xlu0 %828
        %830 = vrot.lane.b32.xlu0 %v348, 96
        %v831 = vpop.permute.xlu0 %830
        %832 = vrot.lane.b32.xlu0 %v349, 96
        %v833 = vpop.permute.xlu0 %832
        %834 = vrot.lane.b32.xlu0 %v350, 96
        %v835 = vpop.permute.xlu0 %834
        %836 = vrot.lane.b32.xlu0 %v351, 96
        %v837 = vpop.permute.xlu0 %836
        %838 = vrot.lane.b32.xlu0 %v352, 96
        %v839 = vpop.permute.xlu0 %838
        %840 = vrot.lane.b32.xlu0 %v353, 96
        %v841 = vpop.permute.xlu0 %840
        %842 = vrot.lane.b32.xlu0 %v354, 96
        %v843 = vpop.permute.xlu0 %842
        %844 = vrot.lane.b32.xlu0 %v355, 96
        %v845 = vpop.permute.xlu0 %844
        %846 = vrot.lane.b32.xlu0 %v356, 96
        %v847 = vpop.permute.xlu0 %846
        %848 = vrot.lane.b32.xlu0 %v357, 96
        %v849 = vpop.permute.xlu0 %848
        %850 = vrot.lane.b32.xlu0 %v358, 96
        %v851 = vpop.permute.xlu0 %850
        %852 = vrot.lane.b32.xlu0 %v359, 96
        %v853 = vpop.permute.xlu0 %852
        %854 = vrot.lane.b32.xlu0 %v360, 96
        %v855 = vpop.permute.xlu0 %854
        %856 = vrot.lane.b32.xlu0 %v361, 96
        %v857 = vpop.permute.xlu0 %856
        %858 = vrot.lane.b32.xlu0 %v362, 96
        %v859 = vpop.permute.xlu0 %858
        %860 = vrot.lane.b32.xlu0 %v363, 96
        %v861 = vpop.permute.xlu0 %860
        %862 = vrot.lane.b32.xlu0 %v364, 96
        %v863 = vpop.permute.xlu0 %862
        %864 = vrot.lane.b32.xlu0 %v365, 96
        %v865 = vpop.permute.xlu0 %864
        %866 = vrot.lane.b32.xlu0 %v366, 96
        %v867 = vpop.permute.xlu0 %866
        %v869 = vsel %vm386, %v805, 0
        %v872 = vsel %vm386, %v807, 0
        %v875 = vsel %vm386, %v809, 0
        %v878 = vsel %vm386, %v811, 0
        %v881 = vsel %vm386, %v813, 0
        %v884 = vsel %vm386, %v815, 0
        %v887 = vsel %vm386, %v817, 0
        %v890 = vsel %vm386, %v819, 0
        %v893 = vsel %vm386, %v821, 0
        %v896 = vsel %vm386, %v823, 0
        %v899 = vsel %vm386, %v825, 0
        %v902 = vsel %vm386, %v827, 0
        %v905 = vsel %vm386, %v829, 0
        %v908 = vsel %vm386, %v831, 0
        %v911 = vsel %vm386, %v833, 0
        %v914 = vsel %vm386, %v835, 0
        %v917 = vsel %vm386, %v837, 0
        %v920 = vsel %vm386, %v839, 0
        %v923 = vsel %vm386, %v841, 0
        %v926 = vsel %vm386, %v843, 0
        %v929 = vsel %vm386, %v845, 0
        %v932 = vsel %vm386, %v847, 0
        %v935 = vsel %vm386, %v849, 0
        %v938 = vsel %vm386, %v851, 0
        %v941 = vsel %vm386, %v853, 0
        %v944 = vsel %vm386, %v855, 0
        %v947 = vsel %vm386, %v857, 0
        %v950 = vsel %vm386, %v859, 0
        %v953 = vsel %vm386, %v861, 0
        %v956 = vsel %vm386, %v863, 0
        %v959 = vsel %vm386, %v865, 0
        %v962 = vsel %vm386, %v867, 0
        %964 = vmatprep.subr.bf16.mxu0 0
        %965 = vmatpush1.bf16.msra.mxu0 %v382
        %966 = vmatprep.subr.bf16.mxu0 0
        %967 = vmatpush1.bf16.msra.mxu0 %v383
        %968 = vmatprep.subr.bf16.mxu0 0
        %969 = vmatpush1.bf16.msra.mxu0 0
        %970 = vmatprep.subr.bf16.mxu0 0
        %971 = vmatpush1.bf16.msra.mxu0 0
        %972 = vmatprep.subr.bf16.mxu0 0
        %973 = vmatpush1.bf16.msra.mxu0 0
        %974 = vmatprep.subr.bf16.mxu0 0
        %975 = vmatpush1.bf16.msra.mxu0 0
        %976 = vmatprep.subr.bf16.mxu0 0
        %977 = vmatpush1.bf16.msra.mxu0 0
        %978 = vmatprep.subr.bf16.mxu0 0
        %979 = vmatpush1.bf16.msra.mxu0 0
        %980 = vmatprep.subr.bf16.mxu0 0
        %981 = vmatpush1.bf16.msra.mxu0 0
        %982 = vmatprep.subr.bf16.mxu0 0
        %983 = vmatpush1.bf16.msra.mxu0 0
        %984 = vmatprep.subr.bf16.mxu0 0
        %985 = vmatpush1.bf16.msra.mxu0 0
        %986 = vmatprep.subr.bf16.mxu0 0
        %987 = vmatpush1.bf16.msra.mxu0 0
        %988 = vmatprep.subr.bf16.mxu0 0
        %989 = vmatpush1.bf16.msra.mxu0 0
        %990 = vmatprep.subr.bf16.mxu0 0
        %991 = vmatpush1.bf16.msra.mxu0 0
        %992 = vmatprep.subr.bf16.mxu0 0
        %993 = vmatpush1.bf16.msra.mxu0 0
        %994 = vmatprep.subr.bf16.mxu0 0
        %995 = vmatpush1.bf16.msra.mxu0 0
        %996 = vmatprep.mubr.bf16.mxu0 0
        %997 = vmatmul.mubr.bf16.gmra.mrb[0].mxu0 %v869
        %v998 = vpop.f32.mrb[0].mxu0
        %v999 = vadd.f32 %v372, %v998
        %v1000 = vpop.f32.mrb[0].mxu0
        %v1001 = vpop.f32.mrb[0].mxu0
        %v1002 = vadd.f32 %v372, %v1001
        %v1003 = vpop.f32.mrb[0].mxu0
        %1004 = vmatprep.mubr.bf16.mxu0 0
        %1005 = vmatmul.mubr.bf16.gmra.mrb[0].mxu0 %v872
        %v1006 = vpop.f32.mrb[0].mxu0
        %v1007 = vadd.f32 %v372, %v1006
        %v1008 = vpop.f32.mrb[0].mxu0
        %v1009 = vpop.f32.mrb[0].mxu0
        %v1010 = vadd.f32 %v372, %v1009
        %v1011 = vpop.f32.mrb[0].mxu0
        %1012 = vmatprep.mubr.bf16.mxu0 0
        %1013 = vmatmul.mubr.bf16.gmra.mrb[0].mxu0 %v875
        %v1014 = vpop.f32.mrb[0].mxu0
        %v1015 = vadd.f32 %v372, %v1014
        %v1016 = vpop.f32.mrb[0].mxu0
        %v1017 = vpop.f32.mrb[0].mxu0
        %v1018 = vadd.f32 %v372, %v1017
        %v1019 = vpop.f32.mrb[0].mxu0
        %1020 = vmatprep.mubr.bf16.mxu0 0
        %1021 = vmatmul.mubr.bf16.gmra.mrb[0].mxu0 %v878
        %v1022 = vpop.f32.mrb[0].mxu0
        %v1023 = vadd.f32 %v372, %v1022
        %v1024 = vpop.f32.mrb[0].mxu0
        %v1025 = vpop.f32.mrb[0].mxu0
        %v1026 = vadd.f32 %v372, %v1025
        %v1027 = vpop.f32.mrb[0].mxu0
        %1028 = vmatprep.mubr.bf16.mxu0 0
        %1029 = vmatmul.mubr.bf16.gmra.mrb[0].mxu0 %v881
        %v1030 = vpop.f32.mrb[0].mxu0
        %v1031 = vadd.f32 %v372, %v1030
        %v1032 = vpop.f32.mrb[0].mxu0
        %v1033 = vpop.f32.mrb[0].mxu0
        %v1034 = vadd.f32 %v372, %v1033
        %v1035 = vpop.f32.mrb[0].mxu0
        %1036 = vmatprep.mubr.bf16.mxu0 0
        %1037 = vmatmul.mubr.bf16.gmra.mrb[0].mxu0 %v884
        %v1038 = vpop.f32.mrb[0].mxu0
        %v1039 = vadd.f32 %v372, %v1038
        %v1040 = vpop.f32.mrb[0].mxu0
        %v1041 = vpop.f32.mrb[0].mxu0
        %v1042 = vadd.f32 %v372, %v1041
        %v1043 = vpop.f32.mrb[0].mxu0
        %1044 = vmatprep.mubr.bf16.mxu0 0
        %1045 = vmatmul.mubr.bf16.gmra.mrb[0].mxu0 %v887
        %v1046 = vpop.f32.mrb[0].mxu0
        %v1047 = vadd.f32 %v372, %v1046
        %v1048 = vpop.f32.mrb[0].mxu0
        %v1049 = vpop.f32.mrb[0].mxu0
        %v1050 = vadd.f32 %v372, %v1049
        %v1051 = vpop.f32.mrb[0].mxu0
        %1052 = vmatprep.mubr.bf16.mxu0 0
        %1053 = vmatmul.mubr.bf16.gmra.mrb[0].mxu0 %v890
        %v1054 = vpop.f32.mrb[0].mxu0
        %v1055 = vadd.f32 %v372, %v1054
        %v1056 = vpop.f32.mrb[0].mxu0
        %v1057 = vpop.f32.mrb[0].mxu0
        %v1058 = vadd.f32 %v372, %v1057
        %v1059 = vpop.f32.mrb[0].mxu0
        %1060 = vmatprep.mubr.bf16.mxu0 0
        %1061 = vmatmul.mubr.bf16.gmra.mrb[0].mxu0 %v893
        %v1062 = vpop.f32.mrb[0].mxu0
        %v1063 = vadd.f32 %v372, %v1062
        %v1064 = vpop.f32.mrb[0].mxu0
        %v1065 = vpop.f32.mrb[0].mxu0
        %v1066 = vadd.f32 %v372, %v1065
        %v1067 = vpop.f32.mrb[0].mxu0
        %1068 = vmatprep.mubr.bf16.mxu0 0
        %1069 = vmatmul.mubr.bf16.gmra.mrb[0].mxu0 %v896
        %v1070 = vpop.f32.mrb[0].mxu0
        %v1071 = vadd.f32 %v372, %v1070
        %v1072 = vpop.f32.mrb[0].mxu0
        %v1073 = vpop.f32.mrb[0].mxu0
        %v1074 = vadd.f32 %v372, %v1073
        %v1075 = vpop.f32.mrb[0].mxu0
        %1076 = vmatprep.mubr.bf16.mxu0 0
        %1077 = vmatmul.mubr.bf16.gmra.mrb[0].mxu0 %v899
        %v1078 = vpop.f32.mrb[0].mxu0
        %v1079 = vadd.f32 %v372, %v1078
        %v1080 = vpop.f32.mrb[0].mxu0
        %v1081 = vpop.f32.mrb[0].mxu0
        %v1082 = vadd.f32 %v372, %v1081
        %v1083 = vpop.f32.mrb[0].mxu0
        %1084 = vmatprep.mubr.bf16.mxu0 0
        %1085 = vmatmul.mubr.bf16.gmra.mrb[0].mxu0 %v902
        %v1086 = vpop.f32.mrb[0].mxu0
        %v1087 = vadd.f32 %v372, %v1086
        %v1088 = vpop.f32.mrb[0].mxu0
        %v1089 = vpop.f32.mrb[0].mxu0
        %v1090 = vadd.f32 %v372, %v1089
        %v1091 = vpop.f32.mrb[0].mxu0
        %1092 = vmatprep.mubr.bf16.mxu0 0
        %1093 = vmatmul.mubr.bf16.gmra.mrb[0].mxu0 %v905
        %v1094 = vpop.f32.mrb[0].mxu0
        %v1095 = vadd.f32 %v372, %v1094
        %v1096 = vpop.f32.mrb[0].mxu0
        %v1097 = vpop.f32.mrb[0].mxu0
        %v1098 = vadd.f32 %v372, %v1097
        %v1099 = vpop.f32.mrb[0].mxu0
        %1100 = vmatprep.mubr.bf16.mxu0 0
        %1101 = vmatmul.mubr.bf16.gmra.mrb[0].mxu0 %v908
        %v1102 = vpop.f32.mrb[0].mxu0
        %v1103 = vadd.f32 %v372, %v1102
        %v1104 = vpop.f32.mrb[0].mxu0
        %v1105 = vpop.f32.mrb[0].mxu0
        %v1106 = vadd.f32 %v372, %v1105
        %v1107 = vpop.f32.mrb[0].mxu0
        %1108 = vmatprep.mubr.bf16.mxu0 0
        %1109 = vmatmul.mubr.bf16.gmra.mrb[0].mxu0 %v911
        %v1110 = vpop.f32.mrb[0].mxu0
        %v1111 = vadd.f32 %v372, %v1110
        %v1112 = vpop.f32.mrb[0].mxu0
        %v1113 = vpop.f32.mrb[0].mxu0
        %v1114 = vadd.f32 %v372, %v1113
        %v1115 = vpop.f32.mrb[0].mxu0
        %1116 = vmatprep.mubr.bf16.mxu0 0
        %1117 = vmatmul.mubr.bf16.gmra.mrb[0].mxu0 %v914
        %v1118 = vpop.f32.mrb[0].mxu0
        %v1119 = vadd.f32 %v372, %v1118
        %v1120 = vpop.f32.mrb[0].mxu0
        %v1121 = vpop.f32.mrb[0].mxu0
        %v1122 = vadd.f32 %v372, %v1121
        %v1123 = vpop.f32.mrb[0].mxu0
        %1124 = vmatprep.mubr.bf16.mxu0 0
        %1125 = vmatmul.mubr.bf16.gmra.mrb[0].mxu0 %v917
        %v1126 = vpop.f32.mrb[0].mxu0
        %v1127 = vadd.f32 %v372, %v1126
        %v1128 = vpop.f32.mrb[0].mxu0
        %v1129 = vpop.f32.mrb[0].mxu0
        %v1130 = vadd.f32 %v372, %v1129
        %v1131 = vpop.f32.mrb[0].mxu0
        %1132 = vmatprep.mubr.bf16.mxu0 0
        %1133 = vmatmul.mubr.bf16.gmra.mrb[0].mxu0 %v920
        %v1134 = vpop.f32.mrb[0].mxu0
        %v1135 = vadd.f32 %v372, %v1134
        %v1136 = vpop.f32.mrb[0].mxu0
        %v1137 = vpop.f32.mrb[0].mxu0
        %v1138 = vadd.f32 %v372, %v1137
        %v1139 = vpop.f32.mrb[0].mxu0
        %1140 = vmatprep.mubr.bf16.mxu0 0
        %1141 = vmatmul.mubr.bf16.gmra.mrb[0].mxu0 %v923
        %v1142 = vpop.f32.mrb[0].mxu0
        %v1143 = vadd.f32 %v372, %v1142
        %v1144 = vpop.f32.mrb[0].mxu0
        %v1145 = vpop.f32.mrb[0].mxu0
        %v1146 = vadd.f32 %v372, %v1145
        %v1147 = vpop.f32.mrb[0].mxu0
        %1148 = vmatprep.mubr.bf16.mxu0 0
        %1149 = vmatmul.mubr.bf16.gmra.mrb[0].mxu0 %v926
        %v1150 = vpop.f32.mrb[0].mxu0
        %v1151 = vadd.f32 %v372, %v1150
        %v1152 = vpop.f32.mrb[0].mxu0
        %v1153 = vpop.f32.mrb[0].mxu0
        %v1154 = vadd.f32 %v372, %v1153
        %v1155 = vpop.f32.mrb[0].mxu0
        %1156 = vmatprep.mubr.bf16.mxu0 0
        %1157 = vmatmul.mubr.bf16.gmra.mrb[0].mxu0 %v929
        %v1158 = vpop.f32.mrb[0].mxu0
        %v1159 = vadd.f32 %v372, %v1158
        %v1160 = vpop.f32.mrb[0].mxu0
        %v1161 = vpop.f32.mrb[0].mxu0
        %v1162 = vadd.f32 %v372, %v1161
        %v1163 = vpop.f32.mrb[0].mxu0
        %1164 = vmatprep.mubr.bf16.mxu0 0
        %1165 = vmatmul.mubr.bf16.gmra.mrb[0].mxu0 %v932
        %v1166 = vpop.f32.mrb[0].mxu0
        %v1167 = vadd.f32 %v372, %v1166
        %v1168 = vpop.f32.mrb[0].mxu0
        %v1169 = vpop.f32.mrb[0].mxu0
        %v1170 = vadd.f32 %v372, %v1169
        %v1171 = vpop.f32.mrb[0].mxu0
        %1172 = vmatprep.mubr.bf16.mxu0 0
        %1173 = vmatmul.mubr.bf16.gmra.mrb[0].mxu0 %v935
        %v1174 = vpop.f32.mrb[0].mxu0
        %v1175 = vadd.f32 %v372, %v1174
        %v1176 = vpop.f32.mrb[0].mxu0
        %v1177 = vpop.f32.mrb[0].mxu0
        %v1178 = vadd.f32 %v372, %v1177
        %v1179 = vpop.f32.mrb[0].mxu0
        %1180 = vmatprep.mubr.bf16.mxu0 0
        %1181 = vmatmul.mubr.bf16.gmra.mrb[0].mxu0 %v938
        %v1182 = vpop.f32.mrb[0].mxu0
        %v1183 = vadd.f32 %v372, %v1182
        %v1184 = vpop.f32.mrb[0].mxu0
        %v1185 = vpop.f32.mrb[0].mxu0
        %v1186 = vadd.f32 %v372, %v1185
        %v1187 = vpop.f32.mrb[0].mxu0
        %1188 = vmatprep.mubr.bf16.mxu0 0
        %1189 = vmatmul.mubr.bf16.gmra.mrb[0].mxu0 %v941
        %v1190 = vpop.f32.mrb[0].mxu0
        %v1191 = vadd.f32 %v372, %v1190
        %v1192 = vpop.f32.mrb[0].mxu0
        %v1193 = vpop.f32.mrb[0].mxu0
        %v1194 = vadd.f32 %v372, %v1193
        %v1195 = vpop.f32.mrb[0].mxu0
        %1196 = vmatprep.mubr.bf16.mxu0 0
        %1197 = vmatmul.mubr.bf16.gmra.mrb[0].mxu0 %v944
        %v1198 = vpop.f32.mrb[0].mxu0
        %v1199 = vadd.f32 %v372, %v1198
        %v1200 = vpop.f32.mrb[0].mxu0
        %v1201 = vpop.f32.mrb[0].mxu0
        %v1202 = vadd.f32 %v372, %v1201
        %v1203 = vpop.f32.mrb[0].mxu0
        %1204 = vmatprep.mubr.bf16.mxu0 0
        %1205 = vmatmul.mubr.bf16.gmra.mrb[0].mxu0 %v947
        %v1206 = vpop.f32.mrb[0].mxu0
        %v1207 = vadd.f32 %v372, %v1206
        %v1208 = vpop.f32.mrb[0].mxu0
        %v1209 = vpop.f32.mrb[0].mxu0
        %v1210 = vadd.f32 %v372, %v1209
        %v1211 = vpop.f32.mrb[0].mxu0
        %1212 = vmatprep.mubr.bf16.mxu0 0
        %1213 = vmatmul.mubr.bf16.gmra.mrb[0].mxu0 %v950
        %v1214 = vpop.f32.mrb[0].mxu0
        %v1215 = vadd.f32 %v372, %v1214
        %v1216 = vpop.f32.mrb[0].mxu0
        %v1217 = vpop.f32.mrb[0].mxu0
        %v1218 = vadd.f32 %v372, %v1217
        %v1219 = vpop.f32.mrb[0].mxu0
        %1220 = vmatprep.mubr.bf16.mxu0 0
        %1221 = vmatmul.mubr.bf16.gmra.mrb[0].mxu0 %v953
        %v1222 = vpop.f32.mrb[0].mxu0
        %v1223 = vadd.f32 %v372, %v1222
        %v1224 = vpop.f32.mrb[0].mxu0
        %v1225 = vpop.f32.mrb[0].mxu0
        %v1226 = vadd.f32 %v372, %v1225
        %v1227 = vpop.f32.mrb[0].mxu0
        %1228 = vmatprep.mubr.bf16.mxu0 0
        %1229 = vmatmul.mubr.bf16.gmra.mrb[0].mxu0 %v956
        %v1230 = vpop.f32.mrb[0].mxu0
        %v1231 = vadd.f32 %v372, %v1230
        %v1232 = vpop.f32.mrb[0].mxu0
        %v1233 = vpop.f32.mrb[0].mxu0
        %v1234 = vadd.f32 %v372, %v1233
        %v1235 = vpop.f32.mrb[0].mxu0
        %1236 = vmatprep.mubr.bf16.mxu0 0
        %1237 = vmatmul.mubr.bf16.gmra.mrb[0].mxu0 %v959
        %v1238 = vpop.f32.mrb[0].mxu0
        %v1239 = vadd.f32 %v372, %v1238
        %v1240 = vpop.f32.mrb[0].mxu0
        %v1241 = vpop.f32.mrb[0].mxu0
        %v1242 = vadd.f32 %v372, %v1241
        %v1243 = vpop.f32.mrb[0].mxu0
        %1244 = vmatprep.mubr.bf16.mxu0 0
        %1245 = vmatmul.mubr.bf16.gmra.mrb[0].mxu0 %v962
        %v1246 = vpop.f32.mrb[0].mxu0
        %v1247 = vadd.f32 %v372, %v1246
        %v1248 = vpop.f32.mrb[0].mxu0
        %v1249 = vpop.f32.mrb[0].mxu0
        %v1250 = vadd.f32 %v372, %v1249
        %v1251 = vpop.f32.mrb[0].mxu0
        %1252 = vdwg.mxu0
        %1317 = vrot.lane.b32.xlu0 %v999, 64
        %v1318 = vpop.permute.xlu0 %1317
        %1319 = vrot.lane.b32.xlu0 %v1002, 64
        %v1320 = vpop.permute.xlu0 %1319
        %1321 = vrot.lane.b32.xlu0 %v1007, 64
        %v1322 = vpop.permute.xlu0 %1321
        %1323 = vrot.lane.b32.xlu0 %v1010, 64
        %v1324 = vpop.permute.xlu0 %1323
        %1325 = vrot.lane.b32.xlu0 %v1015, 64
        %v1326 = vpop.permute.xlu0 %1325
        %1327 = vrot.lane.b32.xlu0 %v1018, 64
        %v1328 = vpop.permute.xlu0 %1327
        %1329 = vrot.lane.b32.xlu0 %v1023, 64
        %v1330 = vpop.permute.xlu0 %1329
        %1331 = vrot.lane.b32.xlu0 %v1026, 64
        %v1332 = vpop.permute.xlu0 %1331
        %1333 = vrot.lane.b32.xlu0 %v1031, 64
        %v1334 = vpop.permute.xlu0 %1333
        %1335 = vrot.lane.b32.xlu0 %v1034, 64
        %v1336 = vpop.permute.xlu0 %1335
        %1337 = vrot.lane.b32.xlu0 %v1039, 64
        %v1338 = vpop.permute.xlu0 %1337
        %1339 = vrot.lane.b32.xlu0 %v1042, 64
        %v1340 = vpop.permute.xlu0 %1339
        %1341 = vrot.lane.b32.xlu0 %v1047, 64
        %v1342 = vpop.permute.xlu0 %1341
        %1343 = vrot.lane.b32.xlu0 %v1050, 64
        %v1344 = vpop.permute.xlu0 %1343
        %1345 = vrot.lane.b32.xlu0 %v1055, 64
        %v1346 = vpop.permute.xlu0 %1345
        %1347 = vrot.lane.b32.xlu0 %v1058, 64
        %v1348 = vpop.permute.xlu0 %1347
        %1349 = vrot.lane.b32.xlu0 %v1063, 64
        %v1350 = vpop.permute.xlu0 %1349
        %1351 = vrot.lane.b32.xlu0 %v1066, 64
        %v1352 = vpop.permute.xlu0 %1351
        %1353 = vrot.lane.b32.xlu0 %v1071, 64
        %v1354 = vpop.permute.xlu0 %1353
        %1355 = vrot.lane.b32.xlu0 %v1074, 64
        %v1356 = vpop.permute.xlu0 %1355
        %1357 = vrot.lane.b32.xlu0 %v1079, 64
        %v1358 = vpop.permute.xlu0 %1357
        %1359 = vrot.lane.b32.xlu0 %v1082, 64
        %v1360 = vpop.permute.xlu0 %1359
        %1361 = vrot.lane.b32.xlu0 %v1087, 64
        %v1362 = vpop.permute.xlu0 %1361
        %1363 = vrot.lane.b32.xlu0 %v1090, 64
        %v1364 = vpop.permute.xlu0 %1363
        %1365 = vrot.lane.b32.xlu0 %v1095, 64
        %v1366 = vpop.permute.xlu0 %1365
        %1367 = vrot.lane.b32.xlu0 %v1098, 64
        %v1368 = vpop.permute.xlu0 %1367
        %1369 = vrot.lane.b32.xlu0 %v1103, 64
        %v1370 = vpop.permute.xlu0 %1369
        %1371 = vrot.lane.b32.xlu0 %v1106, 64
        %v1372 = vpop.permute.xlu0 %1371
        %1373 = vrot.lane.b32.xlu0 %v1111, 64
        %v1374 = vpop.permute.xlu0 %1373
        %1375 = vrot.lane.b32.xlu0 %v1114, 64
        %v1376 = vpop.permute.xlu0 %1375
        %1377 = vrot.lane.b32.xlu0 %v1119, 64
        %v1378 = vpop.permute.xlu0 %1377
        %1379 = vrot.lane.b32.xlu0 %v1122, 64
        %v1380 = vpop.permute.xlu0 %1379
        %1381 = vrot.lane.b32.xlu0 %v1127, 64
        %v1382 = vpop.permute.xlu0 %1381
        %1383 = vrot.lane.b32.xlu0 %v1130, 64
        %v1384 = vpop.permute.xlu0 %1383
        %1385 = vrot.lane.b32.xlu0 %v1135, 64
        %v1386 = vpop.permute.xlu0 %1385
        %1387 = vrot.lane.b32.xlu0 %v1138, 64
        %v1388 = vpop.permute.xlu0 %1387
        %1389 = vrot.lane.b32.xlu0 %v1143, 64
        %v1390 = vpop.permute.xlu0 %1389
        %1391 = vrot.lane.b32.xlu0 %v1146, 64
        %v1392 = vpop.permute.xlu0 %1391
        %1393 = vrot.lane.b32.xlu0 %v1151, 64
        %v1394 = vpop.permute.xlu0 %1393
        %1395 = vrot.lane.b32.xlu0 %v1154, 64
        %v1396 = vpop.permute.xlu0 %1395
        %1397 = vrot.lane.b32.xlu0 %v1159, 64
        %v1398 = vpop.permute.xlu0 %1397
        %1399 = vrot.lane.b32.xlu0 %v1162, 64
        %v1400 = vpop.permute.xlu0 %1399
        %1401 = vrot.lane.b32.xlu0 %v1167, 64
        %v1402 = vpop.permute.xlu0 %1401
        %1403 = vrot.lane.b32.xlu0 %v1170, 64
        %v1404 = vpop.permute.xlu0 %1403
        %1405 = vrot.lane.b32.xlu0 %v1175, 64
        %v1406 = vpop.permute.xlu0 %1405
        %1407 = vrot.lane.b32.xlu0 %v1178, 64
        %v1408 = vpop.permute.xlu0 %1407
        %1409 = vrot.lane.b32.xlu0 %v1183, 64
        %v1410 = vpop.permute.xlu0 %1409
        %1411 = vrot.lane.b32.xlu0 %v1186, 64
        %v1412 = vpop.permute.xlu0 %1411
        %1413 = vrot.lane.b32.xlu0 %v1191, 64
        %v1414 = vpop.permute.xlu0 %1413
        %1415 = vrot.lane.b32.xlu0 %v1194, 64
        %v1416 = vpop.permute.xlu0 %1415
        %1417 = vrot.lane.b32.xlu0 %v1199, 64
        %v1418 = vpop.permute.xlu0 %1417
        %1419 = vrot.lane.b32.xlu0 %v1202, 64
        %v1420 = vpop.permute.xlu0 %1419
        %1421 = vrot.lane.b32.xlu0 %v1207, 64
        %v1422 = vpop.permute.xlu0 %1421
        %1423 = vrot.lane.b32.xlu0 %v1210, 64
        %v1424 = vpop.permute.xlu0 %1423
        %1425 = vrot.lane.b32.xlu0 %v1215, 64
        %v1426 = vpop.permute.xlu0 %1425
        %1427 = vrot.lane.b32.xlu0 %v1218, 64
        %v1428 = vpop.permute.xlu0 %1427
        %1429 = vrot.lane.b32.xlu0 %v1223, 64
        %v1430 = vpop.permute.xlu0 %1429
        %1431 = vrot.lane.b32.xlu0 %v1226, 64
        %v1432 = vpop.permute.xlu0 %1431
        %1433 = vrot.lane.b32.xlu0 %v1231, 64
        %v1434 = vpop.permute.xlu0 %1433
        %1435 = vrot.lane.b32.xlu0 %v1234, 64
        %v1436 = vpop.permute.xlu0 %1435
        %1437 = vrot.lane.b32.xlu0 %v1239, 64
        %v1438 = vpop.permute.xlu0 %1437
        %1439 = vrot.lane.b32.xlu0 %v1242, 64
        %v1440 = vpop.permute.xlu0 %1439
        %1441 = vrot.lane.b32.xlu0 %v1247, 64
        %v1442 = vpop.permute.xlu0 %1441
        %1443 = vrot.lane.b32.xlu0 %v1250, 64
        %v1444 = vpop.permute.xlu0 %1443
        %vm1509 = vcmask 523264
        %v1510 = vsel %vm1509, %v518, %v1318
        %v1511 = vsel %vm1509, %v521, %v1320
        %v1512 = vsel %vm1509, %v526, %v1322
        %v1513 = vsel %vm1509, %v529, %v1324
        %v1514 = vsel %vm1509, %v534, %v1326
        %v1515 = vsel %vm1509, %v537, %v1328
        %v1516 = vsel %vm1509, %v542, %v1330
        %v1517 = vsel %vm1509, %v545, %v1332
        %v1518 = vsel %vm1509, %v550, %v1334
        %v1519 = vsel %vm1509, %v553, %v1336
        %v1520 = vsel %vm1509, %v558, %v1338
        %v1521 = vsel %vm1509, %v561, %v1340
        %v1522 = vsel %vm1509, %v566, %v1342
        %v1523 = vsel %vm1509, %v569, %v1344
        %v1524 = vsel %vm1509, %v574, %v1346
        %v1525 = vsel %vm1509, %v577, %v1348
        %v1526 = vsel %vm1509, %v582, %v1350
        %v1527 = vsel %vm1509, %v585, %v1352
        %v1528 = vsel %vm1509, %v590, %v1354
        %v1529 = vsel %vm1509, %v593, %v1356
        %v1530 = vsel %vm1509, %v598, %v1358
        %v1531 = vsel %vm1509, %v601, %v1360
        %v1532 = vsel %vm1509, %v606, %v1362
        %v1533 = vsel %vm1509, %v609, %v1364
        %v1534 = vsel %vm1509, %v614, %v1366
        %v1535 = vsel %vm1509, %v617, %v1368
        %v1536 = vsel %vm1509, %v622, %v1370
        %v1537 = vsel %vm1509, %v625, %v1372
        %v1538 = vsel %vm1509, %v630, %v1374
        %v1539 = vsel %vm1509, %v633, %v1376
        %v1540 = vsel %vm1509, %v638, %v1378
        %v1541 = vsel %vm1509, %v641, %v1380
        %v1542 = vsel %vm1509, %v646, %v1382
        %v1543 = vsel %vm1509, %v649, %v1384
        %v1544 = vsel %vm1509, %v654, %v1386
        %v1545 = vsel %vm1509, %v657, %v1388
        %v1546 = vsel %vm1509, %v662, %v1390
        %v1547 = vsel %vm1509, %v665, %v1392
        %v1548 = vsel %vm1509, %v670, %v1394
        %v1549 = vsel %vm1509, %v673, %v1396
        %v1550 = vsel %vm1509, %v678, %v1398
        %v1551 = vsel %vm1509, %v681, %v1400
        %v1552 = vsel %vm1509, %v686, %v1402
        %v1553 = vsel %vm1509, %v689, %v1404
        %v1554 = vsel %vm1509, %v694, %v1406
        %v1555 = vsel %vm1509, %v697, %v1408
        %v1556 = vsel %vm1509, %v702, %v1410
        %v1557 = vsel %vm1509, %v705, %v1412
        %v1558 = vsel %vm1509, %v710, %v1414
        %v1559 = vsel %vm1509, %v713, %v1416
        %v1560 = vsel %vm1509, %v718, %v1418
        %v1561 = vsel %vm1509, %v721, %v1420
        %v1562 = vsel %vm1509, %v726, %v1422
        %v1563 = vsel %vm1509, %v729, %v1424
        %v1564 = vsel %vm1509, %v734, %v1426
        %v1565 = vsel %vm1509, %v737, %v1428
        %v1566 = vsel %vm1509, %v742, %v1430
        %v1567 = vsel %vm1509, %v745, %v1432
        %v1568 = vsel %vm1509, %v750, %v1434
        %v1569 = vsel %vm1509, %v753, %v1436
        %v1570 = vsel %vm1509, %v758, %v1438
        %v1571 = vsel %vm1509, %v761, %v1440
        %v1572 = vsel %vm1509, %v766, %v1442
        %v1573 = vsel %vm1509, %v769, %v1444
        %v1574 = vld [vmem:[%s253] sm:$0xff]
        %v1575 = vld [vmem:[%s253 + $0x8] sm:$0xff]
        %v1576 = vld [vmem:[%s253 + $0x10] sm:$0xff]
        %v1577 = vld [vmem:[%s253 + $0x18] sm:$0xff]
        %v1578 = vld [vmem:[%s253 + $0x20] sm:$0xff]
        %v1579 = vld [vmem:[%s253 + $0x28] sm:$0xff]
        %v1580 = vld [vmem:[%s253 + $0x30] sm:$0xff]
        %v1581 = vld [vmem:[%s253 + $0x38] sm:$0xff]
        %v1582 = vld [vmem:[%s253 + $0x40] sm:$0xff]
        %v1583 = vld [vmem:[%s253 + $0x48] sm:$0xff]
        %v1584 = vld [vmem:[%s253 + $0x50] sm:$0xff]
        %v1585 = vld [vmem:[%s253 + $0x58] sm:$0xff]
        %v1586 = vld [vmem:[%s253 + $0x60] sm:$0xff]
        %v1587 = vld [vmem:[%s253 + $0x68] sm:$0xff]
        %v1588 = vld [vmem:[%s253 + $0x70] sm:$0xff]
        %v1589 = vld [vmem:[%s253 + $0x78] sm:$0xff]
        %v1590 = vld [vmem:[%s253 + $0x80] sm:$0xff]
        %v1591 = vld [vmem:[%s253 + $0x88] sm:$0xff]
        %v1592 = vld [vmem:[%s253 + $0x90] sm:$0xff]
        %v1593 = vld [vmem:[%s253 + $0x98] sm:$0xff]
        %v1594 = vld [vmem:[%s253 + $0xa0] sm:$0xff]
        %v1595 = vld [vmem:[%s253 + $0xa8] sm:$0xff]
        %v1596 = vld [vmem:[%s253 + $0xb0] sm:$0xff]
        %v1597 = vld [vmem:[%s253 + $0xb8] sm:$0xff]
        %v1598 = vld [vmem:[%s253 + $0xc0] sm:$0xff]
        %v1599 = vld [vmem:[%s253 + $0xc8] sm:$0xff]
        %v1600 = vld [vmem:[%s253 + $0xd0] sm:$0xff]
        %v1601 = vld [vmem:[%s253 + $0xd8] sm:$0xff]
        %v1602 = vld [vmem:[%s253 + $0xe0] sm:$0xff]
        %v1603 = vld [vmem:[%s253 + $0xe8] sm:$0xff]
        %v1604 = vld [vmem:[%s253 + $0xf0] sm:$0xff]
        %v1605 = vld [vmem:[%s253 + $0xf8] sm:$0xff]
        %1638 = vrot.lane.b32.xlu0 %v1574, 64
        %v1639 = vpop.permute.xlu0 %1638
        %1640 = vrot.lane.b32.xlu0 %v1575, 64
        %v1641 = vpop.permute.xlu0 %1640
        %1642 = vrot.lane.b32.xlu0 %v1576, 64
        %v1643 = vpop.permute.xlu0 %1642
        %1644 = vrot.lane.b32.xlu0 %v1577, 64
        %v1645 = vpop.permute.xlu0 %1644
        %1646 = vrot.lane.b32.xlu0 %v1578, 64
        %v1647 = vpop.permute.xlu0 %1646
        %1648 = vrot.lane.b32.xlu0 %v1579, 64
        %v1649 = vpop.permute.xlu0 %1648
        %1650 = vrot.lane.b32.xlu0 %v1580, 64
        %v1651 = vpop.permute.xlu0 %1650
        %1652 = vrot.lane.b32.xlu0 %v1581, 64
        %v1653 = vpop.permute.xlu0 %1652
        %1654 = vrot.lane.b32.xlu0 %v1582, 64
        %v1655 = vpop.permute.xlu0 %1654
        %1656 = vrot.lane.b32.xlu0 %v1583, 64
        %v1657 = vpop.permute.xlu0 %1656
        %1658 = vrot.lane.b32.xlu0 %v1584, 64
        %v1659 = vpop.permute.xlu0 %1658
        %1660 = vrot.lane.b32.xlu0 %v1585, 64
        %v1661 = vpop.permute.xlu0 %1660
        %1662 = vrot.lane.b32.xlu0 %v1586, 64
        %v1663 = vpop.permute.xlu0 %1662
        %1664 = vrot.lane.b32.xlu0 %v1587, 64
        %v1665 = vpop.permute.xlu0 %1664
        %1666 = vrot.lane.b32.xlu0 %v1588, 64
        %v1667 = vpop.permute.xlu0 %1666
        %1668 = vrot.lane.b32.xlu0 %v1589, 64
        %v1669 = vpop.permute.xlu0 %1668
        %1670 = vrot.lane.b32.xlu0 %v1590, 64
        %v1671 = vpop.permute.xlu0 %1670
        %1672 = vrot.lane.b32.xlu0 %v1591, 64
        %v1673 = vpop.permute.xlu0 %1672
        %1674 = vrot.lane.b32.xlu0 %v1592, 64
        %v1675 = vpop.permute.xlu0 %1674
        %1676 = vrot.lane.b32.xlu0 %v1593, 64
        %v1677 = vpop.permute.xlu0 %1676
        %1678 = vrot.lane.b32.xlu0 %v1594, 64
        %v1679 = vpop.permute.xlu0 %1678
        %1680 = vrot.lane.b32.xlu0 %v1595, 64
        %v1681 = vpop.permute.xlu0 %1680
        %1682 = vrot.lane.b32.xlu0 %v1596, 64
        %v1683 = vpop.permute.xlu0 %1682
        %1684 = vrot.lane.b32.xlu0 %v1597, 64
        %v1685 = vpop.permute.xlu0 %1684
        %1686 = vrot.lane.b32.xlu0 %v1598, 64
        %v1687 = vpop.permute.xlu0 %1686
        %1688 = vrot.lane.b32.xlu0 %v1599, 64
        %v1689 = vpop.permute.xlu0 %1688
        %1690 = vrot.lane.b32.xlu0 %v1600, 64
        %v1691 = vpop.permute.xlu0 %1690
        %1692 = vrot.lane.b32.xlu0 %v1601, 64
        %v1693 = vpop.permute.xlu0 %1692
        %1694 = vrot.lane.b32.xlu0 %v1602, 64
        %v1695 = vpop.permute.xlu0 %1694
        %1696 = vrot.lane.b32.xlu0 %v1603, 64
        %v1697 = vpop.permute.xlu0 %1696
        %1698 = vrot.lane.b32.xlu0 %v1604, 64
        %v1699 = vpop.permute.xlu0 %1698
        %1700 = vrot.lane.b32.xlu0 %v1605, 64
        %v1701 = vpop.permute.xlu0 %1700
        %v1734 = vsel %vm1509, %v1574, %v1639
        %v1735 = vsel %vm1509, %v1575, %v1641
        %v1736 = vsel %vm1509, %v1576, %v1643
        %v1737 = vsel %vm1509, %v1577, %v1645
        %v1738 = vsel %vm1509, %v1578, %v1647
        %v1739 = vsel %vm1509, %v1579, %v1649
        %v1740 = vsel %vm1509, %v1580, %v1651
        %v1741 = vsel %vm1509, %v1581, %v1653
        %v1742 = vsel %vm1509, %v1582, %v1655
        %v1743 = vsel %vm1509, %v1583, %v1657
        %v1744 = vsel %vm1509, %v1584, %v1659
        %v1745 = vsel %vm1509, %v1585, %v1661
        %v1746 = vsel %vm1509, %v1586, %v1663
        %v1747 = vsel %vm1509, %v1587, %v1665
        %v1748 = vsel %vm1509, %v1588, %v1667
        %v1749 = vsel %vm1509, %v1589, %v1669
        %v1750 = vsel %vm1509, %v1590, %v1671
        %v1751 = vsel %vm1509, %v1591, %v1673
        %v1752 = vsel %vm1509, %v1592, %v1675
        %v1753 = vsel %vm1509, %v1593, %v1677
        %v1754 = vsel %vm1509, %v1594, %v1679
        %v1755 = vsel %vm1509, %v1595, %v1681
        %v1756 = vsel %vm1509, %v1596, %v1683
        %v1757 = vsel %vm1509, %v1597, %v1685
        %v1758 = vsel %vm1509, %v1598, %v1687
        %v1759 = vsel %vm1509, %v1599, %v1689
        %v1760 = vsel %vm1509, %v1600, %v1691
        %v1761 = vsel %vm1509, %v1601, %v1693
        %v1762 = vsel %vm1509, %v1602, %v1695
        %v1763 = vsel %vm1509, %v1603, %v1697
        %v1764 = vsel %vm1509, %v1604, %v1699
        %v1765 = vsel %vm1509, %v1605, %v1701
        %v1766 = vadd.f32 %v1734, %v1510
        %v1767 = vadd.f32 %v1735, %v1511
        %v1768 = vadd.f32 %v1734, %v1512
        %v1769 = vadd.f32 %v1735, %v1513
        %v1770 = vadd.f32 %v1736, %v1514
        %v1771 = vadd.f32 %v1737, %v1515
        %v1772 = vadd.f32 %v1736, %v1516
        %v1773 = vadd.f32 %v1737, %v1517
        %v1774 = vadd.f32 %v1738, %v1518
        %v1775 = vadd.f32 %v1739, %v1519
        %v1776 = vadd.f32 %v1738, %v1520
        %v1777 = vadd.f32 %v1739, %v1521
        %v1778 = vadd.f32 %v1740, %v1522
        %v1779 = vadd.f32 %v1741, %v1523
        %v1780 = vadd.f32 %v1740, %v1524
        %v1781 = vadd.f32 %v1741, %v1525
        %v1782 = vadd.f32 %v1742, %v1526
        %v1783 = vadd.f32 %v1743, %v1527
        %v1784 = vadd.f32 %v1742, %v1528
        %v1785 = vadd.f32 %v1743, %v1529
        %v1786 = vadd.f32 %v1744, %v1530
        %v1787 = vadd.f32 %v1745, %v1531
        %v1788 = vadd.f32 %v1744, %v1532
        %v1789 = vadd.f32 %v1745, %v1533
        %v1790 = vadd.f32 %v1746, %v1534
        %v1791 = vadd.f32 %v1747, %v1535
        %v1792 = vadd.f32 %v1746, %v1536
        %v1793 = vadd.f32 %v1747, %v1537
        %v1794 = vadd.f32 %v1748, %v1538
        %v1795 = vadd.f32 %v1749, %v1539
        %v1796 = vadd.f32 %v1748, %v1540
        %v1797 = vadd.f32 %v1749, %v1541
        %v1798 = vadd.f32 %v1750, %v1542
        %v1799 = vadd.f32 %v1751, %v1543
        %v1800 = vadd.f32 %v1750, %v1544
        %v1801 = vadd.f32 %v1751, %v1545
        %v1802 = vadd.f32 %v1752, %v1546
        %v1803 = vadd.f32 %v1753, %v1547
        %v1804 = vadd.f32 %v1752, %v1548
        %v1805 = vadd.f32 %v1753, %v1549
        %v1806 = vadd.f32 %v1754, %v1550
        %v1807 = vadd.f32 %v1755, %v1551
        %v1808 = vadd.f32 %v1754, %v1552
        %v1809 = vadd.f32 %v1755, %v1553
        %v1810 = vadd.f32 %v1756, %v1554
        %v1811 = vadd.f32 %v1757, %v1555
        %v1812 = vadd.f32 %v1756, %v1556
        %v1813 = vadd.f32 %v1757, %v1557
        %v1814 = vadd.f32 %v1758, %v1558
        %v1815 = vadd.f32 %v1759, %v1559
        %v1816 = vadd.f32 %v1758, %v1560
        %v1817 = vadd.f32 %v1759, %v1561
        %v1818 = vadd.f32 %v1760, %v1562
        %v1819 = vadd.f32 %v1761, %v1563
        %v1820 = vadd.f32 %v1760, %v1564
        %v1821 = vadd.f32 %v1761, %v1565
        %v1822 = vadd.f32 %v1762, %v1566
        %v1823 = vadd.f32 %v1763, %v1567
        %v1824 = vadd.f32 %v1762, %v1568
        %v1825 = vadd.f32 %v1763, %v1569
        %v1826 = vadd.f32 %v1764, %v1570
        %v1827 = vadd.f32 %v1765, %v1571
        %v1828 = vadd.f32 %v1764, %v1572
        %v1829 = vadd.f32 %v1765, %v1573
        %1830 = vst [vmem:[%s243] sm:$0xff] %v1766
        %1831 = vst [vmem:[%s243 + $0x8] sm:$0xff] %v1767
        %1832 = vst [vmem:[%s243 + $0x10] sm:$0xff] %v1768
        %1833 = vst [vmem:[%s243 + $0x18] sm:$0xff] %v1769
        %1834 = vst [vmem:[%s243 + $0x20] sm:$0xff] %v1770
        %1835 = vst [vmem:[%s243 + $0x28] sm:$0xff] %v1771
        %1836 = vst [vmem:[%s243 + $0x30] sm:$0xff] %v1772
        %1837 = vst [vmem:[%s243 + $0x38] sm:$0xff] %v1773
        %1838 = vst [vmem:[%s243 + $0x40] sm:$0xff] %v1774
        %1839 = vst [vmem:[%s243 + $0x48] sm:$0xff] %v1775
        %1840 = vst [vmem:[%s243 + $0x50] sm:$0xff] %v1776
        %1841 = vst [vmem:[%s243 + $0x58] sm:$0xff] %v1777
        %1842 = vst [vmem:[%s243 + $0x60] sm:$0xff] %v1778
        %1843 = vst [vmem:[%s243 + $0x68] sm:$0xff] %v1779
        %1844 = vst [vmem:[%s243 + $0x70] sm:$0xff] %v1780
        %1845 = vst [vmem:[%s243 + $0x78] sm:$0xff] %v1781
        %1846 = vst [vmem:[%s243 + $0x80] sm:$0xff] %v1782
        %1847 = vst [vmem:[%s243 + $0x88] sm:$0xff] %v1783
        %1848 = vst [vmem:[%s243 + $0x90] sm:$0xff] %v1784
        %1849 = vst [vmem:[%s243 + $0x98] sm:$0xff] %v1785
        %1850 = vst [vmem:[%s243 + $0xa0] sm:$0xff] %v1786
        %1851 = vst [vmem:[%s243 + $0xa8] sm:$0xff] %v1787
        %1852 = vst [vmem:[%s243 + $0xb0] sm:$0xff] %v1788
        %1853 = vst [vmem:[%s243 + $0xb8] sm:$0xff] %v1789
        %1854 = vst [vmem:[%s243 + $0xc0] sm:$0xff] %v1790
        %1855 = vst [vmem:[%s243 + $0xc8] sm:$0xff] %v1791
        %1856 = vst [vmem:[%s243 + $0xd0] sm:$0xff] %v1792
        %1857 = vst [vmem:[%s243 + $0xd8] sm:$0xff] %v1793
        %1858 = vst [vmem:[%s243 + $0xe0] sm:$0xff] %v1794
        %1859 = vst [vmem:[%s243 + $0xe8] sm:$0xff] %v1795
        %1860 = vst [vmem:[%s243 + $0xf0] sm:$0xff] %v1796
        %1861 = vst [vmem:[%s243 + $0xf8] sm:$0xff] %v1797
        %1862 = vst [vmem:[%s243 + $0x100] sm:$0xff] %v1798
        %1863 = vst [vmem:[%s243 + $0x108] sm:$0xff] %v1799
        %1864 = vst [vmem:[%s243 + $0x110] sm:$0xff] %v1800
        %1865 = vst [vmem:[%s243 + $0x118] sm:$0xff] %v1801
        %1866 = vst [vmem:[%s243 + $0x120] sm:$0xff] %v1802
        %1867 = vst [vmem:[%s243 + $0x128] sm:$0xff] %v1803
        %1868 = vst [vmem:[%s243 + $0x130] sm:$0xff] %v1804
        %1869 = vst [vmem:[%s243 + $0x138] sm:$0xff] %v1805
        %1870 = vst [vmem:[%s243 + $0x140] sm:$0xff] %v1806
        %1871 = vst [vmem:[%s243 + $0x148] sm:$0xff] %v1807
        %1872 = vst [vmem:[%s243 + $0x150] sm:$0xff] %v1808
        %1873 = vst [vmem:[%s243 + $0x158] sm:$0xff] %v1809
        %1874 = vst [vmem:[%s243 + $0x160] sm:$0xff] %v1810
        %1875 = vst [vmem:[%s243 + $0x168] sm:$0xff] %v1811
        %1876 = vst [vmem:[%s243 + $0x170] sm:$0xff] %v1812
        %1877 = vst [vmem:[%s243 + $0x178] sm:$0xff] %v1813
        %1878 = vst [vmem:[%s243 + $0x180] sm:$0xff] %v1814
        %1879 = vst [vmem:[%s243 + $0x188] sm:$0xff] %v1815
        %1880 = vst [vmem:[%s243 + $0x190] sm:$0xff] %v1816
        %1881 = vst [vmem:[%s243 + $0x198] sm:$0xff] %v1817
        %1882 = vst [vmem:[%s243 + $0x1a0] sm:$0xff] %v1818
        %1883 = vst [vmem:[%s243 + $0x1a8] sm:$0xff] %v1819
        %1884 = vst [vmem:[%s243 + $0x1b0] sm:$0xff] %v1820
        %1885 = vst [vmem:[%s243 + $0x1b8] sm:$0xff] %v1821
        %1886 = vst [vmem:[%s243 + $0x1c0] sm:$0xff] %v1822
        %1887 = vst [vmem:[%s243 + $0x1c8] sm:$0xff] %v1823
        %1888 = vst [vmem:[%s243 + $0x1d0] sm:$0xff] %v1824
        %1889 = vst [vmem:[%s243 + $0x1d8] sm:$0xff] %v1825
        %1890 = vst [vmem:[%s243 + $0x1e0] sm:$0xff] %v1826
        %1891 = vst [vmem:[%s243 + $0x1e8] sm:$0xff] %v1827
        %1892 = vst [vmem:[%s243 + $0x1f0] sm:$0xff] %v1828
        %1893 = vst [vmem:[%s243 + $0x1f8] sm:$0xff] %v1829
        %s1894 = sand.u32 %s138, 1
        %s1895 = scalar_lea.sflag [#allocation3], %s1894
        %s1896 = sand.u32 %s138, 1
        %s1897 = smul.addr %s1896, 512
        %s1898 = scalar_lea.vmem [#allocation2], %s1897
        // Predicated region
        $region37: #{tpu_custom_call.1} parent=35 // pred_check
          %p1899 = pneg %p148
        $region38: #{tpu_custom_call.1} parent=35 // pred_check_branch
          %1901 = sbr.rel (%p1899) target = $region40
        $region39: #{tpu_custom_call.1} parent=35 // pred_region
          %s1902 = smul.u32 64, %s23
          %s1904 = ssub.s32 8192, 8192
          %1905 = vsyncadd %s1895, %s1904
          %s1906 = smul.addr %s22, 64
          %s1907 = sadd.s32 %s1902, %s1906
          %s1908 = smul.addr %s1907, 128
          %s1909 = scalar_lea.hbm %s4, %s1908
          %s1910 = sshll.u32 %s1898, 4
          %s1911 = int_to_ptr.vmem [resolvable:$true] %s1910
          %1916 = dma.vmem_to_hbm [thread:$0]  %s1911, 8192, %s1909, %s1895, 128, 128, 8
        $region40: #{tpu_custom_call.1} parent=35 // pred_fallthru
          _
      $region36: #{tpu_custom_call.1} parent=5 // pred_fallthru
        _
      %p1917 = scmp.le.s32.totalorder 2, %s13
      // Predicated region
      $region41: #{tpu_custom_call.1} parent=5 // pred_check
        %p1918 = pneg %p1917
      $region42: #{tpu_custom_call.1} parent=5 // pred_check_branch
        %1920 = sbr.rel (%p1918) target = $region44
      $region43: #{tpu_custom_call.1} parent=5 // pred_region
        %s1921 = ssub.s32 %s13, 2
        // Predicated region
        $region45: #{tpu_custom_call.1} parent=43 // pred_check
          %p1922 = pneg %p154
        $region46: #{tpu_custom_call.1} parent=43 // pred_check_branch
          %1924 = sbr.rel (%p1922) target = $region48
        $region47: #{tpu_custom_call.1} parent=43 // pred_region
          %s1925 = sand.u32 %s139, 1
          %s1926 = scalar_lea.sflag [#allocation3], %s1925
          %s1927 = sand.u32 %s139, 1
          %s1928 = smul.addr %s1927, 512
          %s1929 = scalar_lea.vmem [#allocation2], %s1928
          %1930 = dma.done %s1926, 8192
        $region48: #{tpu_custom_call.1} parent=43 // pred_fallthru
          _
      $region44: #{tpu_custom_call.1} parent=5 // pred_fallthru
        _
    $region6: #{tpu_custom_call.1} parent=1 // loop_footer
      %s17 = sadd.s32 1, %s13
    $region7: #{tpu_custom_call.1} parent=1 // loop_footer_branch
      %12 = sbr.rel target = $region3
    $region8: #{tpu_custom_call.1} parent=1 // loop_exit
      _
    %1931 = vsyncpa [#allocation3], 1
    %s1932 = scalar_lea.sflag [#allocation3], 1
    %1933 = vsyncpa %s1932, 1

// kernel: tpu_custom_call.1
$region0: #{tpu_custom_call.1}
  #allocation0 [shape = 'u32[]', space=smem, size = 0x4, offset = 0x4, fixed_abs, tag = 'smem constant byte address 0x4 - core index']
  #allocation1 [shape = 'u32[144,128]{1,0:T(1,128)}', space=vmem, size = 0x12000, scoped, tag = 'internal scratch']
  %s0 = inlined_call_operand.vmem [shape: f32[2,16,16,64], index: 0, kind: input, shape index: {}]
  %s1 = inlined_call_operand.vmem [shape: f32[2,512,64], index: 1, kind: input, shape index: {}]
  %s2 = inlined_call_operand.vmem [shape: bf16[32,64], index: 2, kind: input, shape index: {}]
  %s3 = inlined_call_operand.vmem [shape: f32[1,64], index: 3, kind: input, shape index: {}]
  %s4 = inlined_call_operand.hbm [shape: f32[2,512,128], index: 4, kind: output, shape index: {}]
  %s5 = sld [smem:[#allocation0]]
  $region49: #{tpu_custom_call.1} parent=0
    _
  %s7 = ssub.s32 1, %s5
  %s8 = scalar_select 0, %s7, %s5
  $region1: #{tpu_custom_call.1} parent=0
    #allocation2 [shape = 'u8[524288]{0}', space=vmem, size = 0x80000, scoped, tag = 'output window, operand 0']
    #allocation3 [shape = 's32[2]{0}', space=sflag, size = 0x8, scoped, tag = 'scoped memory for tpu_custom_call.1']
    %9 = vsyncpa [#allocation3], 0
    %s10 = scalar_lea.sflag [#allocation3], 1
    %11 = vsyncpa %s10, 0
    loop: start=0, step=1, limit=4
    $region2: #{tpu_custom_call.1} parent=1 // loop_pre_header
      _
    $region3: #{tpu_custom_call.1} parent=1 // loop_header
      %s13 = sphi 0, %s17
      %p14 = scmp.ge.s32.totalorder %s13, 4
      %s20 = sphi 0, %s32
      %s21 = sphi 0, %s28
      %s22 = sphi 0, %s20
      %s23 = sphi 0, %s21
      %s24 = sphi 0, %s22
      %s25 = sphi 0, %s23
      %s37 = sphi 0, %s39
      %s40 = sphi 0, %s37
      %s41 = sphi 0, %s40
      %s57 = sphi 0, %s41
      %s65 = sphi 0, %s67
      %s68 = sphi 0, %s65
      %s69 = sphi 0, %s68
      %s85 = sphi 0, %s69
      %s89 = sphi 0, %s89
      %s91 = sphi 0, %s89
      %s92 = sphi 0, %s91
      %s106 = sphi 0, %s92
      %s110 = sphi 0, %s110
      %s112 = sphi 0, %s110
      %s113 = sphi 0, %s112
      %s127 = sphi 0, %s113
      %s135 = sphi 0, %s137
      %s138 = sphi 0, %s135
      %s139 = sphi 0, %s138
      %s155 = sphi 0, %s139
    $region4: #{tpu_custom_call.1} parent=1 // loop_header_branch
      %16 = sbr.rel (%p14) target = $region8
    $region5: #{tpu_custom_call.1} parent=1 // loop_body
      %s18 = ssub.s32 %s13, 1
      %s19 = ssub.s32 %s13, 2
      %s26 = sadd.s32 1, %s21
      %p27 = scmp.ge.s32.totalorder %s26, 1
      %s28 = scalar_select %p27, 0, %s26
      %s29 = sadd.s32 1, %s20
      %s30 = scalar_select %p27, %s29, %s20
      %p31 = scmp.ge.s32.totalorder %s30, 2
      %s32 = scalar_select %p31, 0, %s30
      %s33 = ssub.s32 %s20, %s32
      %s34 = ssub.s32 %s21, %s28
      %s35 = sor.u32 %s33, %s34
      %p36 = scmp.eq.s32.totalorder %s35, 0
      %s38 = sadd.s32 %s37, 1
      %s39 = scalar_select %p36, %s37, %s38
      %p42 = pneg %p36
      %p43 = scmp.eq.s32.totalorder %s13, 1
      %p44 = por %p42, %p43
      %p45 = scmp.ne.s32.totalorder %s37, %s40
      %p46 = scmp.eq.s32.totalorder %s13, 0
      %p47 = por %p45, %p46
      %p48 = scmp.ne.s32.totalorder %s37, %s40
      %p49 = scmp.eq.s32.totalorder %s18, 1
      %p50 = por %p48, %p49
      %p51 = scmp.ne.s32.totalorder %s40, %s41
      %p52 = scmp.eq.s32.totalorder %s18, 0
      %p53 = por %p51, %p52
      %p54 = scmp.ne.s32.totalorder %s40, %s41
      %p55 = scmp.eq.s32.totalorder %s19, 1
      %p56 = por %p54, %p55
      %p58 = scmp.ne.s32.totalorder %s41, %s57
      %p59 = scmp.eq.s32.totalorder %s19, 0
      %p60 = por %p58, %p59
      %s61 = ssub.s32 %s20, %s32
      %s62 = ssub.s32 %s21, %s28
      %s63 = sor.u32 %s61, %s62
      %p64 = scmp.eq.s32.totalorder %s63, 0
      %s66 = sadd.s32 %s65, 1
      %s67 = scalar_select %p64, %s65, %s66
      %p70 = pneg %p64
      %p71 = scmp.eq.s32.totalorder %s13, 1
      %p72 = por %p70, %p71
      %p73 = scmp.ne.s32.totalorder %s65, %s68
      %p74 = scmp.eq.s32.totalorder %s13, 0
      %p75 = por %p73, %p74
      %p76 = scmp.ne.s32.totalorder %s65, %s68
      %p77 = scmp.eq.s32.totalorder %s18, 1
      %p78 = por %p76, %p77
      %p79 = scmp.ne.s32.totalorder %s68, %s69
      %p80 = scmp.eq.s32.totalorder %s18, 0
      %p81 = por %p79, %p80
      %p82 = scmp.ne.s32.totalorder %s68, %s69
      %p83 = scmp.eq.s32.totalorder %s19, 1
      %p84 = por %p82, %p83
      %p86 = scmp.ne.s32.totalorder %s69, %s85
      %p87 = scmp.eq.s32.totalorder %s19, 0
      %p88 = por %p86, %p87
      %s90 = sadd.s32 %s89, 1
      %p93 = scmp.eq.s32.totalorder %s13, 1
      %p94 = scmp.ne.s32.totalorder %s89, %s91
      %p95 = scmp.eq.s32.totalorder %s13, 0
      %p96 = por %p94, %p95
      %p97 = scmp.ne.s32.totalorder %s89, %s91
      %p98 = scmp.eq.s32.totalorder %s18, 1
      %p99 = por %p97, %p98
      %p100 = scmp.ne.s32.totalorder %s91, %s92
      %p101 = scmp.eq.s32.totalorder %s18, 0
      %p102 = por %p100, %p101
      %p103 = scmp.ne.s32.totalorder %s91, %s92
      %p104 = scmp.eq.s32.totalorder %s19, 1
      %p105 = por %p103, %p104
      %p107 = scmp.ne.s32.totalorder %s92, %s106
      %p108 = scmp.eq.s32.totalorder %s19, 0
      %p109 = por %p107, %p108
      %s111 = sadd.s32 %s110, 1
      %p114 = scmp.eq.s32.totalorder %s13, 1
      %p115 = scmp.ne.s32.totalorder %s110, %s112
      %p116 = scmp.eq.s32.totalorder %s13, 0
      %p117 = por %p115, %p116
      %p118 = scmp.ne.s32.totalorder %s110, %s112
      %p119 = scmp.eq.s32.totalorder %s18, 1
      %p120 = por %p118, %p119
      %p121 = scmp.ne.s32.totalorder %s112, %s113
      %p122 = scmp.eq.s32.totalorder %s18, 0
      %p123 = por %p121, %p122
      %p124 = scmp.ne.s32.totalorder %s112, %s113
      %p125 = scmp.eq.s32.totalorder %s19, 1
      %p126 = por %p124, %p125
      %p128 = scmp.ne.s32.totalorder %s113, %s127
      %p129 = scmp.eq.s32.totalorder %s19, 0
      %p130 = por %p128, %p129
      %s131 = ssub.s32 %s20, %s32
      %s132 = ssub.s32 %s21, %s28
      %s133 = sor.u32 %s131, %s132
      %p134 = scmp.eq.s32.totalorder %s133, 0
      %s136 = sadd.s32 %s135, 1
      %s137 = scalar_select %p134, %s135, %s136
      %p140 = pneg %p134
      %p141 = scmp.eq.s32.totalorder %s13, 1
      %p142 = por %p140, %p141
      %p143 = scmp.ne.s32.totalorder %s135, %s138
      %p144 = scmp.eq.s32.totalorder %s13, 0
      %p145 = por %p143, %p144
      %p146 = scmp.ne.s32.totalorder %s135, %s138
      %p147 = scmp.eq.s32.totalorder %s18, 1
      %p148 = por %p146, %p147
      %p149 = scmp.ne.s32.totalorder %s138, %s139
      %p150 = scmp.eq.s32.totalorder %s18, 0
      %p151 = por %p149, %p150
      %p152 = scmp.ne.s32.totalorder %s138, %s139
      %p153 = scmp.eq.s32.totalorder %s19, 1
      %p154 = por %p152, %p153
      %p156 = scmp.ne.s32.totalorder %s139, %s155
      %p157 = scmp.eq.s32.totalorder %s19, 0
      %p158 = por %p156, %p157
      %p159 = scmp.le.s32.totalorder 1, %s13
      %p160 = scmp.lt.s32.totalorder %s13, 3
      %p161 = pnand %p159, %p160
      %p162 = pneg %p161
      // Predicated region
      $region9: #{tpu_custom_call.1} parent=5 // pred_check
        _
      $region10: #{tpu_custom_call.1} parent=5 // pred_check_branch
        %164 = sbr.rel (%p161) target = $region12
      $region11: #{tpu_custom_call.1} parent=5 // pred_region
        %s165 = ssub.s32 %s13, 1
        // Predicated region
        $region13: #{tpu_custom_call.1} parent=11 // pred_check
          %p166 = pneg %p102
        $region14: #{tpu_custom_call.1} parent=11 // pred_check_branch
          %168 = sbr.rel (%p166) target = $region16
        $region15: #{tpu_custom_call.1} parent=11 // pred_region
          _
        $region16: #{tpu_custom_call.1} parent=11 // pred_fallthru
          _
        // Predicated region
        $region17: #{tpu_custom_call.1} parent=11 // pred_check
          %p169 = pneg %p123
        $region18: #{tpu_custom_call.1} parent=11 // pred_check_branch
          %171 = sbr.rel (%p169) target = $region20
        $region19: #{tpu_custom_call.1} parent=11 // pred_region
          _
        $region20: #{tpu_custom_call.1} parent=11 // pred_fallthru
          _
      $region12: #{tpu_custom_call.1} parent=5 // pred_fallthru
        _
      %p172 = scmp.lt.s32.totalorder %s13, 2
      // Predicated region
      $region21: #{tpu_custom_call.1} parent=5 // pred_check
        %p173 = pneg %p172
      $region22: #{tpu_custom_call.1} parent=5 // pred_check_branch
        %175 = sbr.rel (%p173) target = $region24
      $region23: #{tpu_custom_call.1} parent=5 // pred_region
        // Predicated region
        $region25: #{tpu_custom_call.1} parent=23 // pred_check
          %p176 = pneg %p47
        $region26: #{tpu_custom_call.1} parent=23 // pred_check_branch
          %178 = sbr.rel (%p176) target = $region28
        $region27: #{tpu_custom_call.1} parent=23 // pred_region
          %s179 = smul.u32 16, %s21
          %p180 = scmp.lt.s32.totalorder %s20, 1
          %s181 = scalar_select %p180, %s20, 1
          %p182 = scmp.lt.s32.totalorder %s179, 15
          %s183 = scalar_select %p182, %s179, 15
          %s184 = smul.addr %s183, 2
          %s185 = smul.addr %s181, 32
          %s186 = sadd.s32 %s184, %s185
          %s187 = smul.addr %s186, 8
          %s188 = scalar_lea.vmem %s0, %s187
          %s189 = smul.u32 16, %s21
        $region28: #{tpu_custom_call.1} parent=23 // pred_fallthru
          _
        // Predicated region
        $region29: #{tpu_custom_call.1} parent=23 // pred_check
          %p190 = pneg %p75
        $region30: #{tpu_custom_call.1} parent=23 // pred_check_branch
          %192 = sbr.rel (%p190) target = $region32
        $region31: #{tpu_custom_call.1} parent=23 // pred_region
          %s193 = smul.u32 64, %s21
          %p194 = scmp.lt.s32.totalorder %s20, 1
          %s195 = scalar_select %p194, %s20, 1
          %p196 = scmp.lt.s32.totalorder %s193, 63
          %s197 = scalar_select %p196, %s193, 63
          %s198 = smul.addr %s195, 64
          %s199 = sadd.s32 %s197, %s198
          %s200 = smul.addr %s199, 8
          %s201 = scalar_lea.vmem %s1, %s200
          %s202 = smul.u32 64, %s21
        $region32: #{tpu_custom_call.1} parent=23 // pred_fallthru
          _
      $region24: #{tpu_custom_call.1} parent=5 // pred_fallthru
        _
      %p203 = scmp.le.s32.totalorder 1, %s13
      %p204 = scmp.lt.s32.totalorder %s13, 3
      %p205 = pnand %p203, %p204
      %p206 = pneg %p205
      // Predicated region
      $region33: #{tpu_custom_call.1} parent=5 // pred_check
        _
      $region34: #{tpu_custom_call.1} parent=5 // pred_check_branch
        %208 = sbr.rel (%p205) target = $region36
      $region35: #{tpu_custom_call.1} parent=5 // pred_region
        %s209 = ssub.s32 %s13, 1
        %s210 = smul.u32 16, %s23
        %p211 = scmp.lt.s32.totalorder %s22, 1
        %s212 = scalar_select %p211, %s22, 1
        %p213 = scmp.lt.s32.totalorder %s210, 15
        %s214 = scalar_select %p213, %s210, 15
        %s215 = smul.addr %s214, 2
        %s216 = smul.addr %s212, 32
        %s217 = sadd.s32 %s215, %s216
        %s218 = smul.addr %s217, 8
        %s219 = scalar_lea.vmem %s0, %s218
        %p220 = pneg %p53
        %p221 = pneg %p50
        %s222 = smul.u32 64, %s23
        %p223 = scmp.lt.s32.totalorder %s22, 1
        %s224 = scalar_select %p223, %s22, 1
        %p225 = scmp.lt.s32.totalorder %s222, 63
        %s226 = scalar_select %p225, %s222, 63
        %s227 = smul.addr %s224, 64
        %s228 = sadd.s32 %s226, %s227
        %s229 = smul.addr %s228, 8
        %s230 = scalar_lea.vmem %s1, %s229
        %p231 = pneg %p81
        %p232 = pneg %p78
        %p233 = pneg %p102
        %p234 = pneg %p99
        %p235 = pneg %p123
        %p236 = pneg %p120
        %p237 = pneg %p151
        %p238 = pneg %p148
        %s239 = sand.u32 %s138, 1
        %s240 = scalar_lea.sflag [#allocation3], %s239
        %s241 = sand.u32 %s138, 1
        %s242 = smul.addr %s241, 512
        %s243 = scalar_lea.vmem [#allocation2], %s242
        %s244 = smul.u32 16, %s23
        %p245 = scmp.lt.s32.totalorder %s22, 1
        %s246 = scalar_select %p245, %s22, 1
        %p247 = scmp.lt.s32.totalorder %s244, 15
        %s248 = scalar_select %p247, %s244, 15
        %s249 = smul.addr %s248, 2
        %s250 = smul.addr %s246, 32
        %s251 = sadd.s32 %s249, %s250
        %s252 = smul.addr %s251, 8
        %s253 = scalar_lea.vmem %s0, %s252
        %s254 = smul.u32 16, %s23
        %s255 = smul.u32 64, %s23
        %p256 = scmp.lt.s32.totalorder %s22, 1
        %s257 = scalar_select %p256, %s22, 1
        %p258 = scmp.lt.s32.totalorder %s255, 63
        %s259 = scalar_select %p258, %s255, 63
        %s260 = smul.addr %s257, 64
        %s261 = sadd.s32 %s259, %s260
        %s262 = smul.addr %s261, 8
        %s263 = scalar_lea.vmem %s1, %s262
        %s264 = smul.u32 64, %s23
        %s265 = smul.u32 64, %s23
        %v267 = vld [vmem:[%s263] sm:$0xff]
        %v268 = vld [vmem:[%s263 + $0x8] sm:$0xff]
        %v269 = vld [vmem:[%s263 + $0x10] sm:$0xff]
        %v270 = vld [vmem:[%s263 + $0x18] sm:$0xff]
        %v271 = vld [vmem:[%s263 + $0x20] sm:$0xff]
        %v272 = vld [vmem:[%s263 + $0x28] sm:$0xff]
        %v273 = vld [vmem:[%s263 + $0x30] sm:$0xff]
        %v274 = vld [vmem:[%s263 + $0x38] sm:$0xff]
        %v275 = vld [vmem:[%s263 + $0x40] sm:$0xff]
        %v276 = vld [vmem:[%s263 + $0x48] sm:$0xff]
        %v277 = vld [vmem:[%s263 + $0x50] sm:$0xff]
        %v278 = vld [vmem:[%s263 + $0x58] sm:$0xff]
        %v279 = vld [vmem:[%s263 + $0x60] sm:$0xff]
        %v280 = vld [vmem:[%s263 + $0x68] sm:$0xff]
        %v281 = vld [vmem:[%s263 + $0x70] sm:$0xff]
        %v282 = vld [vmem:[%s263 + $0x78] sm:$0xff]
        %v283 = vld [vmem:[%s263 + $0x80] sm:$0xff]
        %v284 = vld [vmem:[%s263 + $0x88] sm:$0xff]
        %v285 = vld [vmem:[%s263 + $0x90] sm:$0xff]
        %v286 = vld [vmem:[%s263 + $0x98] sm:$0xff]
        %v287 = vld [vmem:[%s263 + $0xa0] sm:$0xff]
        %v288 = vld [vmem:[%s263 + $0xa8] sm:$0xff]
        %v289 = vld [vmem:[%s263 + $0xb0] sm:$0xff]
        %v290 = vld [vmem:[%s263 + $0xb8] sm:$0xff]
        %v291 = vld [vmem:[%s263 + $0xc0] sm:$0xff]
        %v292 = vld [vmem:[%s263 + $0xc8] sm:$0xff]
        %v293 = vld [vmem:[%s263 + $0xd0] sm:$0xff]
        %v294 = vld [vmem:[%s263 + $0xd8] sm:$0xff]
        %v295 = vld [vmem:[%s263 + $0xe0] sm:$0xff]
        %v296 = vld [vmem:[%s263 + $0xe8] sm:$0xff]
        %v297 = vld [vmem:[%s263 + $0xf0] sm:$0xff]
        %v298 = vld [vmem:[%s263 + $0xf8] sm:$0xff]
        %v299 = vld [vmem:[%s263 + $0x100] sm:$0xff]
        %v300 = vld [vmem:[%s263 + $0x108] sm:$0xff]
        %v301 = vld [vmem:[%s263 + $0x110] sm:$0xff]
        %v302 = vld [vmem:[%s263 + $0x118] sm:$0xff]
        %v303 = vld [vmem:[%s263 + $0x120] sm:$0xff]
        %v304 = vld [vmem:[%s263 + $0x128] sm:$0xff]
        %v305 = vld [vmem:[%s263 + $0x130] sm:$0xff]
        %v306 = vld [vmem:[%s263 + $0x138] sm:$0xff]
        %v307 = vld [vmem:[%s263 + $0x140] sm:$0xff]
        %v308 = vld [vmem:[%s263 + $0x148] sm:$0xff]
        %v309 = vld [vmem:[%s263 + $0x150] sm:$0xff]
        %v310 = vld [vmem:[%s263 + $0x158] sm:$0xff]
        %v311 = vld [vmem:[%s263 + $0x160] sm:$0xff]
        %v312 = vld [vmem:[%s263 + $0x168] sm:$0xff]
        %v313 = vld [vmem:[%s263 + $0x170] sm:$0xff]
        %v314 = vld [vmem:[%s263 + $0x178] sm:$0xff]
        %v315 = vld [vmem:[%s263 + $0x180] sm:$0xff]
        %v316 = vld [vmem:[%s263 + $0x188] sm:$0xff]
        %v317 = vld [vmem:[%s263 + $0x190] sm:$0xff]
        %v318 = vld [vmem:[%s263 + $0x198] sm:$0xff]
        %v319 = vld [vmem:[%s263 + $0x1a0] sm:$0xff]
        %v320 = vld [vmem:[%s263 + $0x1a8] sm:$0xff]
        %v321 = vld [vmem:[%s263 + $0x1b0] sm:$0xff]
        %v322 = vld [vmem:[%s263 + $0x1b8] sm:$0xff]
        %v323 = vld [vmem:[%s263 + $0x1c0] sm:$0xff]
        %v324 = vld [vmem:[%s263 + $0x1c8] sm:$0xff]
        %v325 = vld [vmem:[%s263 + $0x1d0] sm:$0xff]
        %v326 = vld [vmem:[%s263 + $0x1d8] sm:$0xff]
        %v327 = vld [vmem:[%s263 + $0x1e0] sm:$0xff]
        %v328 = vld [vmem:[%s263 + $0x1e8] sm:$0xff]
        %v329 = vld [vmem:[%s263 + $0x1f0] sm:$0xff]
        %v330 = vld [vmem:[%s263 + $0x1f8] sm:$0xff]
        %v331 = vld [vmem:[%s2] sm:$0xf]
        %v332 = vld [vmem:[%s2 + $0x4] sm:$0xf]
        %v333 = vld [vmem:[%s2 + $0x8] sm:$0xf]
        %v334 = vld [vmem:[%s2 + $0xc] sm:$0xf]
        %v335 = vpack.c.bf16 %v268, %v267
        %v336 = vpack.c.bf16 %v270, %v269
        %v337 = vpack.c.bf16 %v272, %v271
        %v338 = vpack.c.bf16 %v274, %v273
        %v339 = vpack.c.bf16 %v276, %v275
        %v340 = vpack.c.bf16 %v278, %v277
        %v341 = vpack.c.bf16 %v280, %v279
        %v342 = vpack.c.bf16 %v282, %v281
        %v343 = vpack.c.bf16 %v284, %v283
        %v344 = vpack.c.bf16 %v286, %v285
        %v345 = vpack.c.bf16 %v288, %v287
        %v346 = vpack.c.bf16 %v290, %v289
        %v347 = vpack.c.bf16 %v292, %v291
        %v348 = vpack.c.bf16 %v294, %v293
        %v349 = vpack.c.bf16 %v296, %v295
        %v350 = vpack.c.bf16 %v298, %v297
        %v351 = vpack.c.bf16 %v300, %v299
        %v352 = vpack.c.bf16 %v302, %v301
        %v353 = vpack.c.bf16 %v304, %v303
        %v354 = vpack.c.bf16 %v306, %v305
        %v355 = vpack.c.bf16 %v308, %v307
        %v356 = vpack.c.bf16 %v310, %v309
        %v357 = vpack.c.bf16 %v312, %v311
        %v358 = vpack.c.bf16 %v314, %v313
        %v359 = vpack.c.bf16 %v316, %v315
        %v360 = vpack.c.bf16 %v318, %v317
        %v361 = vpack.c.bf16 %v320, %v319
        %v362 = vpack.c.bf16 %v322, %v321
        %v363 = vpack.c.bf16 %v324, %v323
        %v364 = vpack.c.bf16 %v326, %v325
        %v365 = vpack.c.bf16 %v328, %v327
        %v366 = vpack.c.bf16 %v330, %v329
        %v367 = vld [vmem:[%s3] sm:$0x1]
        %v369 = vlaneseq
        %v370 = vshrl.u32 %v369, 7
        %v371 = vsub.s32 0, %v370
        %v372 = vrot.slane %v367, %v371
        %v378 = vunpack.c.l.b16 %v331
        %v379 = vunpack.c.l.b16 %v332
        %v380 = vunpack.c.l.b16 %v333
        %v381 = vunpack.c.l.b16 %v334
        %v382 = vpack.c.b16 %v379, %v378
        %v383 = vpack.c.b16 %v381, %v380
        %vm386 = vcmask 261120
        %v388 = vsel %vm386, %v335, 0
        %v391 = vsel %vm386, %v336, 0
        %v394 = vsel %vm386, %v337, 0
        %v397 = vsel %vm386, %v338, 0
        %v400 = vsel %vm386, %v339, 0
        %v403 = vsel %vm386, %v340, 0
        %v406 = vsel %vm386, %v341, 0
        %v409 = vsel %vm386, %v342, 0
        %v412 = vsel %vm386, %v343, 0
        %v415 = vsel %vm386, %v344, 0
        %v418 = vsel %vm386, %v345, 0
        %v421 = vsel %vm386, %v346, 0
        %v424 = vsel %vm386, %v347, 0
        %v427 = vsel %vm386, %v348, 0
        %v430 = vsel %vm386, %v349, 0
        %v433 = vsel %vm386, %v350, 0
        %v436 = vsel %vm386, %v351, 0
        %v439 = vsel %vm386, %v352, 0
        %v442 = vsel %vm386, %v353, 0
        %v445 = vsel %vm386, %v354, 0
        %v448 = vsel %vm386, %v355, 0
        %v451 = vsel %vm386, %v356, 0
        %v454 = vsel %vm386, %v357, 0
        %v457 = vsel %vm386, %v358, 0
        %v460 = vsel %vm386, %v359, 0
        %v463 = vsel %vm386, %v360, 0
        %v466 = vsel %vm386, %v361, 0
        %v469 = vsel %vm386, %v362, 0
        %v472 = vsel %vm386, %v363, 0
        %v475 = vsel %vm386, %v364, 0
        %v478 = vsel %vm386, %v365, 0
        %v481 = vsel %vm386, %v366, 0
        %483 = vmatprep.subr.bf16.mxu0 0
        %484 = vmatpush1.bf16.msra.mxu0 %v382
        %485 = vmatprep.subr.bf16.mxu0 0
        %486 = vmatpush1.bf16.msra.mxu0 %v383
        %487 = vmatprep.subr.bf16.mxu0 0
        %488 = vmatpush1.bf16.msra.mxu0 0
        %489 = vmatprep.subr.bf16.mxu0 0
        %490 = vmatpush1.bf16.msra.mxu0 0
        %491 = vmatprep.subr.bf16.mxu0 0
        %492 = vmatpush1.bf16.msra.mxu0 0
        %493 = vmatprep.subr.bf16.mxu0 0
        %494 = vmatpush1.bf16.msra.mxu0 0
        %495 = vmatprep.subr.bf16.mxu0 0
        %496 = vmatpush1.bf16.msra.mxu0 0
        %497 = vmatprep.subr.bf16.mxu0 0
        %498 = vmatpush1.bf16.msra.mxu0 0
        %499 = vmatprep.subr.bf16.mxu0 0
        %500 = vmatpush1.bf16.msra.mxu0 0
        %501 = vmatprep.subr.bf16.mxu0 0
        %502 = vmatpush1.bf16.msra.mxu0 0
        %503 = vmatprep.subr.bf16.mxu0 0
        %504 = vmatpush1.bf16.msra.mxu0 0
        %505 = vmatprep.subr.bf16.mxu0 0
        %506 = vmatpush1.bf16.msra.mxu0 0
        %507 = vmatprep.subr.bf16.mxu0 0
        %508 = vmatpush1.bf16.msra.mxu0 0
        %509 = vmatprep.subr.bf16.mxu0 0
        %510 = vmatpush1.bf16.msra.mxu0 0
        %511 = vmatprep.subr.bf16.mxu0 0
        %512 = vmatpush1.bf16.msra.mxu0 0
        %513 = vmatprep.subr.bf16.mxu0 0
        %514 = vmatpush1.bf16.msra.mxu0 0
        %515 = vmatprep.mubr.bf16.mxu0 0
        %516 = vmatmul.mubr.bf16.gmra.mrb[0].mxu0 %v388
        %v517 = vpop.f32.mrb[0].mxu0
        %v518 = vadd.f32 %v372, %v517
        %v519 = vpop.f32.mrb[0].mxu0
        %v520 = vpop.f32.mrb[0].mxu0
        %v521 = vadd.f32 %v372, %v520
        %v522 = vpop.f32.mrb[0].mxu0
        %523 = vmatprep.mubr.bf16.mxu0 0
        %524 = vmatmul.mubr.bf16.gmra.mrb[0].mxu0 %v391
        %v525 = vpop.f32.mrb[0].mxu0
        %v526 = vadd.f32 %v372, %v525
        %v527 = vpop.f32.mrb[0].mxu0
        %v528 = vpop.f32.mrb[0].mxu0
        %v529 = vadd.f32 %v372, %v528
        %v530 = vpop.f32.mrb[0].mxu0
        %531 = vmatprep.mubr.bf16.mxu0 0
        %532 = vmatmul.mubr.bf16.gmra.mrb[0].mxu0 %v394
        %v533 = vpop.f32.mrb[0].mxu0
        %v534 = vadd.f32 %v372, %v533
        %v535 = vpop.f32.mrb[0].mxu0
        %v536 = vpop.f32.mrb[0].mxu0
        %v537 = vadd.f32 %v372, %v536
        %v538 = vpop.f32.mrb[0].mxu0
        %539 = vmatprep.mubr.bf16.mxu0 0
        %540 = vmatmul.mubr.bf16.gmra.mrb[0].mxu0 %v397
        %v541 = vpop.f32.mrb[0].mxu0
        %v542 = vadd.f32 %v372, %v541
        %v543 = vpop.f32.mrb[0].mxu0
        %v544 = vpop.f32.mrb[0].mxu0
        %v545 = vadd.f32 %v372, %v544
        %v546 = vpop.f32.mrb[0].mxu0
        %547 = vmatprep.mubr.bf16.mxu0 0
        %548 = vmatmul.mubr.bf16.gmra.mrb[0].mxu0 %v400
        %v549 = vpop.f32.mrb[0].mxu0
        %v550 = vadd.f32 %v372, %v549
        %v551 = vpop.f32.mrb[0].mxu0
        %v552 = vpop.f32.mrb[0].mxu0
        %v553 = vadd.f32 %v372, %v552
        %v554 = vpop.f32.mrb[0].mxu0
        %555 = vmatprep.mubr.bf16.mxu0 0
        %556 = vmatmul.mubr.bf16.gmra.mrb[0].mxu0 %v403
        %v557 = vpop.f32.mrb[0].mxu0
        %v558 = vadd.f32 %v372, %v557
        %v559 = vpop.f32.mrb[0].mxu0
        %v560 = vpop.f32.mrb[0].mxu0
        %v561 = vadd.f32 %v372, %v560
        %v562 = vpop.f32.mrb[0].mxu0
        %563 = vmatprep.mubr.bf16.mxu0 0
        %564 = vmatmul.mubr.bf16.gmra.mrb[0].mxu0 %v406
        %v565 = vpop.f32.mrb[0].mxu0
        %v566 = vadd.f32 %v372, %v565
        %v567 = vpop.f32.mrb[0].mxu0
        %v568 = vpop.f32.mrb[0].mxu0
        %v569 = vadd.f32 %v372, %v568
        %v570 = vpop.f32.mrb[0].mxu0
        %571 = vmatprep.mubr.bf16.mxu0 0
        %572 = vmatmul.mubr.bf16.gmra.mrb[0].mxu0 %v409
        %v573 = vpop.f32.mrb[0].mxu0
        %v574 = vadd.f32 %v372, %v573
        %v575 = vpop.f32.mrb[0].mxu0
        %v576 = vpop.f32.mrb[0].mxu0
        %v577 = vadd.f32 %v372, %v576
        %v578 = vpop.f32.mrb[0].mxu0
        %579 = vmatprep.mubr.bf16.mxu0 0
        %580 = vmatmul.mubr.bf16.gmra.mrb[0].mxu0 %v412
        %v581 = vpop.f32.mrb[0].mxu0
        %v582 = vadd.f32 %v372, %v581
        %v583 = vpop.f32.mrb[0].mxu0
        %v584 = vpop.f32.mrb[0].mxu0
        %v585 = vadd.f32 %v372, %v584
        %v586 = vpop.f32.mrb[0].mxu0
        %587 = vmatprep.mubr.bf16.mxu0 0
        %588 = vmatmul.mubr.bf16.gmra.mrb[0].mxu0 %v415
        %v589 = vpop.f32.mrb[0].mxu0
        %v590 = vadd.f32 %v372, %v589
        %v591 = vpop.f32.mrb[0].mxu0
        %v592 = vpop.f32.mrb[0].mxu0
        %v593 = vadd.f32 %v372, %v592
        %v594 = vpop.f32.mrb[0].mxu0
        %595 = vmatprep.mubr.bf16.mxu0 0
        %596 = vmatmul.mubr.bf16.gmra.mrb[0].mxu0 %v418
        %v597 = vpop.f32.mrb[0].mxu0
        %v598 = vadd.f32 %v372, %v597
        %v599 = vpop.f32.mrb[0].mxu0
        %v600 = vpop.f32.mrb[0].mxu0
        %v601 = vadd.f32 %v372, %v600
        %v602 = vpop.f32.mrb[0].mxu0
        %603 = vmatprep.mubr.bf16.mxu0 0
        %604 = vmatmul.mubr.bf16.gmra.mrb[0].mxu0 %v421
        %v605 = vpop.f32.mrb[0].mxu0
        %v606 = vadd.f32 %v372, %v605
        %v607 = vpop.f32.mrb[0].mxu0
        %v608 = vpop.f32.mrb[0].mxu0
        %v609 = vadd.f32 %v372, %v608
        %v610 = vpop.f32.mrb[0].mxu0
        %611 = vmatprep.mubr.bf16.mxu0 0
        %612 = vmatmul.mubr.bf16.gmra.mrb[0].mxu0 %v424
        %v613 = vpop.f32.mrb[0].mxu0
        %v614 = vadd.f32 %v372, %v613
        %v615 = vpop.f32.mrb[0].mxu0
        %v616 = vpop.f32.mrb[0].mxu0
        %v617 = vadd.f32 %v372, %v616
        %v618 = vpop.f32.mrb[0].mxu0
        %619 = vmatprep.mubr.bf16.mxu0 0
        %620 = vmatmul.mubr.bf16.gmra.mrb[0].mxu0 %v427
        %v621 = vpop.f32.mrb[0].mxu0
        %v622 = vadd.f32 %v372, %v621
        %v623 = vpop.f32.mrb[0].mxu0
        %v624 = vpop.f32.mrb[0].mxu0
        %v625 = vadd.f32 %v372, %v624
        %v626 = vpop.f32.mrb[0].mxu0
        %627 = vmatprep.mubr.bf16.mxu0 0
        %628 = vmatmul.mubr.bf16.gmra.mrb[0].mxu0 %v430
        %v629 = vpop.f32.mrb[0].mxu0
        %v630 = vadd.f32 %v372, %v629
        %v631 = vpop.f32.mrb[0].mxu0
        %v632 = vpop.f32.mrb[0].mxu0
        %v633 = vadd.f32 %v372, %v632
        %v634 = vpop.f32.mrb[0].mxu0
        %635 = vmatprep.mubr.bf16.mxu0 0
        %636 = vmatmul.mubr.bf16.gmra.mrb[0].mxu0 %v433
        %v637 = vpop.f32.mrb[0].mxu0
        %v638 = vadd.f32 %v372, %v637
        %v639 = vpop.f32.mrb[0].mxu0
        %v640 = vpop.f32.mrb[0].mxu0
        %v641 = vadd.f32 %v372, %v640
        %v642 = vpop.f32.mrb[0].mxu0
        %643 = vmatprep.mubr.bf16.mxu0 0
        %644 = vmatmul.mubr.bf16.gmra.mrb[0].mxu0 %v436
        %v645 = vpop.f32.mrb[0].mxu0
        %v646 = vadd.f32 %v372, %v645
        %v647 = vpop.f32.mrb[0].mxu0
        %v648 = vpop.f32.mrb[0].mxu0
        %v649 = vadd.f32 %v372, %v648
        %v650 = vpop.f32.mrb[0].mxu0
        %651 = vmatprep.mubr.bf16.mxu0 0
        %652 = vmatmul.mubr.bf16.gmra.mrb[0].mxu0 %v439
        %v653 = vpop.f32.mrb[0].mxu0
        %v654 = vadd.f32 %v372, %v653
        %v655 = vpop.f32.mrb[0].mxu0
        %v656 = vpop.f32.mrb[0].mxu0
        %v657 = vadd.f32 %v372, %v656
        %v658 = vpop.f32.mrb[0].mxu0
        %659 = vmatprep.mubr.bf16.mxu0 0
        %660 = vmatmul.mubr.bf16.gmra.mrb[0].mxu0 %v442
        %v661 = vpop.f32.mrb[0].mxu0
        %v662 = vadd.f32 %v372, %v661
        %v663 = vpop.f32.mrb[0].mxu0
        %v664 = vpop.f32.mrb[0].mxu0
        %v665 = vadd.f32 %v372, %v664
        %v666 = vpop.f32.mrb[0].mxu0
        %667 = vmatprep.mubr.bf16.mxu0 0
        %668 = vmatmul.mubr.bf16.gmra.mrb[0].mxu0 %v445
        %v669 = vpop.f32.mrb[0].mxu0
        %v670 = vadd.f32 %v372, %v669
        %v671 = vpop.f32.mrb[0].mxu0
        %v672 = vpop.f32.mrb[0].mxu0
        %v673 = vadd.f32 %v372, %v672
        %v674 = vpop.f32.mrb[0].mxu0
        %675 = vmatprep.mubr.bf16.mxu0 0
        %676 = vmatmul.mubr.bf16.gmra.mrb[0].mxu0 %v448
        %v677 = vpop.f32.mrb[0].mxu0
        %v678 = vadd.f32 %v372, %v677
        %v679 = vpop.f32.mrb[0].mxu0
        %v680 = vpop.f32.mrb[0].mxu0
        %v681 = vadd.f32 %v372, %v680
        %v682 = vpop.f32.mrb[0].mxu0
        %683 = vmatprep.mubr.bf16.mxu0 0
        %684 = vmatmul.mubr.bf16.gmra.mrb[0].mxu0 %v451
        %v685 = vpop.f32.mrb[0].mxu0
        %v686 = vadd.f32 %v372, %v685
        %v687 = vpop.f32.mrb[0].mxu0
        %v688 = vpop.f32.mrb[0].mxu0
        %v689 = vadd.f32 %v372, %v688
        %v690 = vpop.f32.mrb[0].mxu0
        %691 = vmatprep.mubr.bf16.mxu0 0
        %692 = vmatmul.mubr.bf16.gmra.mrb[0].mxu0 %v454
        %v693 = vpop.f32.mrb[0].mxu0
        %v694 = vadd.f32 %v372, %v693
        %v695 = vpop.f32.mrb[0].mxu0
        %v696 = vpop.f32.mrb[0].mxu0
        %v697 = vadd.f32 %v372, %v696
        %v698 = vpop.f32.mrb[0].mxu0
        %699 = vmatprep.mubr.bf16.mxu0 0
        %700 = vmatmul.mubr.bf16.gmra.mrb[0].mxu0 %v457
        %v701 = vpop.f32.mrb[0].mxu0
        %v702 = vadd.f32 %v372, %v701
        %v703 = vpop.f32.mrb[0].mxu0
        %v704 = vpop.f32.mrb[0].mxu0
        %v705 = vadd.f32 %v372, %v704
        %v706 = vpop.f32.mrb[0].mxu0
        %707 = vmatprep.mubr.bf16.mxu0 0
        %708 = vmatmul.mubr.bf16.gmra.mrb[0].mxu0 %v460
        %v709 = vpop.f32.mrb[0].mxu0
        %v710 = vadd.f32 %v372, %v709
        %v711 = vpop.f32.mrb[0].mxu0
        %v712 = vpop.f32.mrb[0].mxu0
        %v713 = vadd.f32 %v372, %v712
        %v714 = vpop.f32.mrb[0].mxu0
        %715 = vmatprep.mubr.bf16.mxu0 0
        %716 = vmatmul.mubr.bf16.gmra.mrb[0].mxu0 %v463
        %v717 = vpop.f32.mrb[0].mxu0
        %v718 = vadd.f32 %v372, %v717
        %v719 = vpop.f32.mrb[0].mxu0
        %v720 = vpop.f32.mrb[0].mxu0
        %v721 = vadd.f32 %v372, %v720
        %v722 = vpop.f32.mrb[0].mxu0
        %723 = vmatprep.mubr.bf16.mxu0 0
        %724 = vmatmul.mubr.bf16.gmra.mrb[0].mxu0 %v466
        %v725 = vpop.f32.mrb[0].mxu0
        %v726 = vadd.f32 %v372, %v725
        %v727 = vpop.f32.mrb[0].mxu0
        %v728 = vpop.f32.mrb[0].mxu0
        %v729 = vadd.f32 %v372, %v728
        %v730 = vpop.f32.mrb[0].mxu0
        %731 = vmatprep.mubr.bf16.mxu0 0
        %732 = vmatmul.mubr.bf16.gmra.mrb[0].mxu0 %v469
        %v733 = vpop.f32.mrb[0].mxu0
        %v734 = vadd.f32 %v372, %v733
        %v735 = vpop.f32.mrb[0].mxu0
        %v736 = vpop.f32.mrb[0].mxu0
        %v737 = vadd.f32 %v372, %v736
        %v738 = vpop.f32.mrb[0].mxu0
        %739 = vmatprep.mubr.bf16.mxu0 0
        %740 = vmatmul.mubr.bf16.gmra.mrb[0].mxu0 %v472
        %v741 = vpop.f32.mrb[0].mxu0
        %v742 = vadd.f32 %v372, %v741
        %v743 = vpop.f32.mrb[0].mxu0
        %v744 = vpop.f32.mrb[0].mxu0
        %v745 = vadd.f32 %v372, %v744
        %v746 = vpop.f32.mrb[0].mxu0
        %747 = vmatprep.mubr.bf16.mxu0 0
        %748 = vmatmul.mubr.bf16.gmra.mrb[0].mxu0 %v475
        %v749 = vpop.f32.mrb[0].mxu0
        %v750 = vadd.f32 %v372, %v749
        %v751 = vpop.f32.mrb[0].mxu0
        %v752 = vpop.f32.mrb[0].mxu0
        %v753 = vadd.f32 %v372, %v752
        %v754 = vpop.f32.mrb[0].mxu0
        %755 = vmatprep.mubr.bf16.mxu0 0
        %756 = vmatmul.mubr.bf16.gmra.mrb[0].mxu0 %v478
        %v757 = vpop.f32.mrb[0].mxu0
        %v758 = vadd.f32 %v372, %v757
        %v759 = vpop.f32.mrb[0].mxu0
        %v760 = vpop.f32.mrb[0].mxu0
        %v761 = vadd.f32 %v372, %v760
        %v762 = vpop.f32.mrb[0].mxu0
        %763 = vmatprep.mubr.bf16.mxu0 0
        %764 = vmatmul.mubr.bf16.gmra.mrb[0].mxu0 %v481
        %v765 = vpop.f32.mrb[0].mxu0
        %v766 = vadd.f32 %v372, %v765
        %v767 = vpop.f32.mrb[0].mxu0
        %v768 = vpop.f32.mrb[0].mxu0
        %v769 = vadd.f32 %v372, %v768
        %v770 = vpop.f32.mrb[0].mxu0
        %771 = vdwg.mxu0
        %804 = vrot.lane.b32.xlu0 %v335, 96
        %v805 = vpop.permute.xlu0 %804
        %806 = vrot.lane.b32.xlu0 %v336, 96
        %v807 = vpop.permute.xlu0 %806
        %808 = vrot.lane.b32.xlu0 %v337, 96
        %v809 = vpop.permute.xlu0 %808
        %810 = vrot.lane.b32.xlu0 %v338, 96
        %v811 = vpop.permute.xlu0 %810
        %812 = vrot.lane.b32.xlu0 %v339, 96
        %v813 = vpop.permute.xlu0 %812
        %814 = vrot.lane.b32.xlu0 %v340, 96
        %v815 = vpop.permute.xlu0 %814
        %816 = vrot.lane.b32.xlu0 %v341, 96
        %v817 = vpop.permute.xlu0 %816
        %818 = vrot.lane.b32.xlu0 %v342, 96
        %v819 = vpop.permute.xlu0 %818
        %820 = vrot.lane.b32.xlu0 %v343, 96
        %v821 = vpop.permute.xlu0 %820
        %822 = vrot.lane.b32.xlu0 %v344, 96
        %v823 = vpop.permute.xlu0 %822
        %824 = vrot.lane.b32.xlu0 %v345, 96
        %v825 = vpop.permute.xlu0 %824
        %826 = vrot.lane.b32.xlu0 %v346, 96
        %v827 = vpop.permute.xlu0 %826
        %828 = vrot.lane.b32.xlu0 %v347, 96
        %v829 = vpop.permute.xlu0 %828
        %830 = vrot.lane.b32.xlu0 %v348, 96
        %v831 = vpop.permute.xlu0 %830
        %832 = vrot.lane.b32.xlu0 %v349, 96
        %v833 = vpop.permute.xlu0 %832
        %834 = vrot.lane.b32.xlu0 %v350, 96
        %v835 = vpop.permute.xlu0 %834
        %836 = vrot.lane.b32.xlu0 %v351, 96
        %v837 = vpop.permute.xlu0 %836
        %838 = vrot.lane.b32.xlu0 %v352, 96
        %v839 = vpop.permute.xlu0 %838
        %840 = vrot.lane.b32.xlu0 %v353, 96
        %v841 = vpop.permute.xlu0 %840
        %842 = vrot.lane.b32.xlu0 %v354, 96
        %v843 = vpop.permute.xlu0 %842
        %844 = vrot.lane.b32.xlu0 %v355, 96
        %v845 = vpop.permute.xlu0 %844
        %846 = vrot.lane.b32.xlu0 %v356, 96
        %v847 = vpop.permute.xlu0 %846
        %848 = vrot.lane.b32.xlu0 %v357, 96
        %v849 = vpop.permute.xlu0 %848
        %850 = vrot.lane.b32.xlu0 %v358, 96
        %v851 = vpop.permute.xlu0 %850
        %852 = vrot.lane.b32.xlu0 %v359, 96
        %v853 = vpop.permute.xlu0 %852
        %854 = vrot.lane.b32.xlu0 %v360, 96
        %v855 = vpop.permute.xlu0 %854
        %856 = vrot.lane.b32.xlu0 %v361, 96
        %v857 = vpop.permute.xlu0 %856
        %858 = vrot.lane.b32.xlu0 %v362, 96
        %v859 = vpop.permute.xlu0 %858
        %860 = vrot.lane.b32.xlu0 %v363, 96
        %v861 = vpop.permute.xlu0 %860
        %862 = vrot.lane.b32.xlu0 %v364, 96
        %v863 = vpop.permute.xlu0 %862
        %864 = vrot.lane.b32.xlu0 %v365, 96
        %v865 = vpop.permute.xlu0 %864
        %866 = vrot.lane.b32.xlu0 %v366, 96
        %v867 = vpop.permute.xlu0 %866
        %v869 = vsel %vm386, %v805, 0
        %v872 = vsel %vm386, %v807, 0
        %v875 = vsel %vm386, %v809, 0
        %v878 = vsel %vm386, %v811, 0
        %v881 = vsel %vm386, %v813, 0
        %v884 = vsel %vm386, %v815, 0
        %v887 = vsel %vm386, %v817, 0
        %v890 = vsel %vm386, %v819, 0
        %v893 = vsel %vm386, %v821, 0
        %v896 = vsel %vm386, %v823, 0
        %v899 = vsel %vm386, %v825, 0
        %v902 = vsel %vm386, %v827, 0
        %v905 = vsel %vm386, %v829, 0
        %v908 = vsel %vm386, %v831, 0
        %v911 = vsel %vm386, %v833, 0
        %v914 = vsel %vm386, %v835, 0
        %v917 = vsel %vm386, %v837, 0
        %v920 = vsel %vm386, %v839, 0
        %v923 = vsel %vm386, %v841, 0
        %v926 = vsel %vm386, %v843, 0
        %v929 = vsel %vm386, %v845, 0
        %v932 = vsel %vm386, %v847, 0
        %v935 = vsel %vm386, %v849, 0
        %v938 = vsel %vm386, %v851, 0
        %v941 = vsel %vm386, %v853, 0
        %v944 = vsel %vm386, %v855, 0
        %v947 = vsel %vm386, %v857, 0
        %v950 = vsel %vm386, %v859, 0
        %v953 = vsel %vm386, %v861, 0
        %v956 = vsel %vm386, %v863, 0
        %v959 = vsel %vm386, %v865, 0
        %v962 = vsel %vm386, %v867, 0
        %964 = vmatprep.subr.bf16.mxu0 0
        %965 = vmatpush1.bf16.msra.mxu0 %v382
        %966 = vmatprep.subr.bf16.mxu0 0
        %967 = vmatpush1.bf16.msra.mxu0 %v383
        %968 = vmatprep.subr.bf16.mxu0 0
        %969 = vmatpush1.bf16.msra.mxu0 0
        %970 = vmatprep.subr.bf16.mxu0 0
        %971 = vmatpush1.bf16.msra.mxu0 0
        %972 = vmatprep.subr.bf16.mxu0 0
        %973 = vmatpush1.bf16.msra.mxu0 0
        %974 = vmatprep.subr.bf16.mxu0 0
        %975 = vmatpush1.bf16.msra.mxu0 0
        %976 = vmatprep.subr.bf16.mxu0 0
        %977 = vmatpush1.bf16.msra.mxu0 0
        %978 = vmatprep.subr.bf16.mxu0 0
        %979 = vmatpush1.bf16.msra.mxu0 0
        %980 = vmatprep.subr.bf16.mxu0 0
        %981 = vmatpush1.bf16.msra.mxu0 0
        %982 = vmatprep.subr.bf16.mxu0 0
        %983 = vmatpush1.bf16.msra.mxu0 0
        %984 = vmatprep.subr.bf16.mxu0 0
        %985 = vmatpush1.bf16.msra.mxu0 0
        %986 = vmatprep.subr.bf16.mxu0 0
        %987 = vmatpush1.bf16.msra.mxu0 0
        %988 = vmatprep.subr.bf16.mxu0 0
        %989 = vmatpush1.bf16.msra.mxu0 0
        %990 = vmatprep.subr.bf16.mxu0 0
        %991 = vmatpush1.bf16.msra.mxu0 0
        %992 = vmatprep.subr.bf16.mxu0 0
        %993 = vmatpush1.bf16.msra.mxu0 0
        %994 = vmatprep.subr.bf16.mxu0 0
        %995 = vmatpush1.bf16.msra.mxu0 0
        %996 = vmatprep.mubr.bf16.mxu0 0
        %997 = vmatmul.mubr.bf16.gmra.mrb[0].mxu0 %v869
        %v998 = vpop.f32.mrb[0].mxu0
        %v999 = vadd.f32 %v372, %v998
        %v1000 = vpop.f32.mrb[0].mxu0
        %v1001 = vpop.f32.mrb[0].mxu0
        %v1002 = vadd.f32 %v372, %v1001
        %v1003 = vpop.f32.mrb[0].mxu0
        %1004 = vmatprep.mubr.bf16.mxu0 0
        %1005 = vmatmul.mubr.bf16.gmra.mrb[0].mxu0 %v872
        %v1006 = vpop.f32.mrb[0].mxu0
        %v1007 = vadd.f32 %v372, %v1006
        %v1008 = vpop.f32.mrb[0].mxu0
        %v1009 = vpop.f32.mrb[0].mxu0
        %v1010 = vadd.f32 %v372, %v1009
        %v1011 = vpop.f32.mrb[0].mxu0
        %1012 = vmatprep.mubr.bf16.mxu0 0
        %1013 = vmatmul.mubr.bf16.gmra.mrb[0].mxu0 %v875
        %v1014 = vpop.f32.mrb[0].mxu0
        %v1015 = vadd.f32 %v372, %v1014
        %v1016 = vpop.f32.mrb[0].mxu0
        %v1017 = vpop.f32.mrb[0].mxu0
        %v1018 = vadd.f32 %v372, %v1017
        %v1019 = vpop.f32.mrb[0].mxu0
        %1020 = vmatprep.mubr.bf16.mxu0 0
        %1021 = vmatmul.mubr.bf16.gmra.mrb[0].mxu0 %v878
        %v1022 = vpop.f32.mrb[0].mxu0
        %v1023 = vadd.f32 %v372, %v1022
        %v1024 = vpop.f32.mrb[0].mxu0
        %v1025 = vpop.f32.mrb[0].mxu0
        %v1026 = vadd.f32 %v372, %v1025
        %v1027 = vpop.f32.mrb[0].mxu0
        %1028 = vmatprep.mubr.bf16.mxu0 0
        %1029 = vmatmul.mubr.bf16.gmra.mrb[0].mxu0 %v881
        %v1030 = vpop.f32.mrb[0].mxu0
        %v1031 = vadd.f32 %v372, %v1030
        %v1032 = vpop.f32.mrb[0].mxu0
        %v1033 = vpop.f32.mrb[0].mxu0
        %v1034 = vadd.f32 %v372, %v1033
        %v1035 = vpop.f32.mrb[0].mxu0
        %1036 = vmatprep.mubr.bf16.mxu0 0
        %1037 = vmatmul.mubr.bf16.gmra.mrb[0].mxu0 %v884
        %v1038 = vpop.f32.mrb[0].mxu0
        %v1039 = vadd.f32 %v372, %v1038
        %v1040 = vpop.f32.mrb[0].mxu0
        %v1041 = vpop.f32.mrb[0].mxu0
        %v1042 = vadd.f32 %v372, %v1041
        %v1043 = vpop.f32.mrb[0].mxu0
        %1044 = vmatprep.mubr.bf16.mxu0 0
        %1045 = vmatmul.mubr.bf16.gmra.mrb[0].mxu0 %v887
        %v1046 = vpop.f32.mrb[0].mxu0
        %v1047 = vadd.f32 %v372, %v1046
        %v1048 = vpop.f32.mrb[0].mxu0
        %v1049 = vpop.f32.mrb[0].mxu0
        %v1050 = vadd.f32 %v372, %v1049
        %v1051 = vpop.f32.mrb[0].mxu0
        %1052 = vmatprep.mubr.bf16.mxu0 0
        %1053 = vmatmul.mubr.bf16.gmra.mrb[0].mxu0 %v890
        %v1054 = vpop.f32.mrb[0].mxu0
        %v1055 = vadd.f32 %v372, %v1054
        %v1056 = vpop.f32.mrb[0].mxu0
        %v1057 = vpop.f32.mrb[0].mxu0
        %v1058 = vadd.f32 %v372, %v1057
        %v1059 = vpop.f32.mrb[0].mxu0
        %1060 = vmatprep.mubr.bf16.mxu0 0
        %1061 = vmatmul.mubr.bf16.gmra.mrb[0].mxu0 %v893
        %v1062 = vpop.f32.mrb[0].mxu0
        %v1063 = vadd.f32 %v372, %v1062
        %v1064 = vpop.f32.mrb[0].mxu0
        %v1065 = vpop.f32.mrb[0].mxu0
        %v1066 = vadd.f32 %v372, %v1065
        %v1067 = vpop.f32.mrb[0].mxu0
        %1068 = vmatprep.mubr.bf16.mxu0 0
        %1069 = vmatmul.mubr.bf16.gmra.mrb[0].mxu0 %v896
        %v1070 = vpop.f32.mrb[0].mxu0
        %v1071 = vadd.f32 %v372, %v1070
        %v1072 = vpop.f32.mrb[0].mxu0
        %v1073 = vpop.f32.mrb[0].mxu0
        %v1074 = vadd.f32 %v372, %v1073
        %v1075 = vpop.f32.mrb[0].mxu0
        %1076 = vmatprep.mubr.bf16.mxu0 0
        %1077 = vmatmul.mubr.bf16.gmra.mrb[0].mxu0 %v899
        %v1078 = vpop.f32.mrb[0].mxu0
        %v1079 = vadd.f32 %v372, %v1078
        %v1080 = vpop.f32.mrb[0].mxu0
        %v1081 = vpop.f32.mrb[0].mxu0
        %v1082 = vadd.f32 %v372, %v1081
        %v1083 = vpop.f32.mrb[0].mxu0
        %1084 = vmatprep.mubr.bf16.mxu0 0
        %1085 = vmatmul.mubr.bf16.gmra.mrb[0].mxu0 %v902
        %v1086 = vpop.f32.mrb[0].mxu0
        %v1087 = vadd.f32 %v372, %v1086
        %v1088 = vpop.f32.mrb[0].mxu0
        %v1089 = vpop.f32.mrb[0].mxu0
        %v1090 = vadd.f32 %v372, %v1089
        %v1091 = vpop.f32.mrb[0].mxu0
        %1092 = vmatprep.mubr.bf16.mxu0 0
        %1093 = vmatmul.mubr.bf16.gmra.mrb[0].mxu0 %v905
        %v1094 = vpop.f32.mrb[0].mxu0
        %v1095 = vadd.f32 %v372, %v1094
        %v1096 = vpop.f32.mrb[0].mxu0
        %v1097 = vpop.f32.mrb[0].mxu0
        %v1098 = vadd.f32 %v372, %v1097
        %v1099 = vpop.f32.mrb[0].mxu0
        %1100 = vmatprep.mubr.bf16.mxu0 0
        %1101 = vmatmul.mubr.bf16.gmra.mrb[0].mxu0 %v908
        %v1102 = vpop.f32.mrb[0].mxu0
        %v1103 = vadd.f32 %v372, %v1102
        %v1104 = vpop.f32.mrb[0].mxu0
        %v1105 = vpop.f32.mrb[0].mxu0
        %v1106 = vadd.f32 %v372, %v1105
        %v1107 = vpop.f32.mrb[0].mxu0
        %1108 = vmatprep.mubr.bf16.mxu0 0
        %1109 = vmatmul.mubr.bf16.gmra.mrb[0].mxu0 %v911
        %v1110 = vpop.f32.mrb[0].mxu0
        %v1111 = vadd.f32 %v372, %v1110
        %v1112 = vpop.f32.mrb[0].mxu0
        %v1113 = vpop.f32.mrb[0].mxu0
        %v1114 = vadd.f32 %v372, %v1113
        %v1115 = vpop.f32.mrb[0].mxu0
        %1116 = vmatprep.mubr.bf16.mxu0 0
        %1117 = vmatmul.mubr.bf16.gmra.mrb[0].mxu0 %v914
        %v1118 = vpop.f32.mrb[0].mxu0
        %v1119 = vadd.f32 %v372, %v1118
        %v1120 = vpop.f32.mrb[0].mxu0
        %v1121 = vpop.f32.mrb[0].mxu0
        %v1122 = vadd.f32 %v372, %v1121
        %v1123 = vpop.f32.mrb[0].mxu0
        %1124 = vmatprep.mubr.bf16.mxu0 0
        %1125 = vmatmul.mubr.bf16.gmra.mrb[0].mxu0 %v917
        %v1126 = vpop.f32.mrb[0].mxu0
        %v1127 = vadd.f32 %v372, %v1126
        %v1128 = vpop.f32.mrb[0].mxu0
        %v1129 = vpop.f32.mrb[0].mxu0
        %v1130 = vadd.f32 %v372, %v1129
        %v1131 = vpop.f32.mrb[0].mxu0
        %1132 = vmatprep.mubr.bf16.mxu0 0
        %1133 = vmatmul.mubr.bf16.gmra.mrb[0].mxu0 %v920
        %v1134 = vpop.f32.mrb[0].mxu0
        %v1135 = vadd.f32 %v372, %v1134
        %v1136 = vpop.f32.mrb[0].mxu0
        %v1137 = vpop.f32.mrb[0].mxu0
        %v1138 = vadd.f32 %v372, %v1137
        %v1139 = vpop.f32.mrb[0].mxu0
        %1140 = vmatprep.mubr.bf16.mxu0 0
        %1141 = vmatmul.mubr.bf16.gmra.mrb[0].mxu0 %v923
        %v1142 = vpop.f32.mrb[0].mxu0
        %v1143 = vadd.f32 %v372, %v1142
        %v1144 = vpop.f32.mrb[0].mxu0
        %v1145 = vpop.f32.mrb[0].mxu0
        %v1146 = vadd.f32 %v372, %v1145
        %v1147 = vpop.f32.mrb[0].mxu0
        %1148 = vmatprep.mubr.bf16.mxu0 0
        %1149 = vmatmul.mubr.bf16.gmra.mrb[0].mxu0 %v926
        %v1150 = vpop.f32.mrb[0].mxu0
        %v1151 = vadd.f32 %v372, %v1150
        %v1152 = vpop.f32.mrb[0].mxu0
        %v1153 = vpop.f32.mrb[0].mxu0
        %v1154 = vadd.f32 %v372, %v1153
        %v1155 = vpop.f32.mrb[0].mxu0
        %1156 = vmatprep.mubr.bf16.mxu0 0
        %1157 = vmatmul.mubr.bf16.gmra.mrb[0].mxu0 %v929
        %v1158 = vpop.f32.mrb[0].mxu0
        %v1159 = vadd.f32 %v372, %v1158
        %v1160 = vpop.f32.mrb[0].mxu0
        %v1161 = vpop.f32.mrb[0].mxu0
        %v1162 = vadd.f32 %v372, %v1161
        %v1163 = vpop.f32.mrb[0].mxu0
        %1164 = vmatprep.mubr.bf16.mxu0 0
        %1165 = vmatmul.mubr.bf16.gmra.mrb[0].mxu0 %v932
        %v1166 = vpop.f32.mrb[0].mxu0
        %v1167 = vadd.f32 %v372, %v1166
        %v1168 = vpop.f32.mrb[0].mxu0
        %v1169 = vpop.f32.mrb[0].mxu0
        %v1170 = vadd.f32 %v372, %v1169
        %v1171 = vpop.f32.mrb[0].mxu0
        %1172 = vmatprep.mubr.bf16.mxu0 0
        %1173 = vmatmul.mubr.bf16.gmra.mrb[0].mxu0 %v935
        %v1174 = vpop.f32.mrb[0].mxu0
        %v1175 = vadd.f32 %v372, %v1174
        %v1176 = vpop.f32.mrb[0].mxu0
        %v1177 = vpop.f32.mrb[0].mxu0
        %v1178 = vadd.f32 %v372, %v1177
        %v1179 = vpop.f32.mrb[0].mxu0
        %1180 = vmatprep.mubr.bf16.mxu0 0
        %1181 = vmatmul.mubr.bf16.gmra.mrb[0].mxu0 %v938
        %v1182 = vpop.f32.mrb[0].mxu0
        %v1183 = vadd.f32 %v372, %v1182
        %v1184 = vpop.f32.mrb[0].mxu0
        %v1185 = vpop.f32.mrb[0].mxu0
        %v1186 = vadd.f32 %v372, %v1185
        %v1187 = vpop.f32.mrb[0].mxu0
        %1188 = vmatprep.mubr.bf16.mxu0 0
        %1189 = vmatmul.mubr.bf16.gmra.mrb[0].mxu0 %v941
        %v1190 = vpop.f32.mrb[0].mxu0
        %v1191 = vadd.f32 %v372, %v1190
        %v1192 = vpop.f32.mrb[0].mxu0
        %v1193 = vpop.f32.mrb[0].mxu0
        %v1194 = vadd.f32 %v372, %v1193
        %v1195 = vpop.f32.mrb[0].mxu0
        %1196 = vmatprep.mubr.bf16.mxu0 0
        %1197 = vmatmul.mubr.bf16.gmra.mrb[0].mxu0 %v944
        %v1198 = vpop.f32.mrb[0].mxu0
        %v1199 = vadd.f32 %v372, %v1198
        %v1200 = vpop.f32.mrb[0].mxu0
        %v1201 = vpop.f32.mrb[0].mxu0
        %v1202 = vadd.f32 %v372, %v1201
        %v1203 = vpop.f32.mrb[0].mxu0
        %1204 = vmatprep.mubr.bf16.mxu0 0
        %1205 = vmatmul.mubr.bf16.gmra.mrb[0].mxu0 %v947
        %v1206 = vpop.f32.mrb[0].mxu0
        %v1207 = vadd.f32 %v372, %v1206
        %v1208 = vpop.f32.mrb[0].mxu0
        %v1209 = vpop.f32.mrb[0].mxu0
        %v1210 = vadd.f32 %v372, %v1209
        %v1211 = vpop.f32.mrb[0].mxu0
        %1212 = vmatprep.mubr.bf16.mxu0 0
        %1213 = vmatmul.mubr.bf16.gmra.mrb[0].mxu0 %v950
        %v1214 = vpop.f32.mrb[0].mxu0
        %v1215 = vadd.f32 %v372, %v1214
        %v1216 = vpop.f32.mrb[0].mxu0
        %v1217 = vpop.f32.mrb[0].mxu0
        %v1218 = vadd.f32 %v372, %v1217
        %v1219 = vpop.f32.mrb[0].mxu0
        %1220 = vmatprep.mubr.bf16.mxu0 0
        %1221 = vmatmul.mubr.bf16.gmra.mrb[0].mxu0 %v953
        %v1222 = vpop.f32.mrb[0].mxu0
        %v1223 = vadd.f32 %v372, %v1222
        %v1224 = vpop.f32.mrb[0].mxu0
        %v1225 = vpop.f32.mrb[0].mxu0
        %v1226 = vadd.f32 %v372, %v1225
        %v1227 = vpop.f32.mrb[0].mxu0
        %1228 = vmatprep.mubr.bf16.mxu0 0
        %1229 = vmatmul.mubr.bf16.gmra.mrb[0].mxu0 %v956
        %v1230 = vpop.f32.mrb[0].mxu0
        %v1231 = vadd.f32 %v372, %v1230
        %v1232 = vpop.f32.mrb[0].mxu0
        %v1233 = vpop.f32.mrb[0].mxu0
        %v1234 = vadd.f32 %v372, %v1233
        %v1235 = vpop.f32.mrb[0].mxu0
        %1236 = vmatprep.mubr.bf16.mxu0 0
        %1237 = vmatmul.mubr.bf16.gmra.mrb[0].mxu0 %v959
        %v1238 = vpop.f32.mrb[0].mxu0
        %v1239 = vadd.f32 %v372, %v1238
        %v1240 = vpop.f32.mrb[0].mxu0
        %v1241 = vpop.f32.mrb[0].mxu0
        %v1242 = vadd.f32 %v372, %v1241
        %v1243 = vpop.f32.mrb[0].mxu0
        %1244 = vmatprep.mubr.bf16.mxu0 0
        %1245 = vmatmul.mubr.bf16.gmra.mrb[0].mxu0 %v962
        %v1246 = vpop.f32.mrb[0].mxu0
        %v1247 = vadd.f32 %v372, %v1246
        %v1248 = vpop.f32.mrb[0].mxu0
        %v1249 = vpop.f32.mrb[0].mxu0
        %v1250 = vadd.f32 %v372, %v1249
        %v1251 = vpop.f32.mrb[0].mxu0
        %1252 = vdwg.mxu0
        %1317 = vrot.lane.b32.xlu0 %v999, 64
        %v1318 = vpop.permute.xlu0 %1317
        %1319 = vrot.lane.b32.xlu0 %v1002, 64
        %v1320 = vpop.permute.xlu0 %1319
        %1321 = vrot.lane.b32.xlu0 %v1007, 64
        %v1322 = vpop.permute.xlu0 %1321
        %1323 = vrot.lane.b32.xlu0 %v1010, 64
        %v1324 = vpop.permute.xlu0 %1323
        %1325 = vrot.lane.b32.xlu0 %v1015, 64
        %v1326 = vpop.permute.xlu0 %1325
        %1327 = vrot.lane.b32.xlu0 %v1018, 64
        %v1328 = vpop.permute.xlu0 %1327
        %1329 = vrot.lane.b32.xlu0 %v1023, 64
        %v1330 = vpop.permute.xlu0 %1329
        %1331 = vrot.lane.b32.xlu0 %v1026, 64
        %v1332 = vpop.permute.xlu0 %1331
        %1333 = vrot.lane.b32.xlu0 %v1031, 64
        %v1334 = vpop.permute.xlu0 %1333
        %1335 = vrot.lane.b32.xlu0 %v1034, 64
        %v1336 = vpop.permute.xlu0 %1335
        %1337 = vrot.lane.b32.xlu0 %v1039, 64
        %v1338 = vpop.permute.xlu0 %1337
        %1339 = vrot.lane.b32.xlu0 %v1042, 64
        %v1340 = vpop.permute.xlu0 %1339
        %1341 = vrot.lane.b32.xlu0 %v1047, 64
        %v1342 = vpop.permute.xlu0 %1341
        %1343 = vrot.lane.b32.xlu0 %v1050, 64
        %v1344 = vpop.permute.xlu0 %1343
        %1345 = vrot.lane.b32.xlu0 %v1055, 64
        %v1346 = vpop.permute.xlu0 %1345
        %1347 = vrot.lane.b32.xlu0 %v1058, 64
        %v1348 = vpop.permute.xlu0 %1347
        %1349 = vrot.lane.b32.xlu0 %v1063, 64
        %v1350 = vpop.permute.xlu0 %1349
        %1351 = vrot.lane.b32.xlu0 %v1066, 64
        %v1352 = vpop.permute.xlu0 %1351
        %1353 = vrot.lane.b32.xlu0 %v1071, 64
        %v1354 = vpop.permute.xlu0 %1353
        %1355 = vrot.lane.b32.xlu0 %v1074, 64
        %v1356 = vpop.permute.xlu0 %1355
        %1357 = vrot.lane.b32.xlu0 %v1079, 64
        %v1358 = vpop.permute.xlu0 %1357
        %1359 = vrot.lane.b32.xlu0 %v1082, 64
        %v1360 = vpop.permute.xlu0 %1359
        %1361 = vrot.lane.b32.xlu0 %v1087, 64
        %v1362 = vpop.permute.xlu0 %1361
        %1363 = vrot.lane.b32.xlu0 %v1090, 64
        %v1364 = vpop.permute.xlu0 %1363
        %1365 = vrot.lane.b32.xlu0 %v1095, 64
        %v1366 = vpop.permute.xlu0 %1365
        %1367 = vrot.lane.b32.xlu0 %v1098, 64
        %v1368 = vpop.permute.xlu0 %1367
        %1369 = vrot.lane.b32.xlu0 %v1103, 64
        %v1370 = vpop.permute.xlu0 %1369
        %1371 = vrot.lane.b32.xlu0 %v1106, 64
        %v1372 = vpop.permute.xlu0 %1371
        %1373 = vrot.lane.b32.xlu0 %v1111, 64
        %v1374 = vpop.permute.xlu0 %1373
        %1375 = vrot.lane.b32.xlu0 %v1114, 64
        %v1376 = vpop.permute.xlu0 %1375
        %1377 = vrot.lane.b32.xlu0 %v1119, 64
        %v1378 = vpop.permute.xlu0 %1377
        %1379 = vrot.lane.b32.xlu0 %v1122, 64
        %v1380 = vpop.permute.xlu0 %1379
        %1381 = vrot.lane.b32.xlu0 %v1127, 64
        %v1382 = vpop.permute.xlu0 %1381
        %1383 = vrot.lane.b32.xlu0 %v1130, 64
        %v1384 = vpop.permute.xlu0 %1383
        %1385 = vrot.lane.b32.xlu0 %v1135, 64
        %v1386 = vpop.permute.xlu0 %1385
        %1387 = vrot.lane.b32.xlu0 %v1138, 64
        %v1388 = vpop.permute.xlu0 %1387
        %1389 = vrot.lane.b32.xlu0 %v1143, 64
        %v1390 = vpop.permute.xlu0 %1389
        %1391 = vrot.lane.b32.xlu0 %v1146, 64
        %v1392 = vpop.permute.xlu0 %1391
        %1393 = vrot.lane.b32.xlu0 %v1151, 64
        %v1394 = vpop.permute.xlu0 %1393
        %1395 = vrot.lane.b32.xlu0 %v1154, 64
        %v1396 = vpop.permute.xlu0 %1395
        %1397 = vrot.lane.b32.xlu0 %v1159, 64
        %v1398 = vpop.permute.xlu0 %1397
        %1399 = vrot.lane.b32.xlu0 %v1162, 64
        %v1400 = vpop.permute.xlu0 %1399
        %1401 = vrot.lane.b32.xlu0 %v1167, 64
        %v1402 = vpop.permute.xlu0 %1401
        %1403 = vrot.lane.b32.xlu0 %v1170, 64
        %v1404 = vpop.permute.xlu0 %1403
        %1405 = vrot.lane.b32.xlu0 %v1175, 64
        %v1406 = vpop.permute.xlu0 %1405
        %1407 = vrot.lane.b32.xlu0 %v1178, 64
        %v1408 = vpop.permute.xlu0 %1407
        %1409 = vrot.lane.b32.xlu0 %v1183, 64
        %v1410 = vpop.permute.xlu0 %1409
        %1411 = vrot.lane.b32.xlu0 %v1186, 64
        %v1412 = vpop.permute.xlu0 %1411
        %1413 = vrot.lane.b32.xlu0 %v1191, 64
        %v1414 = vpop.permute.xlu0 %1413
        %1415 = vrot.lane.b32.xlu0 %v1194, 64
        %v1416 = vpop.permute.xlu0 %1415
        %1417 = vrot.lane.b32.xlu0 %v1199, 64
        %v1418 = vpop.permute.xlu0 %1417
        %1419 = vrot.lane.b32.xlu0 %v1202, 64
        %v1420 = vpop.permute.xlu0 %1419
        %1421 = vrot.lane.b32.xlu0 %v1207, 64
        %v1422 = vpop.permute.xlu0 %1421
        %1423 = vrot.lane.b32.xlu0 %v1210, 64
        %v1424 = vpop.permute.xlu0 %1423
        %1425 = vrot.lane.b32.xlu0 %v1215, 64
        %v1426 = vpop.permute.xlu0 %1425
        %1427 = vrot.lane.b32.xlu0 %v1218, 64
        %v1428 = vpop.permute.xlu0 %1427
        %1429 = vrot.lane.b32.xlu0 %v1223, 64
        %v1430 = vpop.permute.xlu0 %1429
        %1431 = vrot.lane.b32.xlu0 %v1226, 64
        %v1432 = vpop.permute.xlu0 %1431
        %1433 = vrot.lane.b32.xlu0 %v1231, 64
        %v1434 = vpop.permute.xlu0 %1433
        %1435 = vrot.lane.b32.xlu0 %v1234, 64
        %v1436 = vpop.permute.xlu0 %1435
        %1437 = vrot.lane.b32.xlu0 %v1239, 64
        %v1438 = vpop.permute.xlu0 %1437
        %1439 = vrot.lane.b32.xlu0 %v1242, 64
        %v1440 = vpop.permute.xlu0 %1439
        %1441 = vrot.lane.b32.xlu0 %v1247, 64
        %v1442 = vpop.permute.xlu0 %1441
        %1443 = vrot.lane.b32.xlu0 %v1250, 64
        %v1444 = vpop.permute.xlu0 %1443
        %vm1509 = vcmask 523264
        %v1510 = vsel %vm1509, %v518, %v1318
        %v1511 = vsel %vm1509, %v521, %v1320
        %v1512 = vsel %vm1509, %v526, %v1322
        %v1513 = vsel %vm1509, %v529, %v1324
        %v1514 = vsel %vm1509, %v534, %v1326
        %v1515 = vsel %vm1509, %v537, %v1328
        %v1516 = vsel %vm1509, %v542, %v1330
        %v1517 = vsel %vm1509, %v545, %v1332
        %v1518 = vsel %vm1509, %v550, %v1334
        %v1519 = vsel %vm1509, %v553, %v1336
        %v1520 = vsel %vm1509, %v558, %v1338
        %v1521 = vsel %vm1509, %v561, %v1340
        %v1522 = vsel %vm1509, %v566, %v1342
        %v1523 = vsel %vm1509, %v569, %v1344
        %v1524 = vsel %vm1509, %v574, %v1346
        %v1525 = vsel %vm1509, %v577, %v1348
        %v1526 = vsel %vm1509, %v582, %v1350
        %v1527 = vsel %vm1509, %v585, %v1352
        %v1528 = vsel %vm1509, %v590, %v1354
        %v1529 = vsel %vm1509, %v593, %v1356
        %v1530 = vsel %vm1509, %v598, %v1358
        %v1531 = vsel %vm1509, %v601, %v1360
        %v1532 = vsel %vm1509, %v606, %v1362
        %v1533 = vsel %vm1509, %v609, %v1364
        %v1534 = vsel %vm1509, %v614, %v1366
        %v1535 = vsel %vm1509, %v617, %v1368
        %v1536 = vsel %vm1509, %v622, %v1370
        %v1537 = vsel %vm1509, %v625, %v1372
        %v1538 = vsel %vm1509, %v630, %v1374
        %v1539 = vsel %vm1509, %v633, %v1376
        %v1540 = vsel %vm1509, %v638, %v1378
        %v1541 = vsel %vm1509, %v641, %v1380
        %v1542 = vsel %vm1509, %v646, %v1382
        %v1543 = vsel %vm1509, %v649, %v1384
        %v1544 = vsel %vm1509, %v654, %v1386
        %v1545 = vsel %vm1509, %v657, %v1388
        %v1546 = vsel %vm1509, %v662, %v1390
        %v1547 = vsel %vm1509, %v665, %v1392
        %v1548 = vsel %vm1509, %v670, %v1394
        %v1549 = vsel %vm1509, %v673, %v1396
        %v1550 = vsel %vm1509, %v678, %v1398
        %v1551 = vsel %vm1509, %v681, %v1400
        %v1552 = vsel %vm1509, %v686, %v1402
        %v1553 = vsel %vm1509, %v689, %v1404
        %v1554 = vsel %vm1509, %v694, %v1406
        %v1555 = vsel %vm1509, %v697, %v1408
        %v1556 = vsel %vm1509, %v702, %v1410
        %v1557 = vsel %vm1509, %v705, %v1412
        %v1558 = vsel %vm1509, %v710, %v1414
        %v1559 = vsel %vm1509, %v713, %v1416
        %v1560 = vsel %vm1509, %v718, %v1418
        %v1561 = vsel %vm1509, %v721, %v1420
        %v1562 = vsel %vm1509, %v726, %v1422
        %v1563 = vsel %vm1509, %v729, %v1424
        %v1564 = vsel %vm1509, %v734, %v1426
        %v1565 = vsel %vm1509, %v737, %v1428
        %v1566 = vsel %vm1509, %v742, %v1430
        %v1567 = vsel %vm1509, %v745, %v1432
        %v1568 = vsel %vm1509, %v750, %v1434
        %v1569 = vsel %vm1509, %v753, %v1436
        %v1570 = vsel %vm1509, %v758, %v1438
        %v1571 = vsel %vm1509, %v761, %v1440
        %v1572 = vsel %vm1509, %v766, %v1442
        %v1573 = vsel %vm1509, %v769, %v1444
        %v1574 = vld [vmem:[%s253] sm:$0xff]
        %v1575 = vld [vmem:[%s253 + $0x8] sm:$0xff]
        %v1576 = vld [vmem:[%s253 + $0x10] sm:$0xff]
        %v1577 = vld [vmem:[%s253 + $0x18] sm:$0xff]
        %v1578 = vld [vmem:[%s253 + $0x20] sm:$0xff]
        %v1579 = vld [vmem:[%s253 + $0x28] sm:$0xff]
        %v1580 = vld [vmem:[%s253 + $0x30] sm:$0xff]
        %v1581 = vld [vmem:[%s253 + $0x38] sm:$0xff]
        %v1582 = vld [vmem:[%s253 + $0x40] sm:$0xff]
        %v1583 = vld [vmem:[%s253 + $0x48] sm:$0xff]
        %v1584 = vld [vmem:[%s253 + $0x50] sm:$0xff]
        %v1585 = vld [vmem:[%s253 + $0x58] sm:$0xff]
        %v1586 = vld [vmem:[%s253 + $0x60] sm:$0xff]
        %v1587 = vld [vmem:[%s253 + $0x68] sm:$0xff]
        %v1588 = vld [vmem:[%s253 + $0x70] sm:$0xff]
        %v1589 = vld [vmem:[%s253 + $0x78] sm:$0xff]
        %v1590 = vld [vmem:[%s253 + $0x80] sm:$0xff]
        %v1591 = vld [vmem:[%s253 + $0x88] sm:$0xff]
        %v1592 = vld [vmem:[%s253 + $0x90] sm:$0xff]
        %v1593 = vld [vmem:[%s253 + $0x98] sm:$0xff]
        %v1594 = vld [vmem:[%s253 + $0xa0] sm:$0xff]
        %v1595 = vld [vmem:[%s253 + $0xa8] sm:$0xff]
        %v1596 = vld [vmem:[%s253 + $0xb0] sm:$0xff]
        %v1597 = vld [vmem:[%s253 + $0xb8] sm:$0xff]
        %v1598 = vld [vmem:[%s253 + $0xc0] sm:$0xff]
        %v1599 = vld [vmem:[%s253 + $0xc8] sm:$0xff]
        %v1600 = vld [vmem:[%s253 + $0xd0] sm:$0xff]
        %v1601 = vld [vmem:[%s253 + $0xd8] sm:$0xff]
        %v1602 = vld [vmem:[%s253 + $0xe0] sm:$0xff]
        %v1603 = vld [vmem:[%s253 + $0xe8] sm:$0xff]
        %v1604 = vld [vmem:[%s253 + $0xf0] sm:$0xff]
        %v1605 = vld [vmem:[%s253 + $0xf8] sm:$0xff]
        %1638 = vrot.lane.b32.xlu0 %v1574, 64
        %v1639 = vpop.permute.xlu0 %1638
        %1640 = vrot.lane.b32.xlu0 %v1575, 64
        %v1641 = vpop.permute.xlu0 %1640
        %1642 = vrot.lane.b32.xlu0 %v1576, 64
        %v1643 = vpop.permute.xlu0 %1642
        %1644 = vrot.lane.b32.xlu0 %v1577, 64
        %v1645 = vpop.permute.xlu0 %1644
        %1646 = vrot.lane.b32.xlu0 %v1578, 64
        %v1647 = vpop.permute.xlu0 %1646
        %1648 = vrot.lane.b32.xlu0 %v1579, 64
        %v1649 = vpop.permute.xlu0 %1648
        %1650 = vrot.lane.b32.xlu0 %v1580, 64
        %v1651 = vpop.permute.xlu0 %1650
        %1652 = vrot.lane.b32.xlu0 %v1581, 64
        %v1653 = vpop.permute.xlu0 %1652
        %1654 = vrot.lane.b32.xlu0 %v1582, 64
        %v1655 = vpop.permute.xlu0 %1654
        %1656 = vrot.lane.b32.xlu0 %v1583, 64
        %v1657 = vpop.permute.xlu0 %1656
        %1658 = vrot.lane.b32.xlu0 %v1584, 64
        %v1659 = vpop.permute.xlu0 %1658
        %1660 = vrot.lane.b32.xlu0 %v1585, 64
        %v1661 = vpop.permute.xlu0 %1660
        %1662 = vrot.lane.b32.xlu0 %v1586, 64
        %v1663 = vpop.permute.xlu0 %1662
        %1664 = vrot.lane.b32.xlu0 %v1587, 64
        %v1665 = vpop.permute.xlu0 %1664
        %1666 = vrot.lane.b32.xlu0 %v1588, 64
        %v1667 = vpop.permute.xlu0 %1666
        %1668 = vrot.lane.b32.xlu0 %v1589, 64
        %v1669 = vpop.permute.xlu0 %1668
        %1670 = vrot.lane.b32.xlu0 %v1590, 64
        %v1671 = vpop.permute.xlu0 %1670
        %1672 = vrot.lane.b32.xlu0 %v1591, 64
        %v1673 = vpop.permute.xlu0 %1672
        %1674 = vrot.lane.b32.xlu0 %v1592, 64
        %v1675 = vpop.permute.xlu0 %1674
        %1676 = vrot.lane.b32.xlu0 %v1593, 64
        %v1677 = vpop.permute.xlu0 %1676
        %1678 = vrot.lane.b32.xlu0 %v1594, 64
        %v1679 = vpop.permute.xlu0 %1678
        %1680 = vrot.lane.b32.xlu0 %v1595, 64
        %v1681 = vpop.permute.xlu0 %1680
        %1682 = vrot.lane.b32.xlu0 %v1596, 64
        %v1683 = vpop.permute.xlu0 %1682
        %1684 = vrot.lane.b32.xlu0 %v1597, 64
        %v1685 = vpop.permute.xlu0 %1684
        %1686 = vrot.lane.b32.xlu0 %v1598, 64
        %v1687 = vpop.permute.xlu0 %1686
        %1688 = vrot.lane.b32.xlu0 %v1599, 64
        %v1689 = vpop.permute.xlu0 %1688
        %1690 = vrot.lane.b32.xlu0 %v1600, 64
        %v1691 = vpop.permute.xlu0 %1690
        %1692 = vrot.lane.b32.xlu0 %v1601, 64
        %v1693 = vpop.permute.xlu0 %1692
        %1694 = vrot.lane.b32.xlu0 %v1602, 64
        %v1695 = vpop.permute.xlu0 %1694
        %1696 = vrot.lane.b32.xlu0 %v1603, 64
        %v1697 = vpop.permute.xlu0 %1696
        %1698 = vrot.lane.b32.xlu0 %v1604, 64
        %v1699 = vpop.permute.xlu0 %1698
        %1700 = vrot.lane.b32.xlu0 %v1605, 64
        %v1701 = vpop.permute.xlu0 %1700
        %v1734 = vsel %vm1509, %v1574, %v1639
        %v1735 = vsel %vm1509, %v1575, %v1641
        %v1736 = vsel %vm1509, %v1576, %v1643
        %v1737 = vsel %vm1509, %v1577, %v1645
        %v1738 = vsel %vm1509, %v1578, %v1647
        %v1739 = vsel %vm1509, %v1579, %v1649
        %v1740 = vsel %vm1509, %v1580, %v1651
        %v1741 = vsel %vm1509, %v1581, %v1653
        %v1742 = vsel %vm1509, %v1582, %v1655
        %v1743 = vsel %vm1509, %v1583, %v1657
        %v1744 = vsel %vm1509, %v1584, %v1659
        %v1745 = vsel %vm1509, %v1585, %v1661
        %v1746 = vsel %vm1509, %v1586, %v1663
        %v1747 = vsel %vm1509, %v1587, %v1665
        %v1748 = vsel %vm1509, %v1588, %v1667
        %v1749 = vsel %vm1509, %v1589, %v1669
        %v1750 = vsel %vm1509, %v1590, %v1671
        %v1751 = vsel %vm1509, %v1591, %v1673
        %v1752 = vsel %vm1509, %v1592, %v1675
        %v1753 = vsel %vm1509, %v1593, %v1677
        %v1754 = vsel %vm1509, %v1594, %v1679
        %v1755 = vsel %vm1509, %v1595, %v1681
        %v1756 = vsel %vm1509, %v1596, %v1683
        %v1757 = vsel %vm1509, %v1597, %v1685
        %v1758 = vsel %vm1509, %v1598, %v1687
        %v1759 = vsel %vm1509, %v1599, %v1689
        %v1760 = vsel %vm1509, %v1600, %v1691
        %v1761 = vsel %vm1509, %v1601, %v1693
        %v1762 = vsel %vm1509, %v1602, %v1695
        %v1763 = vsel %vm1509, %v1603, %v1697
        %v1764 = vsel %vm1509, %v1604, %v1699
        %v1765 = vsel %vm1509, %v1605, %v1701
        %v1766 = vadd.f32 %v1734, %v1510
        %v1767 = vadd.f32 %v1735, %v1511
        %v1768 = vadd.f32 %v1734, %v1512
        %v1769 = vadd.f32 %v1735, %v1513
        %v1770 = vadd.f32 %v1736, %v1514
        %v1771 = vadd.f32 %v1737, %v1515
        %v1772 = vadd.f32 %v1736, %v1516
        %v1773 = vadd.f32 %v1737, %v1517
        %v1774 = vadd.f32 %v1738, %v1518
        %v1775 = vadd.f32 %v1739, %v1519
        %v1776 = vadd.f32 %v1738, %v1520
        %v1777 = vadd.f32 %v1739, %v1521
        %v1778 = vadd.f32 %v1740, %v1522
        %v1779 = vadd.f32 %v1741, %v1523
        %v1780 = vadd.f32 %v1740, %v1524
        %v1781 = vadd.f32 %v1741, %v1525
        %v1782 = vadd.f32 %v1742, %v1526
        %v1783 = vadd.f32 %v1743, %v1527
        %v1784 = vadd.f32 %v1742, %v1528
        %v1785 = vadd.f32 %v1743, %v1529
        %v1786 = vadd.f32 %v1744, %v1530
        %v1787 = vadd.f32 %v1745, %v1531
        %v1788 = vadd.f32 %v1744, %v1532
        %v1789 = vadd.f32 %v1745, %v1533
        %v1790 = vadd.f32 %v1746, %v1534
        %v1791 = vadd.f32 %v1747, %v1535
        %v1792 = vadd.f32 %v1746, %v1536
        %v1793 = vadd.f32 %v1747, %v1537
        %v1794 = vadd.f32 %v1748, %v1538
        %v1795 = vadd.f32 %v1749, %v1539
        %v1796 = vadd.f32 %v1748, %v1540
        %v1797 = vadd.f32 %v1749, %v1541
        %v1798 = vadd.f32 %v1750, %v1542
        %v1799 = vadd.f32 %v1751, %v1543
        %v1800 = vadd.f32 %v1750, %v1544
        %v1801 = vadd.f32 %v1751, %v1545
        %v1802 = vadd.f32 %v1752, %v1546
        %v1803 = vadd.f32 %v1753, %v1547
        %v1804 = vadd.f32 %v1752, %v1548
        %v1805 = vadd.f32 %v1753, %v1549
        %v1806 = vadd.f32 %v1754, %v1550
        %v1807 = vadd.f32 %v1755, %v1551
        %v1808 = vadd.f32 %v1754, %v1552
        %v1809 = vadd.f32 %v1755, %v1553
        %v1810 = vadd.f32 %v1756, %v1554
        %v1811 = vadd.f32 %v1757, %v1555
        %v1812 = vadd.f32 %v1756, %v1556
        %v1813 = vadd.f32 %v1757, %v1557
        %v1814 = vadd.f32 %v1758, %v1558
        %v1815 = vadd.f32 %v1759, %v1559
        %v1816 = vadd.f32 %v1758, %v1560
        %v1817 = vadd.f32 %v1759, %v1561
        %v1818 = vadd.f32 %v1760, %v1562
        %v1819 = vadd.f32 %v1761, %v1563
        %v1820 = vadd.f32 %v1760, %v1564
        %v1821 = vadd.f32 %v1761, %v1565
        %v1822 = vadd.f32 %v1762, %v1566
        %v1823 = vadd.f32 %v1763, %v1567
        %v1824 = vadd.f32 %v1762, %v1568
        %v1825 = vadd.f32 %v1763, %v1569
        %v1826 = vadd.f32 %v1764, %v1570
        %v1827 = vadd.f32 %v1765, %v1571
        %v1828 = vadd.f32 %v1764, %v1572
        %v1829 = vadd.f32 %v1765, %v1573
        %1830 = vst [vmem:[%s243] sm:$0xff] %v1766
        %1831 = vst [vmem:[%s243 + $0x8] sm:$0xff] %v1767
        %1832 = vst [vmem:[%s243 + $0x10] sm:$0xff] %v1768
        %1833 = vst [vmem:[%s243 + $0x18] sm:$0xff] %v1769
        %1834 = vst [vmem:[%s243 + $0x20] sm:$0xff] %v1770
        %1835 = vst [vmem:[%s243 + $0x28] sm:$0xff] %v1771
        %1836 = vst [vmem:[%s243 + $0x30] sm:$0xff] %v1772
        %1837 = vst [vmem:[%s243 + $0x38] sm:$0xff] %v1773
        %1838 = vst [vmem:[%s243 + $0x40] sm:$0xff] %v1774
        %1839 = vst [vmem:[%s243 + $0x48] sm:$0xff] %v1775
        %1840 = vst [vmem:[%s243 + $0x50] sm:$0xff] %v1776
        %1841 = vst [vmem:[%s243 + $0x58] sm:$0xff] %v1777
        %1842 = vst [vmem:[%s243 + $0x60] sm:$0xff] %v1778
        %1843 = vst [vmem:[%s243 + $0x68] sm:$0xff] %v1779
        %1844 = vst [vmem:[%s243 + $0x70] sm:$0xff] %v1780
        %1845 = vst [vmem:[%s243 + $0x78] sm:$0xff] %v1781
        %1846 = vst [vmem:[%s243 + $0x80] sm:$0xff] %v1782
        %1847 = vst [vmem:[%s243 + $0x88] sm:$0xff] %v1783
        %1848 = vst [vmem:[%s243 + $0x90] sm:$0xff] %v1784
        %1849 = vst [vmem:[%s243 + $0x98] sm:$0xff] %v1785
        %1850 = vst [vmem:[%s243 + $0xa0] sm:$0xff] %v1786
        %1851 = vst [vmem:[%s243 + $0xa8] sm:$0xff] %v1787
        %1852 = vst [vmem:[%s243 + $0xb0] sm:$0xff] %v1788
        %1853 = vst [vmem:[%s243 + $0xb8] sm:$0xff] %v1789
        %1854 = vst [vmem:[%s243 + $0xc0] sm:$0xff] %v1790
        %1855 = vst [vmem:[%s243 + $0xc8] sm:$0xff] %v1791
        %1856 = vst [vmem:[%s243 + $0xd0] sm:$0xff] %v1792
        %1857 = vst [vmem:[%s243 + $0xd8] sm:$0xff] %v1793
        %1858 = vst [vmem:[%s243 + $0xe0] sm:$0xff] %v1794
        %1859 = vst [vmem:[%s243 + $0xe8] sm:$0xff] %v1795
        %1860 = vst [vmem:[%s243 + $0xf0] sm:$0xff] %v1796
        %1861 = vst [vmem:[%s243 + $0xf8] sm:$0xff] %v1797
        %1862 = vst [vmem:[%s243 + $0x100] sm:$0xff] %v1798
        %1863 = vst [vmem:[%s243 + $0x108] sm:$0xff] %v1799
        %1864 = vst [vmem:[%s243 + $0x110] sm:$0xff] %v1800
        %1865 = vst [vmem:[%s243 + $0x118] sm:$0xff] %v1801
        %1866 = vst [vmem:[%s243 + $0x120] sm:$0xff] %v1802
        %1867 = vst [vmem:[%s243 + $0x128] sm:$0xff] %v1803
        %1868 = vst [vmem:[%s243 + $0x130] sm:$0xff] %v1804
        %1869 = vst [vmem:[%s243 + $0x138] sm:$0xff] %v1805
        %1870 = vst [vmem:[%s243 + $0x140] sm:$0xff] %v1806
        %1871 = vst [vmem:[%s243 + $0x148] sm:$0xff] %v1807
        %1872 = vst [vmem:[%s243 + $0x150] sm:$0xff] %v1808
        %1873 = vst [vmem:[%s243 + $0x158] sm:$0xff] %v1809
        %1874 = vst [vmem:[%s243 + $0x160] sm:$0xff] %v1810
        %1875 = vst [vmem:[%s243 + $0x168] sm:$0xff] %v1811
        %1876 = vst [vmem:[%s243 + $0x170] sm:$0xff] %v1812
        %1877 = vst [vmem:[%s243 + $0x178] sm:$0xff] %v1813
        %1878 = vst [vmem:[%s243 + $0x180] sm:$0xff] %v1814
        %1879 = vst [vmem:[%s243 + $0x188] sm:$0xff] %v1815
        %1880 = vst [vmem:[%s243 + $0x190] sm:$0xff] %v1816
        %1881 = vst [vmem:[%s243 + $0x198] sm:$0xff] %v1817
        %1882 = vst [vmem:[%s243 + $0x1a0] sm:$0xff] %v1818
        %1883 = vst [vmem:[%s243 + $0x1a8] sm:$0xff] %v1819
        %1884 = vst [vmem:[%s243 + $0x1b0] sm:$0xff] %v1820
        %1885 = vst [vmem:[%s243 + $0x1b8] sm:$0xff] %v1821
        %1886 = vst [vmem:[%s243 + $0x1c0] sm:$0xff] %v1822
        %1887 = vst [vmem:[%s243 + $0x1c8] sm:$0xff] %v1823
        %1888 = vst [vmem:[%s243 + $0x1d0] sm:$0xff] %v1824
        %1889 = vst [vmem:[%s243 + $0x1d8] sm:$0xff] %v1825
        %1890 = vst [vmem:[%s243 + $0x1e0] sm:$0xff] %v1826
        %1891 = vst [vmem:[%s243 + $0x1e8] sm:$0xff] %v1827
        %1892 = vst [vmem:[%s243 + $0x1f0] sm:$0xff] %v1828
        %1893 = vst [vmem:[%s243 + $0x1f8] sm:$0xff] %v1829
        %s1894 = sand.u32 %s138, 1
        %s1895 = scalar_lea.sflag [#allocation3], %s1894
        %s1896 = sand.u32 %s138, 1
        %s1897 = smul.addr %s1896, 512
        %s1898 = scalar_lea.vmem [#allocation2], %s1897
        // Predicated region
        $region37: #{tpu_custom_call.1} parent=35 // pred_check
          %p1899 = pneg %p148
        $region38: #{tpu_custom_call.1} parent=35 // pred_check_branch
          %1901 = sbr.rel (%p1899) target = $region40
        $region39: #{tpu_custom_call.1} parent=35 // pred_region
          %s1902 = smul.u32 64, %s23
          %s1904 = ssub.s32 8192, 8192
          %1905 = vsyncadd %s1895, %s1904
          %s1906 = smul.addr %s22, 64
          %s1907 = sadd.s32 %s1902, %s1906
          %s1908 = smul.addr %s1907, 128
          %s1909 = scalar_lea.hbm %s4, %s1908
          %s1910 = sshll.u32 %s1898, 4
          %s1911 = int_to_ptr.vmem [resolvable:$true] %s1910
          %1916 = dma.vmem_to_hbm [thread:$0]  %s1911, 8192, %s1909, %s1895, 128, 128, 8
        $region40: #{tpu_custom_call.1} parent=35 // pred_fallthru
          _
      $region36: #{tpu_custom_call.1} parent=5 // pred_fallthru
        _
      %p1917 = scmp.le.s32.totalorder 2, %s13
      // Predicated region
      $region41: #{tpu_custom_call.1} parent=5 // pred_check
        %p1918 = pneg %p1917
      $region42: #{tpu_custom_call.1} parent=5 // pred_check_branch
        %1920 = sbr.rel (%p1918) target = $region44
      $region43: #{tpu_custom_call.1} parent=5 // pred_region
        %s1921 = ssub.s32 %s13, 2
        // Predicated region
        $region45: #{tpu_custom_call.1} parent=43 // pred_check
          %p1922 = pneg %p154
        $region46: #{tpu_custom_call.1} parent=43 // pred_check_branch
          %1924 = sbr.rel (%p1922) target = $region48
        $region47: #{tpu_custom_call.1} parent=43 // pred_region
          %s1925 = sand.u32 %s139, 1
          %s1926 = scalar_lea.sflag [#allocation3], %s1925
          %s1927 = sand.u32 %s139, 1
          %s1928 = smul.addr %s1927, 512
          %s1929 = scalar_lea.vmem [#allocation2], %s1928
          %1930 = dma.done %s1926, 8192
        $region48: #{tpu_custom_call.1} parent=43 // pred_fallthru
          _
      $region44: #{tpu_custom_call.1} parent=5 // pred_fallthru
        _
    $region6: #{tpu_custom_call.1} parent=1 // loop_footer
      %s17 = sadd.s32 1, %s13
    $region7: #{tpu_custom_call.1} parent=1 // loop_footer_branch
      %12 = sbr.rel target = $region3
    $region8: #{tpu_custom_call.1} parent=1 // loop_exit
      _
    %1931 = vsyncpa [#allocation3], 1
    %s1932 = scalar_lea.sflag [#allocation3], 1
    %1933 = vsyncpa %s1932, 1

</llo_original>
